<compile_context>
chip_gen: v6e
topology: v6e:2x2x1
jax: 0.10.0
libtpu: 0.0.40
codegen_flags: <defaults>
</compile_context>

<pallas_src>
import math

import jax
import jax.numpy as jnp
from jax.experimental import pallas as pl
from jax.experimental.pallas import tpu as pltpu


# Set to jnp.bfloat16 to also halve the conv -> kernel HBM gates stream
# (perf-review item); kept f32 so the check against the reference stays tight.
_GATES_DTYPE = jnp.float32


def _round_up(x, m):
    return ((x + m - 1) // m) * m


def _choose_p_tile(p_pad, hid, T):
    """Largest 128-multiple tile dividing p_pad under a VMEM budget, >=2 blocks
    along P when possible (so both v7x TensorCores get work)."""
    # Rough f32 bytes live per lane: gates/f/b/ht/ah/out (~10*hid*T) + scores/e/attn (3*hid^2).
    per_pos = 4 * (10 * hid * T + 3 * hid * hid)
    budget = 24 * 1024 * 1024                       # headroom under every gen's scoped VMEM
    cap_mult = max(1, min(2048, budget // per_pos) // 128)
    m = p_pad // 128
    if m >= 2:
        cap_mult = min(cap_mult, m // 2)            # guarantee >= 2 P-blocks (v7x megacore)
    cap_mult = max(1, cap_mult)
    best = 1
    for d in range(1, cap_mult + 1):
        if m % d == 0:
            best = d
    return best * 128


# --------------------------------------------------------------------------
# Pallas kernel: fused BN-shift + gating + QRNN time recurrence + per-position
# channel self-attention.  Block layout: (channels, T, Pblk) with the flattened
# position axis P = N*H'*W' on the 128-lane axis; T=8 is one full f32 sublane tile.
# --------------------------------------------------------------------------
def _make_qaru_kernel(hid, T, reverse):
    inv_sqrt_c = 1.0 / math.sqrt(hid)

    def kernel(gamma_ref, shift_ref, gates_ref, o_ref):
        # BN scale is folded into the conv weights at init; only the shift remains.
        g = gates_ref[...].astype(jnp.float32) + shift_ref[...]          # (2*hid, T, P)
        f = jax.nn.sigmoid(g[hid:])                                      # (hid, T, P)
        b = (1.0 - f) * jnp.tanh(g[:hid])                                # (hid, T, P)
        # Only {f, b} stay live through the recurrence (review: cut live ranges).

        # Time recurrence (direction folded statically -- no jnp.flip HBM pass),
        # fused with rank-1 attention-score accumulation (no XLU cross-sublane
        # reductions, no a_ref scratch) and masked inserts into h_time (no
        # per-sublane masked stores to a scratch ref).
        P = b.shape[2]
        t_iota = jax.lax.broadcasted_iota(jnp.int32, (1, T, P), 1)
        ht = jnp.zeros_like(b)                                           # (hid, T, P)
        sc = None                                                        # (hid, hid, P)
        h = None
        for t in (range(T - 1, -1, -1) if reverse else range(T)):
            h = b[:, t, :] if h is None else f[:, t, :] * h + b[:, t, :]  # (hid, P)
            hcol = h[:, None, :]                                         # (hid, 1, P)
            ht = jnp.where(t_iota == t, hcol, ht)
            outer = hcol * h[None, :, :]                                 # (hid, hid, P)
            sc = outer if sc is None else sc + outer

        # Softmax over the FIRST channel index (torch dim=3).  Axis-0 reductions
        # run over the vreg-outer axis: pure VPU, no XLU.  Max subtraction kept
        # so padded lanes stay finite.
        a_max = sc[0]
        for i in range(1, hid):
            a_max = jnp.maximum(a_max, sc[i])                            # (hid, P)
        e = jnp.exp(sc - a_max[None, :, :])                              # (hid, hid, P)
        denom = e[0]
        for i in range(1, hid):
            denom = denom + e[i]                                         # (hid, P)
        # EUP approximate reciprocal; 1/sqrt(C) applied AFTER softmax (as in ref).
        inv = pl.reciprocal(denom, approx=True) * inv_sqrt_c
        attn = e * inv[None, :, :]                                       # (hid, hid, P)

        # ah[i, t, p] = sum_j attn[i, j, p] * ht[j, t, p]
        ah = attn[:, 0, :][:, None, :] * ht[0][None, :, :]
        for j in range(1, hid):
            ah = ah + attn[:, j, :][:, None, :] * ht[j][None, :, :]

        # Single full-width, unmasked, lane-dense store.
        o_ref[...] = gamma_ref[0] * ah + ht

    return kernel


def _qaru_fused(gates_ctp, shift, gamma, hid, reverse):
    """gates_ctp: (2*hid, T, P) with P = N*H'*W'.  Returns h-out (hid, T, P)."""
    C2, T, P = gates_ctp.shape
    p_pad = _round_up(P, 128)                       # pad only to 128, not to the tile
    p_tile = _choose_p_tile(p_pad, hid, T)
    gp = gates_ctp if p_pad == P else jnp.pad(gates_ctp, ((0, 0), (0, 0), (0, p_pad - P)))
    shift_b = jnp.broadcast_to(shift.reshape(C2, 1, 1), (C2, T, 1)).astype(jnp.float32)

    out = pl.pallas_call(
        _make_qaru_kernel(hid, T, reverse),
        out_shape=jax.ShapeDtypeStruct((hid, T, p_pad), jnp.float32),
        grid=(p_pad // p_tile,),
        in_specs=[
            pl.BlockSpec(memory_space=pltpu.MemorySpace.SMEM),           # gamma (1,)
            pl.BlockSpec((C2, T, 1), lambda i: (0, 0, 0)),               # BN shift
            pl.BlockSpec((C2, T, p_tile), lambda i: (0, 0, i)),          # gates
        ],
        out_specs=pl.BlockSpec((hid, T, p_tile), lambda i: (0, 0, i)),
        compiler_params=pltpu.CompilerParams(
            dimension_semantics=("parallel",),
            vmem_limit_bytes=48 * 1024 * 1024),
    )(gamma, shift_b, gp)
    return out if p_pad == P else out[:, :, :P]


# --------------------------------------------------------------------------
# QARU layer / QEncoder forward (Pallas path).
# Internal activation layout is TPU-native NDHWC for the conv; one explicit
# relayout feeds the lane-dense Pallas kernel.
# --------------------------------------------------------------------------
def qaru_forward(x_ndhwc, p, reverse):
    """One QARU layer.  x_ndhwc: (N, T, H, W, Cin) -> (hid, T', N, H', W')."""
    st, sh, sw = p["stride"]
    # 3x3x3 conv on the MXU: bf16 operands (single pass), f32 accumulation,
    # BN scale already folded into the DHWIO weights.
    gates = jax.lax.conv_general_dilated(
        x_ndhwc.astype(jnp.bfloat16), p["w_folded"],
        window_strides=(st, sh, sw),
        padding=((1, 1), (1, 1), (1, 1)),
        dimension_numbers=("NDHWC", "DHWIO", "NDHWC"),
        preferred_element_type=_GATES_DTYPE)
    N, To, Ho, Wo, C2 = gates.shape
    # ONE explicit relayout into the kernel's (C2, T, P) layout, P lane-dense.
    gates_ctp = jnp.transpose(gates, (4, 1, 0, 2, 3)).reshape(C2, To, N * Ho * Wo)
    out = _qaru_fused(gates_ctp, p["shift"], p["gamma"], p["hidden"], reverse)
    return out.reshape(p["hidden"], To, N, Ho, Wo)


def qencoder_forward(x, xs, params, reverse=False):
    """x: (N, C, T, H, W).  Appends NCDHW intermediates to xs; returns (y, reverse)."""
    xc = jnp.transpose(x, (0, 2, 3, 4, 1))                    # (N, T, H, W, C), once
    n = len(params)
    y_cthw = None
    for i, p in enumerate(params):
        y_cthw = qaru_forward(xc, p, reverse)                 # (hid, T, N, H, W)
        reverse = not reverse
        if i < n - 1:
            xc = jnp.transpose(y_cthw, (2, 1, 3, 4, 0))       # next conv input (NDHWC)
            # Module-facing NCDHW copy (kept f32 for exactness; could be bf16
            # if the downstream consumer allows -- perf review).
            xs.append(jnp.transpose(y_cthw, (2, 0, 1, 3, 4)))
    return jnp.transpose(y_cthw, (2, 0, 1, 3, 4)), reverse


# --------------------------------------------------------------------------
# Deterministic parameter init (synthetic; mirrors QEncoder.__init__ shapes)
# --------------------------------------------------------------------------
def init_qencoder_params(key, channels, num_half_layer, sample_idx):
    params = []
    ch = channels
    for i in range(num_half_layer):
        key, k1, k2, k3, k4, k5 = jax.random.split(key, 6)
        if i in sample_idx:
            hidden, stride = 2 * ch, (1, 2, 2)
        else:
            hidden, stride = ch, (1, 1, 1)
        cout = 2 * hidden
        w = 0.1 * jax.random.normal(k1, (cout, ch, 3, 3, 3), jnp.float32)   # OIDHW (torch)
        bn_w = 1.0 + 0.1 * jax.random.normal(k2, (cout,), jnp.float32)
        bn_b = 0.1 * jax.random.normal(k3, (cout,), jnp.float32)
        bn_m = 0.1 * jax.random.normal(k4, (cout,), jnp.float32)
        bn_v = 1.0 + 0.1 * jax.random.uniform(k5, (cout,), jnp.float32)
        scale = bn_w / jnp.sqrt(bn_v + 1e-5)
        shift = bn_b - bn_m * scale
        # Fold the BN scale into the conv weights (perf review) and store them
        # in TPU-native DHWIO layout as bf16 (single MXU pass, f32 accumulation).
        w_folded = jnp.transpose(w * scale[:, None, None, None, None],
                                 (2, 3, 4, 1, 0)).astype(jnp.bfloat16)
        params.append(dict(w=w, scale=scale, shift=shift, w_folded=w_folded,
                           gamma=jnp.ones((1,), jnp.float32),   # QARULayer.gamma = 1.0
                           hidden=hidden, stride=stride))
        ch = hidden
    return params


# --------------------------------------------------------------------------
# Plain-JAX reference (mirrors the PyTorch loop directly, incl. reverse).
# Independent im2col conv path (bf16 operands, f32 accumulation, same as the
# Pallas path) so it cross-checks the conv layout as well as the QARU logic.
# --------------------------------------------------------------------------
def _im2col_3d(x, stride, k=3, p=1):
    N, Cin, T, H, W = x.shape
    st, sh, sw = stride
    Tout = (T + 2 * p - k) // st + 1
    Hout = (H + 2 * p - k) // sh + 1
    Wout = (W + 2 * p - k) // sw + 1
    xp = jnp.pad(x, ((0, 0), (0, 0), (p, p), (p, p), (p, p)))
    cols = []
    for dt in range(k):
        for dh in range(k):
            for dw in range(k):
                cols.append(xp[:, :,
                               dt:dt + (Tout - 1) * st + 1:st,
                               dh:dh + (Hout - 1) * sh + 1:sh,
                               dw:dw + (Wout - 1) * sw + 1:sw])
    patches = jnp.stack(cols, axis=-1)               # (N, Cin, T', H', W', 27)
    patches = patches.transpose(0, 2, 3, 4, 1, 5)    # (N, T', H', W', Cin, 27)
    A = patches.reshape(N * Tout * Hout * Wout, Cin * k * k * k)
    return A, (Tout, Hout, Wout)


def _qaru_forward_ref(x, p, reverse):
    N = x.shape[0]
    cout = p["w"].shape[0]
    A, (To, Ho, Wo) = _im2col_3d(x, p["stride"])
    wf = (p["w"] * p["scale"][:, None, None, None, None]).reshape(cout, -1)
    g = jnp.matmul(A.astype(jnp.bfloat16), wf.astype(jnp.bfloat16).T,
                   preferred_element_type=jnp.float32) + p["shift"]
    gates = g.reshape(N, To, Ho, Wo, cout).transpose(0, 4, 1, 2, 3)
    hid = p["hidden"]
    Z = jnp.tanh(gates[:, :hid])
    F = jax.nn.sigmoid(gates[:, hid:])
    T = Z.shape[2]
    h, hts = None, [None] * T
    for t in (range(T - 1, -1, -1) if reverse else range(T)):
        z, f = Z[:, :, t], F[:, :, t]
        h = (1 - f) * z if h is None else f * h + (1 - f) * z
        hts[t] = h
    h_time = jnp.stack(hts, axis=2)                    # (N, C, T, H, W)
    q = h_time.transpose(0, 3, 4, 1, 2)                # (N, H, W, C, T)
    k = h_time.transpose(0, 3, 4, 2, 1)                # (N, H, W, T, C)
    scores = jnp.matmul(q, k, precision=jax.lax.Precision.HIGHEST)
    attn = jax.nn.softmax(scores, axis=3) / math.sqrt(k.shape[-1])
    ah = jnp.matmul(attn, q, precision=jax.lax.Precision.HIGHEST)
    ah = ah.transpose(0, 3, 4, 1, 2)
    return p["gamma"][0] * ah + h_time


def _qencoder_forward_ref(x, xs, params, reverse=False):
    n = len(params)
    for i in range(n - 1):
        x = _qaru_forward_ref(x, params[i], reverse)
        reverse = not reverse
        xs.append(x)
    x = _qaru_forward_ref(x, params[-1], reverse)
    reverse = not reverse
    return x, reverse


# --------------------------------------------------------------------------
if __name__ == "__main__":
    key = jax.random.PRNGKey(0)
    kx, kp = jax.random.split(key)

    # Small shapes consistent with the module: x is (N, C, T, H, W).
    N, C, T, H, W = 2, 4, 8, 8, 8
    x = jax.random.normal(kx, (N, C, T, H, W), jnp.float32)

    # QEncoder(channels=4, num_half_layer=3, sample_idx=[1])
    params = init_qencoder_params(kp, channels=C, num_half_layer=3, sample_idx=(1,))

    def run(inp):
        xs_ = []
        y_, _ = qencoder_forward(inp, xs_, params, reverse=False)
        return y_, tuple(xs_)

    y, xs = jax.jit(run)(x)
    y = jax.block_until_ready(y)
    rev = bool(len(params) % 2)   # `reverse` toggles once per layer from False

    # Sanity check against the plain-JAX reference.  Tolerance accounts for
    # bf16 MXU operands (both paths), conv accumulation-order differences and
    # the EUP approximate reciprocal in the kernel softmax; typical observed
    # error is well below 1e-3.
    xs_ref = []
    y_ref, rev_ref = _qencoder_forward_ref(x, xs_ref, params, reverse=False)
    assert rev == rev_ref
    err = float(jnp.max(jnp.abs(y - y_ref)))
    for a, b in zip(xs, xs_ref):
        err = max(err, float(jnp.max(jnp.abs(a - b))))
    if err > 1e-2:
        raise AssertionError(f"mismatch vs reference: max abs err {err}")

    print("KERNEL_OK")
</pallas_src>

<mosaic_0001>
module attributes {stable_mosaic.version = 11 : i64} {
  func.func @kernel(%arg0: i32, %arg1: memref<1xf32, #tpu.memory_space<smem>>, %arg2: memref<8x8x1xf32, #tpu.memory_space<vmem>>, %arg3: memref<8x8x128xf32, #tpu.memory_space<vmem>>, %arg4: memref<4x8x128xf32, #tpu.memory_space<vmem>>) attributes {dimension_semantics = [#tpu.dimension_semantics<parallel>], iteration_bounds = array<i64: 1>, scalar_prefetch = 0 : i64, scratch_operands = 0 : i64, tpu.core_type = #tpu.core_type<tc>, window_params = [{transform_indices = @transform_0, window_bounds = array<i64: 1>}, {pipeline_mode = #tpu.pipeline_mode<synchronous>, transform_indices = @transform_1, window_bounds = array<i64: 8, 8, 1>}, {transform_indices = @transform_2, window_bounds = array<i64: 8, 8, 128>}, {transform_indices = @transform_3, window_bounds = array<i64: 4, 8, 128>}]} {
    %c0 = arith.constant 0 : index
    %c0_0 = arith.constant 0 : index
    %c0_1 = arith.constant 0 : index
    %0 = vector.load %arg3[%c0, %c0_0, %c0_1] : memref<8x8x128xf32, #tpu.memory_space<vmem>>, vector<8x8x128xf32>
    %c0_2 = arith.constant 0 : index
    %c0_3 = arith.constant 0 : index
    %c0_4 = arith.constant 0 : index
    %1 = vector.load %arg2[%c0_2, %c0_3, %c0_4] : memref<8x8x1xf32, #tpu.memory_space<vmem>>, vector<8x8x1xf32>
    %2 = vector.broadcast %1 : vector<8x8x1xf32> to vector<8x8x128xf32>
    %3 = arith.addf %0, %2 : vector<8x8x128xf32>
    %4 = vector.extract_strided_slice %3 {offsets = [4, 0, 0], sizes = [4, 8, 128], strides = [1, 1, 1]} : vector<8x8x128xf32> to vector<4x8x128xf32>
    %5 = arith.negf %4 : vector<4x8x128xf32>
    %6 = math.exp %5 : vector<4x8x128xf32>
    %cst = arith.constant 1.000000e+00 : f32
    %7 = vector.broadcast %cst : f32 to vector<4x8x128xf32>
    %8 = arith.addf %7, %6 : vector<4x8x128xf32>
    %9 = arith.divf %7, %8 : vector<4x8x128xf32>
    %cst_5 = arith.constant 1.000000e+00 : f32
    %10 = vector.broadcast %cst_5 : f32 to vector<4x8x128xf32>
    %11 = arith.subf %10, %9 : vector<4x8x128xf32>
    %12 = vector.extract_strided_slice %3 {offsets = [0, 0, 0], sizes = [4, 8, 128], strides = [1, 1, 1]} : vector<8x8x128xf32> to vector<4x8x128xf32>
    %13 = math.tanh %12 : vector<4x8x128xf32>
    %14 = arith.mulf %11, %13 : vector<4x8x128xf32>
    %15 = tpu.iota {dimensions = array<i32: 1>} : vector<1x8x128xi32>
    %cst_6 = arith.constant 0.000000e+00 : f32
    %16 = vector.broadcast %cst_6 : f32 to vector<4x8x128xf32>
    %17 = vector.extract_strided_slice %14 {offsets = [0, 0, 0], sizes = [4, 1, 128], strides = [1, 1, 1]} : vector<4x8x128xf32> to vector<4x1x128xf32>
    %18 = vector.shape_cast %17 : vector<4x1x128xf32> to vector<4x128xf32>
    %19 = vector.shape_cast %18 : vector<4x128xf32> to vector<4x1x128xf32>
    %c0_i32 = arith.constant 0 : i32
    %20 = vector.broadcast %c0_i32 : i32 to vector<1x8x128xi32>
    %21 = arith.cmpi eq, %15, %20 : vector<1x8x128xi32>
    %22 = vector.shape_cast %21 : vector<1x8x128xi1> to vector<1x8x128xi1>
    %23 = vector.broadcast %22 : vector<1x8x128xi1> to vector<4x8x128xi1>
    %24 = vector.shape_cast %19 : vector<4x1x128xf32> to vector<4x1x128xf32>
    %25 = vector.broadcast %24 : vector<4x1x128xf32> to vector<4x8x128xf32>
    %26 = arith.select %23, %25, %16 : vector<4x8x128xi1>, vector<4x8x128xf32>
    %27 = vector.shape_cast %18 : vector<4x128xf32> to vector<1x4x128xf32>
    %28 = vector.broadcast %19 : vector<4x1x128xf32> to vector<4x4x128xf32>
    %29 = vector.broadcast %27 : vector<1x4x128xf32> to vector<4x4x128xf32>
    %30 = arith.mulf %28, %29 : vector<4x4x128xf32>
    %31 = vector.extract_strided_slice %9 {offsets = [0, 1, 0], sizes = [4, 1, 128], strides = [1, 1, 1]} : vector<4x8x128xf32> to vector<4x1x128xf32>
    %32 = vector.shape_cast %31 : vector<4x1x128xf32> to vector<4x128xf32>
    %33 = arith.mulf %32, %18 : vector<4x128xf32>
    %34 = vector.extract_strided_slice %14 {offsets = [0, 1, 0], sizes = [4, 1, 128], strides = [1, 1, 1]} : vector<4x8x128xf32> to vector<4x1x128xf32>
    %35 = vector.shape_cast %34 : vector<4x1x128xf32> to vector<4x128xf32>
    %36 = arith.addf %33, %35 : vector<4x128xf32>
    %37 = vector.shape_cast %36 : vector<4x128xf32> to vector<4x1x128xf32>
    %c1_i32 = arith.constant 1 : i32
    %38 = vector.broadcast %c1_i32 : i32 to vector<1x8x128xi32>
    %39 = arith.cmpi eq, %15, %38 : vector<1x8x128xi32>
    %40 = vector.shape_cast %39 : vector<1x8x128xi1> to vector<1x8x128xi1>
    %41 = vector.broadcast %40 : vector<1x8x128xi1> to vector<4x8x128xi1>
    %42 = vector.shape_cast %37 : vector<4x1x128xf32> to vector<4x1x128xf32>
    %43 = vector.broadcast %42 : vector<4x1x128xf32> to vector<4x8x128xf32>
    %44 = arith.select %41, %43, %26 : vector<4x8x128xi1>, vector<4x8x128xf32>
    %45 = vector.shape_cast %36 : vector<4x128xf32> to vector<1x4x128xf32>
    %46 = vector.broadcast %37 : vector<4x1x128xf32> to vector<4x4x128xf32>
    %47 = vector.broadcast %45 : vector<1x4x128xf32> to vector<4x4x128xf32>
    %48 = arith.mulf %46, %47 : vector<4x4x128xf32>
    %49 = arith.addf %30, %48 : vector<4x4x128xf32>
    %50 = vector.extract_strided_slice %9 {offsets = [0, 2, 0], sizes = [4, 1, 128], strides = [1, 1, 1]} : vector<4x8x128xf32> to vector<4x1x128xf32>
    %51 = vector.shape_cast %50 : vector<4x1x128xf32> to vector<4x128xf32>
    %52 = arith.mulf %51, %36 : vector<4x128xf32>
    %53 = vector.extract_strided_slice %14 {offsets = [0, 2, 0], sizes = [4, 1, 128], strides = [1, 1, 1]} : vector<4x8x128xf32> to vector<4x1x128xf32>
    %54 = vector.shape_cast %53 : vector<4x1x128xf32> to vector<4x128xf32>
    %55 = arith.addf %52, %54 : vector<4x128xf32>
    %56 = vector.shape_cast %55 : vector<4x128xf32> to vector<4x1x128xf32>
    %c2_i32 = arith.constant 2 : i32
    %57 = vector.broadcast %c2_i32 : i32 to vector<1x8x128xi32>
    %58 = arith.cmpi eq, %15, %57 : vector<1x8x128xi32>
    %59 = vector.shape_cast %58 : vector<1x8x128xi1> to vector<1x8x128xi1>
    %60 = vector.broadcast %59 : vector<1x8x128xi1> to vector<4x8x128xi1>
    %61 = vector.shape_cast %56 : vector<4x1x128xf32> to vector<4x1x128xf32>
    %62 = vector.broadcast %61 : vector<4x1x128xf32> to vector<4x8x128xf32>
    %63 = arith.select %60, %62, %44 : vector<4x8x128xi1>, vector<4x8x128xf32>
    %64 = vector.shape_cast %55 : vector<4x128xf32> to vector<1x4x128xf32>
    %65 = vector.broadcast %56 : vector<4x1x128xf32> to vector<4x4x128xf32>
    %66 = vector.broadcast %64 : vector<1x4x128xf32> to vector<4x4x128xf32>
    %67 = arith.mulf %65, %66 : vector<4x4x128xf32>
    %68 = arith.addf %49, %67 : vector<4x4x128xf32>
    %69 = vector.extract_strided_slice %9 {offsets = [0, 3, 0], sizes = [4, 1, 128], strides = [1, 1, 1]} : vector<4x8x128xf32> to vector<4x1x128xf32>
    %70 = vector.shape_cast %69 : vector<4x1x128xf32> to vector<4x128xf32>
    %71 = arith.mulf %70, %55 : vector<4x128xf32>
    %72 = vector.extract_strided_slice %14 {offsets = [0, 3, 0], sizes = [4, 1, 128], strides = [1, 1, 1]} : vector<4x8x128xf32> to vector<4x1x128xf32>
    %73 = vector.shape_cast %72 : vector<4x1x128xf32> to vector<4x128xf32>
    %74 = arith.addf %71, %73 : vector<4x128xf32>
    %75 = vector.shape_cast %74 : vector<4x128xf32> to vector<4x1x128xf32>
    %c3_i32 = arith.constant 3 : i32
    %76 = vector.broadcast %c3_i32 : i32 to vector<1x8x128xi32>
    %77 = arith.cmpi eq, %15, %76 : vector<1x8x128xi32>
    %78 = vector.shape_cast %77 : vector<1x8x128xi1> to vector<1x8x128xi1>
    %79 = vector.broadcast %78 : vector<1x8x128xi1> to vector<4x8x128xi1>
    %80 = vector.shape_cast %75 : vector<4x1x128xf32> to vector<4x1x128xf32>
    %81 = vector.broadcast %80 : vector<4x1x128xf32> to vector<4x8x128xf32>
    %82 = arith.select %79, %81, %63 : vector<4x8x128xi1>, vector<4x8x128xf32>
    %83 = vector.shape_cast %74 : vector<4x128xf32> to vector<1x4x128xf32>
    %84 = vector.broadcast %75 : vector<4x1x128xf32> to vector<4x4x128xf32>
    %85 = vector.broadcast %83 : vector<1x4x128xf32> to vector<4x4x128xf32>
    %86 = arith.mulf %84, %85 : vector<4x4x128xf32>
    %87 = arith.addf %68, %86 : vector<4x4x128xf32>
    %88 = vector.extract_strided_slice %9 {offsets = [0, 4, 0], sizes = [4, 1, 128], strides = [1, 1, 1]} : vector<4x8x128xf32> to vector<4x1x128xf32>
    %89 = vector.shape_cast %88 : vector<4x1x128xf32> to vector<4x128xf32>
    %90 = arith.mulf %89, %74 : vector<4x128xf32>
    %91 = vector.extract_strided_slice %14 {offsets = [0, 4, 0], sizes = [4, 1, 128], strides = [1, 1, 1]} : vector<4x8x128xf32> to vector<4x1x128xf32>
    %92 = vector.shape_cast %91 : vector<4x1x128xf32> to vector<4x128xf32>
    %93 = arith.addf %90, %92 : vector<4x128xf32>
    %94 = vector.shape_cast %93 : vector<4x128xf32> to vector<4x1x128xf32>
    %c4_i32 = arith.constant 4 : i32
    %95 = vector.broadcast %c4_i32 : i32 to vector<1x8x128xi32>
    %96 = arith.cmpi eq, %15, %95 : vector<1x8x128xi32>
    %97 = vector.shape_cast %96 : vector<1x8x128xi1> to vector<1x8x128xi1>
    %98 = vector.broadcast %97 : vector<1x8x128xi1> to vector<4x8x128xi1>
    %99 = vector.shape_cast %94 : vector<4x1x128xf32> to vector<4x1x128xf32>
    %100 = vector.broadcast %99 : vector<4x1x128xf32> to vector<4x8x128xf32>
    %101 = arith.select %98, %100, %82 : vector<4x8x128xi1>, vector<4x8x128xf32>
    %102 = vector.shape_cast %93 : vector<4x128xf32> to vector<1x4x128xf32>
    %103 = vector.broadcast %94 : vector<4x1x128xf32> to vector<4x4x128xf32>
    %104 = vector.broadcast %102 : vector<1x4x128xf32> to vector<4x4x128xf32>
    %105 = arith.mulf %103, %104 : vector<4x4x128xf32>
    %106 = arith.addf %87, %105 : vector<4x4x128xf32>
    %107 = vector.extract_strided_slice %9 {offsets = [0, 5, 0], sizes = [4, 1, 128], strides = [1, 1, 1]} : vector<4x8x128xf32> to vector<4x1x128xf32>
    %108 = vector.shape_cast %107 : vector<4x1x128xf32> to vector<4x128xf32>
    %109 = arith.mulf %108, %93 : vector<4x128xf32>
    %110 = vector.extract_strided_slice %14 {offsets = [0, 5, 0], sizes = [4, 1, 128], strides = [1, 1, 1]} : vector<4x8x128xf32> to vector<4x1x128xf32>
    %111 = vector.shape_cast %110 : vector<4x1x128xf32> to vector<4x128xf32>
    %112 = arith.addf %109, %111 : vector<4x128xf32>
    %113 = vector.shape_cast %112 : vector<4x128xf32> to vector<4x1x128xf32>
    %c5_i32 = arith.constant 5 : i32
    %114 = vector.broadcast %c5_i32 : i32 to vector<1x8x128xi32>
    %115 = arith.cmpi eq, %15, %114 : vector<1x8x128xi32>
    %116 = vector.shape_cast %115 : vector<1x8x128xi1> to vector<1x8x128xi1>
    %117 = vector.broadcast %116 : vector<1x8x128xi1> to vector<4x8x128xi1>
    %118 = vector.shape_cast %113 : vector<4x1x128xf32> to vector<4x1x128xf32>
    %119 = vector.broadcast %118 : vector<4x1x128xf32> to vector<4x8x128xf32>
    %120 = arith.select %117, %119, %101 : vector<4x8x128xi1>, vector<4x8x128xf32>
    %121 = vector.shape_cast %112 : vector<4x128xf32> to vector<1x4x128xf32>
    %122 = vector.broadcast %113 : vector<4x1x128xf32> to vector<4x4x128xf32>
    %123 = vector.broadcast %121 : vector<1x4x128xf32> to vector<4x4x128xf32>
    %124 = arith.mulf %122, %123 : vector<4x4x128xf32>
    %125 = arith.addf %106, %124 : vector<4x4x128xf32>
    %126 = vector.extract_strided_slice %9 {offsets = [0, 6, 0], sizes = [4, 1, 128], strides = [1, 1, 1]} : vector<4x8x128xf32> to vector<4x1x128xf32>
    %127 = vector.shape_cast %126 : vector<4x1x128xf32> to vector<4x128xf32>
    %128 = arith.mulf %127, %112 : vector<4x128xf32>
    %129 = vector.extract_strided_slice %14 {offsets = [0, 6, 0], sizes = [4, 1, 128], strides = [1, 1, 1]} : vector<4x8x128xf32> to vector<4x1x128xf32>
    %130 = vector.shape_cast %129 : vector<4x1x128xf32> to vector<4x128xf32>
    %131 = arith.addf %128, %130 : vector<4x128xf32>
    %132 = vector.shape_cast %131 : vector<4x128xf32> to vector<4x1x128xf32>
    %c6_i32 = arith.constant 6 : i32
    %133 = vector.broadcast %c6_i32 : i32 to vector<1x8x128xi32>
    %134 = arith.cmpi eq, %15, %133 : vector<1x8x128xi32>
    %135 = vector.shape_cast %134 : vector<1x8x128xi1> to vector<1x8x128xi1>
    %136 = vector.broadcast %135 : vector<1x8x128xi1> to vector<4x8x128xi1>
    %137 = vector.shape_cast %132 : vector<4x1x128xf32> to vector<4x1x128xf32>
    %138 = vector.broadcast %137 : vector<4x1x128xf32> to vector<4x8x128xf32>
    %139 = arith.select %136, %138, %120 : vector<4x8x128xi1>, vector<4x8x128xf32>
    %140 = vector.shape_cast %131 : vector<4x128xf32> to vector<1x4x128xf32>
    %141 = vector.broadcast %132 : vector<4x1x128xf32> to vector<4x4x128xf32>
    %142 = vector.broadcast %140 : vector<1x4x128xf32> to vector<4x4x128xf32>
    %143 = arith.mulf %141, %142 : vector<4x4x128xf32>
    %144 = arith.addf %125, %143 : vector<4x4x128xf32>
    %145 = vector.extract_strided_slice %9 {offsets = [0, 7, 0], sizes = [4, 1, 128], strides = [1, 1, 1]} : vector<4x8x128xf32> to vector<4x1x128xf32>
    %146 = vector.shape_cast %145 : vector<4x1x128xf32> to vector<4x128xf32>
    %147 = arith.mulf %146, %131 : vector<4x128xf32>
    %148 = vector.extract_strided_slice %14 {offsets = [0, 7, 0], sizes = [4, 1, 128], strides = [1, 1, 1]} : vector<4x8x128xf32> to vector<4x1x128xf32>
    %149 = vector.shape_cast %148 : vector<4x1x128xf32> to vector<4x128xf32>
    %150 = arith.addf %147, %149 : vector<4x128xf32>
    %151 = vector.shape_cast %150 : vector<4x128xf32> to vector<4x1x128xf32>
    %c7_i32 = arith.constant 7 : i32
    %152 = vector.broadcast %c7_i32 : i32 to vector<1x8x128xi32>
    %153 = arith.cmpi eq, %15, %152 : vector<1x8x128xi32>
    %154 = vector.shape_cast %153 : vector<1x8x128xi1> to vector<1x8x128xi1>
    %155 = vector.broadcast %154 : vector<1x8x128xi1> to vector<4x8x128xi1>
    %156 = vector.shape_cast %151 : vector<4x1x128xf32> to vector<4x1x128xf32>
    %157 = vector.broadcast %156 : vector<4x1x128xf32> to vector<4x8x128xf32>
    %158 = arith.select %155, %157, %139 : vector<4x8x128xi1>, vector<4x8x128xf32>
    %159 = vector.shape_cast %150 : vector<4x128xf32> to vector<1x4x128xf32>
    %160 = vector.broadcast %151 : vector<4x1x128xf32> to vector<4x4x128xf32>
    %161 = vector.broadcast %159 : vector<1x4x128xf32> to vector<4x4x128xf32>
    %162 = arith.mulf %160, %161 : vector<4x4x128xf32>
    %163 = arith.addf %144, %162 : vector<4x4x128xf32>
    %164 = vector.extract_strided_slice %163 {offsets = [0, 0, 0], sizes = [1, 4, 128], strides = [1, 1, 1]} : vector<4x4x128xf32> to vector<1x4x128xf32>
    %165 = vector.shape_cast %164 : vector<1x4x128xf32> to vector<4x128xf32>
    %166 = vector.extract_strided_slice %163 {offsets = [1, 0, 0], sizes = [1, 4, 128], strides = [1, 1, 1]} : vector<4x4x128xf32> to vector<1x4x128xf32>
    %167 = vector.shape_cast %166 : vector<1x4x128xf32> to vector<4x128xf32>
    %168 = arith.maximumf %165, %167 : vector<4x128xf32>
    %169 = vector.extract_strided_slice %163 {offsets = [2, 0, 0], sizes = [1, 4, 128], strides = [1, 1, 1]} : vector<4x4x128xf32> to vector<1x4x128xf32>
    %170 = vector.shape_cast %169 : vector<1x4x128xf32> to vector<4x128xf32>
    %171 = arith.maximumf %168, %170 : vector<4x128xf32>
    %172 = vector.extract_strided_slice %163 {offsets = [3, 0, 0], sizes = [1, 4, 128], strides = [1, 1, 1]} : vector<4x4x128xf32> to vector<1x4x128xf32>
    %173 = vector.shape_cast %172 : vector<1x4x128xf32> to vector<4x128xf32>
    %174 = arith.maximumf %171, %173 : vector<4x128xf32>
    %175 = vector.shape_cast %174 : vector<4x128xf32> to vector<1x4x128xf32>
    %176 = vector.broadcast %175 : vector<1x4x128xf32> to vector<4x4x128xf32>
    %177 = arith.subf %163, %176 : vector<4x4x128xf32>
    %178 = math.exp %177 : vector<4x4x128xf32>
    %179 = vector.extract_strided_slice %178 {offsets = [0, 0, 0], sizes = [1, 4, 128], strides = [1, 1, 1]} : vector<4x4x128xf32> to vector<1x4x128xf32>
    %180 = vector.shape_cast %179 : vector<1x4x128xf32> to vector<4x128xf32>
    %181 = vector.extract_strided_slice %178 {offsets = [1, 0, 0], sizes = [1, 4, 128], strides = [1, 1, 1]} : vector<4x4x128xf32> to vector<1x4x128xf32>
    %182 = vector.shape_cast %181 : vector<1x4x128xf32> to vector<4x128xf32>
    %183 = arith.addf %180, %182 : vector<4x128xf32>
    %184 = vector.extract_strided_slice %178 {offsets = [2, 0, 0], sizes = [1, 4, 128], strides = [1, 1, 1]} : vector<4x4x128xf32> to vector<1x4x128xf32>
    %185 = vector.shape_cast %184 : vector<1x4x128xf32> to vector<4x128xf32>
    %186 = arith.addf %183, %185 : vector<4x128xf32>
    %187 = vector.extract_strided_slice %178 {offsets = [3, 0, 0], sizes = [1, 4, 128], strides = [1, 1, 1]} : vector<4x4x128xf32> to vector<1x4x128xf32>
    %188 = vector.shape_cast %187 : vector<1x4x128xf32> to vector<4x128xf32>
    %189 = arith.addf %186, %188 : vector<4x128xf32>
    %190 = tpu.reciprocal %189 {approx = true} : vector<4x128xf32> -> vector<4x128xf32>
    %cst_7 = arith.constant 5.000000e-01 : f32
    %191 = vector.broadcast %cst_7 : f32 to vector<4x128xf32>
    %192 = arith.mulf %190, %191 : vector<4x128xf32>
    %193 = vector.shape_cast %192 : vector<4x128xf32> to vector<1x4x128xf32>
    %194 = vector.broadcast %193 : vector<1x4x128xf32> to vector<4x4x128xf32>
    %195 = arith.mulf %178, %194 : vector<4x4x128xf32>
    %196 = vector.extract_strided_slice %195 {offsets = [0, 0, 0], sizes = [4, 1, 128], strides = [1, 1, 1]} : vector<4x4x128xf32> to vector<4x1x128xf32>
    %197 = vector.shape_cast %196 : vector<4x1x128xf32> to vector<4x128xf32>
    %198 = vector.shape_cast %197 : vector<4x128xf32> to vector<4x1x128xf32>
    %199 = vector.extract_strided_slice %158 {offsets = [0, 0, 0], sizes = [1, 8, 128], strides = [1, 1, 1]} : vector<4x8x128xf32> to vector<1x8x128xf32>
    %200 = vector.shape_cast %199 : vector<1x8x128xf32> to vector<8x128xf32>
    %201 = vector.shape_cast %200 : vector<8x128xf32> to vector<1x8x128xf32>
    %202 = vector.broadcast %198 : vector<4x1x128xf32> to vector<4x8x128xf32>
    %203 = vector.broadcast %201 : vector<1x8x128xf32> to vector<4x8x128xf32>
    %204 = arith.mulf %202, %203 : vector<4x8x128xf32>
    %205 = vector.extract_strided_slice %195 {offsets = [0, 1, 0], sizes = [4, 1, 128], strides = [1, 1, 1]} : vector<4x4x128xf32> to vector<4x1x128xf32>
    %206 = vector.shape_cast %205 : vector<4x1x128xf32> to vector<4x128xf32>
    %207 = vector.shape_cast %206 : vector<4x128xf32> to vector<4x1x128xf32>
    %208 = vector.extract_strided_slice %158 {offsets = [1, 0, 0], sizes = [1, 8, 128], strides = [1, 1, 1]} : vector<4x8x128xf32> to vector<1x8x128xf32>
    %209 = vector.shape_cast %208 : vector<1x8x128xf32> to vector<8x128xf32>
    %210 = vector.shape_cast %209 : vector<8x128xf32> to vector<1x8x128xf32>
    %211 = vector.broadcast %207 : vector<4x1x128xf32> to vector<4x8x128xf32>
    %212 = vector.broadcast %210 : vector<1x8x128xf32> to vector<4x8x128xf32>
    %213 = arith.mulf %211, %212 : vector<4x8x128xf32>
    %214 = arith.addf %204, %213 : vector<4x8x128xf32>
    %215 = vector.extract_strided_slice %195 {offsets = [0, 2, 0], sizes = [4, 1, 128], strides = [1, 1, 1]} : vector<4x4x128xf32> to vector<4x1x128xf32>
    %216 = vector.shape_cast %215 : vector<4x1x128xf32> to vector<4x128xf32>
    %217 = vector.shape_cast %216 : vector<4x128xf32> to vector<4x1x128xf32>
    %218 = vector.extract_strided_slice %158 {offsets = [2, 0, 0], sizes = [1, 8, 128], strides = [1, 1, 1]} : vector<4x8x128xf32> to vector<1x8x128xf32>
    %219 = vector.shape_cast %218 : vector<1x8x128xf32> to vector<8x128xf32>
    %220 = vector.shape_cast %219 : vector<8x128xf32> to vector<1x8x128xf32>
    %221 = vector.broadcast %217 : vector<4x1x128xf32> to vector<4x8x128xf32>
    %222 = vector.broadcast %220 : vector<1x8x128xf32> to vector<4x8x128xf32>
    %223 = arith.mulf %221, %222 : vector<4x8x128xf32>
    %224 = arith.addf %214, %223 : vector<4x8x128xf32>
    %225 = vector.extract_strided_slice %195 {offsets = [0, 3, 0], sizes = [4, 1, 128], strides = [1, 1, 1]} : vector<4x4x128xf32> to vector<4x1x128xf32>
    %226 = vector.shape_cast %225 : vector<4x1x128xf32> to vector<4x128xf32>
    %227 = vector.shape_cast %226 : vector<4x128xf32> to vector<4x1x128xf32>
    %228 = vector.extract_strided_slice %158 {offsets = [3, 0, 0], sizes = [1, 8, 128], strides = [1, 1, 1]} : vector<4x8x128xf32> to vector<1x8x128xf32>
    %229 = vector.shape_cast %228 : vector<1x8x128xf32> to vector<8x128xf32>
    %230 = vector.shape_cast %229 : vector<8x128xf32> to vector<1x8x128xf32>
    %231 = vector.broadcast %227 : vector<4x1x128xf32> to vector<4x8x128xf32>
    %232 = vector.broadcast %230 : vector<1x8x128xf32> to vector<4x8x128xf32>
    %233 = arith.mulf %231, %232 : vector<4x8x128xf32>
    %234 = arith.addf %224, %233 : vector<4x8x128xf32>
    %c0_8 = arith.constant 0 : index
    %235 = memref.load %arg1[%c0_8] : memref<1xf32, #tpu.memory_space<smem>>
    %236 = vector.broadcast %235 : f32 to vector<4x8x128xf32>
    %237 = arith.mulf %236, %234 : vector<4x8x128xf32>
    %238 = arith.addf %237, %158 : vector<4x8x128xf32>
    %c0_9 = arith.constant 0 : index
    %c0_10 = arith.constant 0 : index
    %c0_11 = arith.constant 0 : index
    %239 = vector.load %arg4[%c0_9, %c0_10, %c0_11] : memref<4x8x128xf32, #tpu.memory_space<vmem>>, vector<4x8x128xf32>
    tpu.vector_store %arg4[%c0_9, %c0_10, %c0_11], %238 {strides = array<i32>} : memref<4x8x128xf32, #tpu.memory_space<vmem>>, vector<4x8x128xf32>,
    return
  }
  func.func @transform_0(%arg0: i32) -> i32 {
    %c0_i32 = arith.constant 0 : i32
    %c0_i32_0 = arith.constant 0 : i32
    return %c0_i32 : i32
  }
  func.func @transform_1(%arg0: i32) -> (i32, i32, i32) {
    %c0_i32 = arith.constant 0 : i32
    %c0_i32_0 = arith.constant 0 : i32
    %c0_i32_1 = arith.constant 0 : i32
    %c0_i32_2 = arith.constant 0 : i32
    return %c0_i32, %c0_i32_0, %c0_i32_1 : i32, i32, i32
  }
  func.func @transform_2(%arg0: i32) -> (i32, i32, i32) {
    %c0_i32 = arith.constant 0 : i32
    %c0_i32_0 = arith.constant 0 : i32
    %c0_i32_1 = arith.constant 0 : i32
    return %c0_i32, %c0_i32_0, %arg0 : i32, i32, i32
  }
  func.func @transform_3(%arg0: i32) -> (i32, i32, i32) {
    %c0_i32 = arith.constant 0 : i32
    %c0_i32_0 = arith.constant 0 : i32
    %c0_i32_1 = arith.constant 0 : i32
    return %c0_i32, %c0_i32_0, %arg0 : i32, i32, i32
  }
}

module attributes {stable_mosaic.version = 11 : i64} {
  func.func @kernel(%arg0: i32, %arg1: memref<1xf32, #tpu.memory_space<smem>>, %arg2: memref<16x8x1xf32, #tpu.memory_space<vmem>>, %arg3: memref<16x8x128xf32, #tpu.memory_space<vmem>>, %arg4: memref<8x8x128xf32, #tpu.memory_space<vmem>>) attributes {dimension_semantics = [#tpu.dimension_semantics<parallel>], iteration_bounds = array<i64: 1>, scalar_prefetch = 0 : i64, scratch_operands = 0 : i64, tpu.core_type = #tpu.core_type<tc>, window_params = [{transform_indices = @transform_0, window_bounds = array<i64: 1>}, {pipeline_mode = #tpu.pipeline_mode<synchronous>, transform_indices = @transform_1, window_bounds = array<i64: 16, 8, 1>}, {transform_indices = @transform_2, window_bounds = array<i64: 16, 8, 128>}, {transform_indices = @transform_3, window_bounds = array<i64: 8, 8, 128>}]} {
    %c0 = arith.constant 0 : index
    %c0_0 = arith.constant 0 : index
    %c0_1 = arith.constant 0 : index
    %0 = vector.load %arg3[%c0, %c0_0, %c0_1] : memref<16x8x128xf32, #tpu.memory_space<vmem>>, vector<16x8x128xf32>
    %c0_2 = arith.constant 0 : index
    %c0_3 = arith.constant 0 : index
    %c0_4 = arith.constant 0 : index
    %1 = vector.load %arg2[%c0_2, %c0_3, %c0_4] : memref<16x8x1xf32, #tpu.memory_space<vmem>>, vector<16x8x1xf32>
    %2 = vector.broadcast %1 : vector<16x8x1xf32> to vector<16x8x128xf32>
    %3 = arith.addf %0, %2 : vector<16x8x128xf32>
    %4 = vector.extract_strided_slice %3 {offsets = [8, 0, 0], sizes = [8, 8, 128], strides = [1, 1, 1]} : vector<16x8x128xf32> to vector<8x8x128xf32>
    %5 = arith.negf %4 : vector<8x8x128xf32>
    %6 = math.exp %5 : vector<8x8x128xf32>
    %cst = arith.constant 1.000000e+00 : f32
    %7 = vector.broadcast %cst : f32 to vector<8x8x128xf32>
    %8 = arith.addf %7, %6 : vector<8x8x128xf32>
    %9 = arith.divf %7, %8 : vector<8x8x128xf32>
    %cst_5 = arith.constant 1.000000e+00 : f32
    %10 = vector.broadcast %cst_5 : f32 to vector<8x8x128xf32>
    %11 = arith.subf %10, %9 : vector<8x8x128xf32>
    %12 = vector.extract_strided_slice %3 {offsets = [0, 0, 0], sizes = [8, 8, 128], strides = [1, 1, 1]} : vector<16x8x128xf32> to vector<8x8x128xf32>
    %13 = math.tanh %12 : vector<8x8x128xf32>
    %14 = arith.mulf %11, %13 : vector<8x8x128xf32>
    %15 = tpu.iota {dimensions = array<i32: 1>} : vector<1x8x128xi32>
    %cst_6 = arith.constant 0.000000e+00 : f32
    %16 = vector.broadcast %cst_6 : f32 to vector<8x8x128xf32>
    %17 = vector.extract_strided_slice %14 {offsets = [0, 7, 0], sizes = [8, 1, 128], strides = [1, 1, 1]} : vector<8x8x128xf32> to vector<8x1x128xf32>
    %18 = vector.shape_cast %17 : vector<8x1x128xf32> to vector<8x128xf32>
    %19 = vector.shape_cast %18 : vector<8x128xf32> to vector<8x1x128xf32>
    %c7_i32 = arith.constant 7 : i32
    %20 = vector.broadcast %c7_i32 : i32 to vector<1x8x128xi32>
    %21 = arith.cmpi eq, %15, %20 : vector<1x8x128xi32>
    %22 = vector.shape_cast %21 : vector<1x8x128xi1> to vector<1x8x128xi1>
    %23 = vector.broadcast %22 : vector<1x8x128xi1> to vector<8x8x128xi1>
    %24 = vector.shape_cast %19 : vector<8x1x128xf32> to vector<8x1x128xf32>
    %25 = vector.broadcast %24 : vector<8x1x128xf32> to vector<8x8x128xf32>
    %26 = arith.select %23, %25, %16 : vector<8x8x128xi1>, vector<8x8x128xf32>
    %27 = vector.shape_cast %18 : vector<8x128xf32> to vector<1x8x128xf32>
    %28 = vector.broadcast %19 : vector<8x1x128xf32> to vector<8x8x128xf32>
    %29 = vector.broadcast %27 : vector<1x8x128xf32> to vector<8x8x128xf32>
    %30 = arith.mulf %28, %29 : vector<8x8x128xf32>
    %31 = vector.extract_strided_slice %9 {offsets = [0, 6, 0], sizes = [8, 1, 128], strides = [1, 1, 1]} : vector<8x8x128xf32> to vector<8x1x128xf32>
    %32 = vector.shape_cast %31 : vector<8x1x128xf32> to vector<8x128xf32>
    %33 = arith.mulf %32, %18 : vector<8x128xf32>
    %34 = vector.extract_strided_slice %14 {offsets = [0, 6, 0], sizes = [8, 1, 128], strides = [1, 1, 1]} : vector<8x8x128xf32> to vector<8x1x128xf32>
    %35 = vector.shape_cast %34 : vector<8x1x128xf32> to vector<8x128xf32>
    %36 = arith.addf %33, %35 : vector<8x128xf32>
    %37 = vector.shape_cast %36 : vector<8x128xf32> to vector<8x1x128xf32>
    %c6_i32 = arith.constant 6 : i32
    %38 = vector.broadcast %c6_i32 : i32 to vector<1x8x128xi32>
    %39 = arith.cmpi eq, %15, %38 : vector<1x8x128xi32>
    %40 = vector.shape_cast %39 : vector<1x8x128xi1> to vector<1x8x128xi1>
    %41 = vector.broadcast %40 : vector<1x8x128xi1> to vector<8x8x128xi1>
    %42 = vector.shape_cast %37 : vector<8x1x128xf32> to vector<8x1x128xf32>
    %43 = vector.broadcast %42 : vector<8x1x128xf32> to vector<8x8x128xf32>
    %44 = arith.select %41, %43, %26 : vector<8x8x128xi1>, vector<8x8x128xf32>
    %45 = vector.shape_cast %36 : vector<8x128xf32> to vector<1x8x128xf32>
    %46 = vector.broadcast %37 : vector<8x1x128xf32> to vector<8x8x128xf32>
    %47 = vector.broadcast %45 : vector<1x8x128xf32> to vector<8x8x128xf32>
    %48 = arith.mulf %46, %47 : vector<8x8x128xf32>
    %49 = arith.addf %30, %48 : vector<8x8x128xf32>
    %50 = vector.extract_strided_slice %9 {offsets = [0, 5, 0], sizes = [8, 1, 128], strides = [1, 1, 1]} : vector<8x8x128xf32> to vector<8x1x128xf32>
    %51 = vector.shape_cast %50 : vector<8x1x128xf32> to vector<8x128xf32>
    %52 = arith.mulf %51, %36 : vector<8x128xf32>
    %53 = vector.extract_strided_slice %14 {offsets = [0, 5, 0], sizes = [8, 1, 128], strides = [1, 1, 1]} : vector<8x8x128xf32> to vector<8x1x128xf32>
    %54 = vector.shape_cast %53 : vector<8x1x128xf32> to vector<8x128xf32>
    %55 = arith.addf %52, %54 : vector<8x128xf32>
    %56 = vector.shape_cast %55 : vector<8x128xf32> to vector<8x1x128xf32>
    %c5_i32 = arith.constant 5 : i32
    %57 = vector.broadcast %c5_i32 : i32 to vector<1x8x128xi32>
    %58 = arith.cmpi eq, %15, %57 : vector<1x8x128xi32>
    %59 = vector.shape_cast %58 : vector<1x8x128xi1> to vector<1x8x128xi1>
    %60 = vector.broadcast %59 : vector<1x8x128xi1> to vector<8x8x128xi1>
    %61 = vector.shape_cast %56 : vector<8x1x128xf32> to vector<8x1x128xf32>
    %62 = vector.broadcast %61 : vector<8x1x128xf32> to vector<8x8x128xf32>
    %63 = arith.select %60, %62, %44 : vector<8x8x128xi1>, vector<8x8x128xf32>
    %64 = vector.shape_cast %55 : vector<8x128xf32> to vector<1x8x128xf32>
    %65 = vector.broadcast %56 : vector<8x1x128xf32> to vector<8x8x128xf32>
    %66 = vector.broadcast %64 : vector<1x8x128xf32> to vector<8x8x128xf32>
    %67 = arith.mulf %65, %66 : vector<8x8x128xf32>
    %68 = arith.addf %49, %67 : vector<8x8x128xf32>
    %69 = vector.extract_strided_slice %9 {offsets = [0, 4, 0], sizes = [8, 1, 128], strides = [1, 1, 1]} : vector<8x8x128xf32> to vector<8x1x128xf32>
    %70 = vector.shape_cast %69 : vector<8x1x128xf32> to vector<8x128xf32>
    %71 = arith.mulf %70, %55 : vector<8x128xf32>
    %72 = vector.extract_strided_slice %14 {offsets = [0, 4, 0], sizes = [8, 1, 128], strides = [1, 1, 1]} : vector<8x8x128xf32> to vector<8x1x128xf32>
    %73 = vector.shape_cast %72 : vector<8x1x128xf32> to vector<8x128xf32>
    %74 = arith.addf %71, %73 : vector<8x128xf32>
    %75 = vector.shape_cast %74 : vector<8x128xf32> to vector<8x1x128xf32>
    %c4_i32 = arith.constant 4 : i32
    %76 = vector.broadcast %c4_i32 : i32 to vector<1x8x128xi32>
    %77 = arith.cmpi eq, %15, %76 : vector<1x8x128xi32>
    %78 = vector.shape_cast %77 : vector<1x8x128xi1> to vector<1x8x128xi1>
    %79 = vector.broadcast %78 : vector<1x8x128xi1> to vector<8x8x128xi1>
    %80 = vector.shape_cast %75 : vector<8x1x128xf32> to vector<8x1x128xf32>
    %81 = vector.broadcast %80 : vector<8x1x128xf32> to vector<8x8x128xf32>
    %82 = arith.select %79, %81, %63 : vector<8x8x128xi1>, vector<8x8x128xf32>
    %83 = vector.shape_cast %74 : vector<8x128xf32> to vector<1x8x128xf32>
    %84 = vector.broadcast %75 : vector<8x1x128xf32> to vector<8x8x128xf32>
    %85 = vector.broadcast %83 : vector<1x8x128xf32> to vector<8x8x128xf32>
    %86 = arith.mulf %84, %85 : vector<8x8x128xf32>
    %87 = arith.addf %68, %86 : vector<8x8x128xf32>
    %88 = vector.extract_strided_slice %9 {offsets = [0, 3, 0], sizes = [8, 1, 128], strides = [1, 1, 1]} : vector<8x8x128xf32> to vector<8x1x128xf32>
    %89 = vector.shape_cast %88 : vector<8x1x128xf32> to vector<8x128xf32>
    %90 = arith.mulf %89, %74 : vector<8x128xf32>
    %91 = vector.extract_strided_slice %14 {offsets = [0, 3, 0], sizes = [8, 1, 128], strides = [1, 1, 1]} : vector<8x8x128xf32> to vector<8x1x128xf32>
    %92 = vector.shape_cast %91 : vector<8x1x128xf32> to vector<8x128xf32>
    %93 = arith.addf %90, %92 : vector<8x128xf32>
    %94 = vector.shape_cast %93 : vector<8x128xf32> to vector<8x1x128xf32>
    %c3_i32 = arith.constant 3 : i32
    %95 = vector.broadcast %c3_i32 : i32 to vector<1x8x128xi32>
    %96 = arith.cmpi eq, %15, %95 : vector<1x8x128xi32>
    %97 = vector.shape_cast %96 : vector<1x8x128xi1> to vector<1x8x128xi1>
    %98 = vector.broadcast %97 : vector<1x8x128xi1> to vector<8x8x128xi1>
    %99 = vector.shape_cast %94 : vector<8x1x128xf32> to vector<8x1x128xf32>
    %100 = vector.broadcast %99 : vector<8x1x128xf32> to vector<8x8x128xf32>
    %101 = arith.select %98, %100, %82 : vector<8x8x128xi1>, vector<8x8x128xf32>
    %102 = vector.shape_cast %93 : vector<8x128xf32> to vector<1x8x128xf32>
    %103 = vector.broadcast %94 : vector<8x1x128xf32> to vector<8x8x128xf32>
    %104 = vector.broadcast %102 : vector<1x8x128xf32> to vector<8x8x128xf32>
    %105 = arith.mulf %103, %104 : vector<8x8x128xf32>
    %106 = arith.addf %87, %105 : vector<8x8x128xf32>
    %107 = vector.extract_strided_slice %9 {offsets = [0, 2, 0], sizes = [8, 1, 128], strides = [1, 1, 1]} : vector<8x8x128xf32> to vector<8x1x128xf32>
    %108 = vector.shape_cast %107 : vector<8x1x128xf32> to vector<8x128xf32>
    %109 = arith.mulf %108, %93 : vector<8x128xf32>
    %110 = vector.extract_strided_slice %14 {offsets = [0, 2, 0], sizes = [8, 1, 128], strides = [1, 1, 1]} : vector<8x8x128xf32> to vector<8x1x128xf32>
    %111 = vector.shape_cast %110 : vector<8x1x128xf32> to vector<8x128xf32>
    %112 = arith.addf %109, %111 : vector<8x128xf32>
    %113 = vector.shape_cast %112 : vector<8x128xf32> to vector<8x1x128xf32>
    %c2_i32 = arith.constant 2 : i32
    %114 = vector.broadcast %c2_i32 : i32 to vector<1x8x128xi32>
    %115 = arith.cmpi eq, %15, %114 : vector<1x8x128xi32>
    %116 = vector.shape_cast %115 : vector<1x8x128xi1> to vector<1x8x128xi1>
    %117 = vector.broadcast %116 : vector<1x8x128xi1> to vector<8x8x128xi1>
    %118 = vector.shape_cast %113 : vector<8x1x128xf32> to vector<8x1x128xf32>
    %119 = vector.broadcast %118 : vector<8x1x128xf32> to vector<8x8x128xf32>
    %120 = arith.select %117, %119, %101 : vector<8x8x128xi1>, vector<8x8x128xf32>
    %121 = vector.shape_cast %112 : vector<8x128xf32> to vector<1x8x128xf32>
    %122 = vector.broadcast %113 : vector<8x1x128xf32> to vector<8x8x128xf32>
    %123 = vector.broadcast %121 : vector<1x8x128xf32> to vector<8x8x128xf32>
    %124 = arith.mulf %122, %123 : vector<8x8x128xf32>
    %125 = arith.addf %106, %124 : vector<8x8x128xf32>
    %126 = vector.extract_strided_slice %9 {offsets = [0, 1, 0], sizes = [8, 1, 128], strides = [1, 1, 1]} : vector<8x8x128xf32> to vector<8x1x128xf32>
    %127 = vector.shape_cast %126 : vector<8x1x128xf32> to vector<8x128xf32>
    %128 = arith.mulf %127, %112 : vector<8x128xf32>
    %129 = vector.extract_strided_slice %14 {offsets = [0, 1, 0], sizes = [8, 1, 128], strides = [1, 1, 1]} : vector<8x8x128xf32> to vector<8x1x128xf32>
    %130 = vector.shape_cast %129 : vector<8x1x128xf32> to vector<8x128xf32>
    %131 = arith.addf %128, %130 : vector<8x128xf32>
    %132 = vector.shape_cast %131 : vector<8x128xf32> to vector<8x1x128xf32>
    %c1_i32 = arith.constant 1 : i32
    %133 = vector.broadcast %c1_i32 : i32 to vector<1x8x128xi32>
    %134 = arith.cmpi eq, %15, %133 : vector<1x8x128xi32>
    %135 = vector.shape_cast %134 : vector<1x8x128xi1> to vector<1x8x128xi1>
    %136 = vector.broadcast %135 : vector<1x8x128xi1> to vector<8x8x128xi1>
    %137 = vector.shape_cast %132 : vector<8x1x128xf32> to vector<8x1x128xf32>
    %138 = vector.broadcast %137 : vector<8x1x128xf32> to vector<8x8x128xf32>
    %139 = arith.select %136, %138, %120 : vector<8x8x128xi1>, vector<8x8x128xf32>
    %140 = vector.shape_cast %131 : vector<8x128xf32> to vector<1x8x128xf32>
    %141 = vector.broadcast %132 : vector<8x1x128xf32> to vector<8x8x128xf32>
    %142 = vector.broadcast %140 : vector<1x8x128xf32> to vector<8x8x128xf32>
    %143 = arith.mulf %141, %142 : vector<8x8x128xf32>
    %144 = arith.addf %125, %143 : vector<8x8x128xf32>
    %145 = vector.extract_strided_slice %9 {offsets = [0, 0, 0], sizes = [8, 1, 128], strides = [1, 1, 1]} : vector<8x8x128xf32> to vector<8x1x128xf32>
    %146 = vector.shape_cast %145 : vector<8x1x128xf32> to vector<8x128xf32>
    %147 = arith.mulf %146, %131 : vector<8x128xf32>
    %148 = vector.extract_strided_slice %14 {offsets = [0, 0, 0], sizes = [8, 1, 128], strides = [1, 1, 1]} : vector<8x8x128xf32> to vector<8x1x128xf32>
    %149 = vector.shape_cast %148 : vector<8x1x128xf32> to vector<8x128xf32>
    %150 = arith.addf %147, %149 : vector<8x128xf32>
    %151 = vector.shape_cast %150 : vector<8x128xf32> to vector<8x1x128xf32>
    %c0_i32 = arith.constant 0 : i32
    %152 = vector.broadcast %c0_i32 : i32 to vector<1x8x128xi32>
    %153 = arith.cmpi eq, %15, %152 : vector<1x8x128xi32>
    %154 = vector.shape_cast %153 : vector<1x8x128xi1> to vector<1x8x128xi1>
    %155 = vector.broadcast %154 : vector<1x8x128xi1> to vector<8x8x128xi1>
    %156 = vector.shape_cast %151 : vector<8x1x128xf32> to vector<8x1x128xf32>
    %157 = vector.broadcast %156 : vector<8x1x128xf32> to vector<8x8x128xf32>
    %158 = arith.select %155, %157, %139 : vector<8x8x128xi1>, vector<8x8x128xf32>
    %159 = vector.shape_cast %150 : vector<8x128xf32> to vector<1x8x128xf32>
    %160 = vector.broadcast %151 : vector<8x1x128xf32> to vector<8x8x128xf32>
    %161 = vector.broadcast %159 : vector<1x8x128xf32> to vector<8x8x128xf32>
    %162 = arith.mulf %160, %161 : vector<8x8x128xf32>
    %163 = arith.addf %144, %162 : vector<8x8x128xf32>
    %164 = vector.extract_strided_slice %163 {offsets = [0, 0, 0], sizes = [1, 8, 128], strides = [1, 1, 1]} : vector<8x8x128xf32> to vector<1x8x128xf32>
    %165 = vector.shape_cast %164 : vector<1x8x128xf32> to vector<8x128xf32>
    %166 = vector.extract_strided_slice %163 {offsets = [1, 0, 0], sizes = [1, 8, 128], strides = [1, 1, 1]} : vector<8x8x128xf32> to vector<1x8x128xf32>
    %167 = vector.shape_cast %166 : vector<1x8x128xf32> to vector<8x128xf32>
    %168 = arith.maximumf %165, %167 : vector<8x128xf32>
    %169 = vector.extract_strided_slice %163 {offsets = [2, 0, 0], sizes = [1, 8, 128], strides = [1, 1, 1]} : vector<8x8x128xf32> to vector<1x8x128xf32>
    %170 = vector.shape_cast %169 : vector<1x8x128xf32> to vector<8x128xf32>
    %171 = arith.maximumf %168, %170 : vector<8x128xf32>
    %172 = vector.extract_strided_slice %163 {offsets = [3, 0, 0], sizes = [1, 8, 128], strides = [1, 1, 1]} : vector<8x8x128xf32> to vector<1x8x128xf32>
    %173 = vector.shape_cast %172 : vector<1x8x128xf32> to vector<8x128xf32>
    %174 = arith.maximumf %171, %173 : vector<8x128xf32>
    %175 = vector.extract_strided_slice %163 {offsets = [4, 0, 0], sizes = [1, 8, 128], strides = [1, 1, 1]} : vector<8x8x128xf32> to vector<1x8x128xf32>
    %176 = vector.shape_cast %175 : vector<1x8x128xf32> to vector<8x128xf32>
    %177 = arith.maximumf %174, %176 : vector<8x128xf32>
    %178 = vector.extract_strided_slice %163 {offsets = [5, 0, 0], sizes = [1, 8, 128], strides = [1, 1, 1]} : vector<8x8x128xf32> to vector<1x8x128xf32>
    %179 = vector.shape_cast %178 : vector<1x8x128xf32> to vector<8x128xf32>
    %180 = arith.maximumf %177, %179 : vector<8x128xf32>
    %181 = vector.extract_strided_slice %163 {offsets = [6, 0, 0], sizes = [1, 8, 128], strides = [1, 1, 1]} : vector<8x8x128xf32> to vector<1x8x128xf32>
    %182 = vector.shape_cast %181 : vector<1x8x128xf32> to vector<8x128xf32>
    %183 = arith.maximumf %180, %182 : vector<8x128xf32>
    %184 = vector.extract_strided_slice %163 {offsets = [7, 0, 0], sizes = [1, 8, 128], strides = [1, 1, 1]} : vector<8x8x128xf32> to vector<1x8x128xf32>
    %185 = vector.shape_cast %184 : vector<1x8x128xf32> to vector<8x128xf32>
    %186 = arith.maximumf %183, %185 : vector<8x128xf32>
    %187 = vector.shape_cast %186 : vector<8x128xf32> to vector<1x8x128xf32>
    %188 = vector.broadcast %187 : vector<1x8x128xf32> to vector<8x8x128xf32>
    %189 = arith.subf %163, %188 : vector<8x8x128xf32>
    %190 = math.exp %189 : vector<8x8x128xf32>
    %191 = vector.extract_strided_slice %190 {offsets = [0, 0, 0], sizes = [1, 8, 128], strides = [1, 1, 1]} : vector<8x8x128xf32> to vector<1x8x128xf32>
    %192 = vector.shape_cast %191 : vector<1x8x128xf32> to vector<8x128xf32>
    %193 = vector.extract_strided_slice %190 {offsets = [1, 0, 0], sizes = [1, 8, 128], strides = [1, 1, 1]} : vector<8x8x128xf32> to vector<1x8x128xf32>
    %194 = vector.shape_cast %193 : vector<1x8x128xf32> to vector<8x128xf32>
    %195 = arith.addf %192, %194 : vector<8x128xf32>
    %196 = vector.extract_strided_slice %190 {offsets = [2, 0, 0], sizes = [1, 8, 128], strides = [1, 1, 1]} : vector<8x8x128xf32> to vector<1x8x128xf32>
    %197 = vector.shape_cast %196 : vector<1x8x128xf32> to vector<8x128xf32>
    %198 = arith.addf %195, %197 : vector<8x128xf32>
    %199 = vector.extract_strided_slice %190 {offsets = [3, 0, 0], sizes = [1, 8, 128], strides = [1, 1, 1]} : vector<8x8x128xf32> to vector<1x8x128xf32>
    %200 = vector.shape_cast %199 : vector<1x8x128xf32> to vector<8x128xf32>
    %201 = arith.addf %198, %200 : vector<8x128xf32>
    %202 = vector.extract_strided_slice %190 {offsets = [4, 0, 0], sizes = [1, 8, 128], strides = [1, 1, 1]} : vector<8x8x128xf32> to vector<1x8x128xf32>
    %203 = vector.shape_cast %202 : vector<1x8x128xf32> to vector<8x128xf32>
    %204 = arith.addf %201, %203 : vector<8x128xf32>
    %205 = vector.extract_strided_slice %190 {offsets = [5, 0, 0], sizes = [1, 8, 128], strides = [1, 1, 1]} : vector<8x8x128xf32> to vector<1x8x128xf32>
    %206 = vector.shape_cast %205 : vector<1x8x128xf32> to vector<8x128xf32>
    %207 = arith.addf %204, %206 : vector<8x128xf32>
    %208 = vector.extract_strided_slice %190 {offsets = [6, 0, 0], sizes = [1, 8, 128], strides = [1, 1, 1]} : vector<8x8x128xf32> to vector<1x8x128xf32>
    %209 = vector.shape_cast %208 : vector<1x8x128xf32> to vector<8x128xf32>
    %210 = arith.addf %207, %209 : vector<8x128xf32>
    %211 = vector.extract_strided_slice %190 {offsets = [7, 0, 0], sizes = [1, 8, 128], strides = [1, 1, 1]} : vector<8x8x128xf32> to vector<1x8x128xf32>
    %212 = vector.shape_cast %211 : vector<1x8x128xf32> to vector<8x128xf32>
    %213 = arith.addf %210, %212 : vector<8x128xf32>
    %214 = tpu.reciprocal %213 {approx = true} : vector<8x128xf32> -> vector<8x128xf32>
    %cst_7 = arith.constant 0.353553385 : f32
    %215 = vector.broadcast %cst_7 : f32 to vector<8x128xf32>
    %216 = arith.mulf %214, %215 : vector<8x128xf32>
    %217 = vector.shape_cast %216 : vector<8x128xf32> to vector<1x8x128xf32>
    %218 = vector.broadcast %217 : vector<1x8x128xf32> to vector<8x8x128xf32>
    %219 = arith.mulf %190, %218 : vector<8x8x128xf32>
    %220 = vector.extract_strided_slice %219 {offsets = [0, 0, 0], sizes = [8, 1, 128], strides = [1, 1, 1]} : vector<8x8x128xf32> to vector<8x1x128xf32>
    %221 = vector.shape_cast %220 : vector<8x1x128xf32> to vector<8x128xf32>
    %222 = vector.shape_cast %221 : vector<8x128xf32> to vector<8x1x128xf32>
    %223 = vector.extract_strided_slice %158 {offsets = [0, 0, 0], sizes = [1, 8, 128], strides = [1, 1, 1]} : vector<8x8x128xf32> to vector<1x8x128xf32>
    %224 = vector.shape_cast %223 : vector<1x8x128xf32> to vector<8x128xf32>
    %225 = vector.shape_cast %224 : vector<8x128xf32> to vector<1x8x128xf32>
    %226 = vector.broadcast %222 : vector<8x1x128xf32> to vector<8x8x128xf32>
    %227 = vector.broadcast %225 : vector<1x8x128xf32> to vector<8x8x128xf32>
    %228 = arith.mulf %226, %227 : vector<8x8x128xf32>
    %229 = vector.extract_strided_slice %219 {offsets = [0, 1, 0], sizes = [8, 1, 128], strides = [1, 1, 1]} : vector<8x8x128xf32> to vector<8x1x128xf32>
    %230 = vector.shape_cast %229 : vector<8x1x128xf32> to vector<8x128xf32>
    %231 = vector.shape_cast %230 : vector<8x128xf32> to vector<8x1x128xf32>
    %232 = vector.extract_strided_slice %158 {offsets = [1, 0, 0], sizes = [1, 8, 128], strides = [1, 1, 1]} : vector<8x8x128xf32> to vector<1x8x128xf32>
    %233 = vector.shape_cast %232 : vector<1x8x128xf32> to vector<8x128xf32>
    %234 = vector.shape_cast %233 : vector<8x128xf32> to vector<1x8x128xf32>
    %235 = vector.broadcast %231 : vector<8x1x128xf32> to vector<8x8x128xf32>
    %236 = vector.broadcast %234 : vector<1x8x128xf32> to vector<8x8x128xf32>
    %237 = arith.mulf %235, %236 : vector<8x8x128xf32>
    %238 = arith.addf %228, %237 : vector<8x8x128xf32>
    %239 = vector.extract_strided_slice %219 {offsets = [0, 2, 0], sizes = [8, 1, 128], strides = [1, 1, 1]} : vector<8x8x128xf32> to vector<8x1x128xf32>
    %240 = vector.shape_cast %239 : vector<8x1x128xf32> to vector<8x128xf32>
    %241 = vector.shape_cast %240 : vector<8x128xf32> to vector<8x1x128xf32>
    %242 = vector.extract_strided_slice %158 {offsets = [2, 0, 0], sizes = [1, 8, 128], strides = [1, 1, 1]} : vector<8x8x128xf32> to vector<1x8x128xf32>
    %243 = vector.shape_cast %242 : vector<1x8x128xf32> to vector<8x128xf32>
    %244 = vector.shape_cast %243 : vector<8x128xf32> to vector<1x8x128xf32>
    %245 = vector.broadcast %241 : vector<8x1x128xf32> to vector<8x8x128xf32>
    %246 = vector.broadcast %244 : vector<1x8x128xf32> to vector<8x8x128xf32>
    %247 = arith.mulf %245, %246 : vector<8x8x128xf32>
    %248 = arith.addf %238, %247 : vector<8x8x128xf32>
    %249 = vector.extract_strided_slice %219 {offsets = [0, 3, 0], sizes = [8, 1, 128], strides = [1, 1, 1]} : vector<8x8x128xf32> to vector<8x1x128xf32>
    %250 = vector.shape_cast %249 : vector<8x1x128xf32> to vector<8x128xf32>
    %251 = vector.shape_cast %250 : vector<8x128xf32> to vector<8x1x128xf32>
    %252 = vector.extract_strided_slice %158 {offsets = [3, 0, 0], sizes = [1, 8, 128], strides = [1, 1, 1]} : vector<8x8x128xf32> to vector<1x8x128xf32>
    %253 = vector.shape_cast %252 : vector<1x8x128xf32> to vector<8x128xf32>
    %254 = vector.shape_cast %253 : vector<8x128xf32> to vector<1x8x128xf32>
    %255 = vector.broadcast %251 : vector<8x1x128xf32> to vector<8x8x128xf32>
    %256 = vector.broadcast %254 : vector<1x8x128xf32> to vector<8x8x128xf32>
    %257 = arith.mulf %255, %256 : vector<8x8x128xf32>
    %258 = arith.addf %248, %257 : vector<8x8x128xf32>
    %259 = vector.extract_strided_slice %219 {offsets = [0, 4, 0], sizes = [8, 1, 128], strides = [1, 1, 1]} : vector<8x8x128xf32> to vector<8x1x128xf32>
    %260 = vector.shape_cast %259 : vector<8x1x128xf32> to vector<8x128xf32>
    %261 = vector.shape_cast %260 : vector<8x128xf32> to vector<8x1x128xf32>
    %262 = vector.extract_strided_slice %158 {offsets = [4, 0, 0], sizes = [1, 8, 128], strides = [1, 1, 1]} : vector<8x8x128xf32> to vector<1x8x128xf32>
    %263 = vector.shape_cast %262 : vector<1x8x128xf32> to vector<8x128xf32>
    %264 = vector.shape_cast %263 : vector<8x128xf32> to vector<1x8x128xf32>
    %265 = vector.broadcast %261 : vector<8x1x128xf32> to vector<8x8x128xf32>
    %266 = vector.broadcast %264 : vector<1x8x128xf32> to vector<8x8x128xf32>
    %267 = arith.mulf %265, %266 : vector<8x8x128xf32>
    %268 = arith.addf %258, %267 : vector<8x8x128xf32>
    %269 = vector.extract_strided_slice %219 {offsets = [0, 5, 0], sizes = [8, 1, 128], strides = [1, 1, 1]} : vector<8x8x128xf32> to vector<8x1x128xf32>
    %270 = vector.shape_cast %269 : vector<8x1x128xf32> to vector<8x128xf32>
    %271 = vector.shape_cast %270 : vector<8x128xf32> to vector<8x1x128xf32>
    %272 = vector.extract_strided_slice %158 {offsets = [5, 0, 0], sizes = [1, 8, 128], strides = [1, 1, 1]} : vector<8x8x128xf32> to vector<1x8x128xf32>
    %273 = vector.shape_cast %272 : vector<1x8x128xf32> to vector<8x128xf32>
    %274 = vector.shape_cast %273 : vector<8x128xf32> to vector<1x8x128xf32>
    %275 = vector.broadcast %271 : vector<8x1x128xf32> to vector<8x8x128xf32>
    %276 = vector.broadcast %274 : vector<1x8x128xf32> to vector<8x8x128xf32>
    %277 = arith.mulf %275, %276 : vector<8x8x128xf32>
    %278 = arith.addf %268, %277 : vector<8x8x128xf32>
    %279 = vector.extract_strided_slice %219 {offsets = [0, 6, 0], sizes = [8, 1, 128], strides = [1, 1, 1]} : vector<8x8x128xf32> to vector<8x1x128xf32>
    %280 = vector.shape_cast %279 : vector<8x1x128xf32> to vector<8x128xf32>
    %281 = vector.shape_cast %280 : vector<8x128xf32> to vector<8x1x128xf32>
    %282 = vector.extract_strided_slice %158 {offsets = [6, 0, 0], sizes = [1, 8, 128], strides = [1, 1, 1]} : vector<8x8x128xf32> to vector<1x8x128xf32>
    %283 = vector.shape_cast %282 : vector<1x8x128xf32> to vector<8x128xf32>
    %284 = vector.shape_cast %283 : vector<8x128xf32> to vector<1x8x128xf32>
    %285 = vector.broadcast %281 : vector<8x1x128xf32> to vector<8x8x128xf32>
    %286 = vector.broadcast %284 : vector<1x8x128xf32> to vector<8x8x128xf32>
    %287 = arith.mulf %285, %286 : vector<8x8x128xf32>
    %288 = arith.addf %278, %287 : vector<8x8x128xf32>
    %289 = vector.extract_strided_slice %219 {offsets = [0, 7, 0], sizes = [8, 1, 128], strides = [1, 1, 1]} : vector<8x8x128xf32> to vector<8x1x128xf32>
    %290 = vector.shape_cast %289 : vector<8x1x128xf32> to vector<8x128xf32>
    %291 = vector.shape_cast %290 : vector<8x128xf32> to vector<8x1x128xf32>
    %292 = vector.extract_strided_slice %158 {offsets = [7, 0, 0], sizes = [1, 8, 128], strides = [1, 1, 1]} : vector<8x8x128xf32> to vector<1x8x128xf32>
    %293 = vector.shape_cast %292 : vector<1x8x128xf32> to vector<8x128xf32>
    %294 = vector.shape_cast %293 : vector<8x128xf32> to vector<1x8x128xf32>
    %295 = vector.broadcast %291 : vector<8x1x128xf32> to vector<8x8x128xf32>
    %296 = vector.broadcast %294 : vector<1x8x128xf32> to vector<8x8x128xf32>
    %297 = arith.mulf %295, %296 : vector<8x8x128xf32>
    %298 = arith.addf %288, %297 : vector<8x8x128xf32>
    %c0_8 = arith.constant 0 : index
    %299 = memref.load %arg1[%c0_8] : memref<1xf32, #tpu.memory_space<smem>>
    %300 = vector.broadcast %299 : f32 to vector<8x8x128xf32>
    %301 = arith.mulf %300, %298 : vector<8x8x128xf32>
    %302 = arith.addf %301, %158 : vector<8x8x128xf32>
    %c0_9 = arith.constant 0 : index
    %c0_10 = arith.constant 0 : index
    %c0_11 = arith.constant 0 : index
    %303 = vector.load %arg4[%c0_9, %c0_10, %c0_11] : memref<8x8x128xf32, #tpu.memory_space<vmem>>, vector<8x8x128xf32>
    tpu.vector_store %arg4[%c0_9, %c0_10, %c0_11], %302 {strides = array<i32>} : memref<8x8x128xf32, #tpu.memory_space<vmem>>, vector<8x8x128xf32>,
    return
  }
  func.func @transform_0(%arg0: i32) -> i32 {
    %c0_i32 = arith.constant 0 : i32
    %c0_i32_0 = arith.constant 0 : i32
    return %c0_i32 : i32
  }
  func.func @transform_1(%arg0: i32) -> (i32, i32, i32) {
    %c0_i32 = arith.constant 0 : i32
    %c0_i32_0 = arith.constant 0 : i32
    %c0_i32_1 = arith.constant 0 : i32
    %c0_i32_2 = arith.constant 0 : i32
    return %c0_i32, %c0_i32_0, %c0_i32_1 : i32, i32, i32
  }
  func.func @transform_2(%arg0: i32) -> (i32, i32, i32) {
    %c0_i32 = arith.constant 0 : i32
    %c0_i32_0 = arith.constant 0 : i32
    %c0_i32_1 = arith.constant 0 : i32
    return %c0_i32, %c0_i32_0, %arg0 : i32, i32, i32
  }
  func.func @transform_3(%arg0: i32) -> (i32, i32, i32) {
    %c0_i32 = arith.constant 0 : i32
    %c0_i32_0 = arith.constant 0 : i32
    %c0_i32_1 = arith.constant 0 : i32
    return %c0_i32, %c0_i32_0, %arg0 : i32, i32, i32
  }
}

module attributes {stable_mosaic.version = 11 : i64} {
  func.func @kernel(%arg0: i32, %arg1: memref<1xf32, #tpu.memory_space<smem>>, %arg2: memref<16x8x1xf32, #tpu.memory_space<vmem>>, %arg3: memref<16x8x128xf32, #tpu.memory_space<vmem>>, %arg4: memref<8x8x128xf32, #tpu.memory_space<vmem>>) attributes {dimension_semantics = [#tpu.dimension_semantics<parallel>], iteration_bounds = array<i64: 1>, scalar_prefetch = 0 : i64, scratch_operands = 0 : i64, tpu.core_type = #tpu.core_type<tc>, window_params = [{transform_indices = @transform_0, window_bounds = array<i64: 1>}, {pipeline_mode = #tpu.pipeline_mode<synchronous>, transform_indices = @transform_1, window_bounds = array<i64: 16, 8, 1>}, {transform_indices = @transform_2, window_bounds = array<i64: 16, 8, 128>}, {transform_indices = @transform_3, window_bounds = array<i64: 8, 8, 128>}]} {
    %c0 = arith.constant 0 : index
    %c0_0 = arith.constant 0 : index
    %c0_1 = arith.constant 0 : index
    %0 = vector.load %arg3[%c0, %c0_0, %c0_1] : memref<16x8x128xf32, #tpu.memory_space<vmem>>, vector<16x8x128xf32>
    %c0_2 = arith.constant 0 : index
    %c0_3 = arith.constant 0 : index
    %c0_4 = arith.constant 0 : index
    %1 = vector.load %arg2[%c0_2, %c0_3, %c0_4] : memref<16x8x1xf32, #tpu.memory_space<vmem>>, vector<16x8x1xf32>
    %2 = vector.broadcast %1 : vector<16x8x1xf32> to vector<16x8x128xf32>
    %3 = arith.addf %0, %2 : vector<16x8x128xf32>
    %4 = vector.extract_strided_slice %3 {offsets = [8, 0, 0], sizes = [8, 8, 128], strides = [1, 1, 1]} : vector<16x8x128xf32> to vector<8x8x128xf32>
    %5 = arith.negf %4 : vector<8x8x128xf32>
    %6 = math.exp %5 : vector<8x8x128xf32>
    %cst = arith.constant 1.000000e+00 : f32
    %7 = vector.broadcast %cst : f32 to vector<8x8x128xf32>
    %8 = arith.addf %7, %6 : vector<8x8x128xf32>
    %9 = arith.divf %7, %8 : vector<8x8x128xf32>
    %cst_5 = arith.constant 1.000000e+00 : f32
    %10 = vector.broadcast %cst_5 : f32 to vector<8x8x128xf32>
    %11 = arith.subf %10, %9 : vector<8x8x128xf32>
    %12 = vector.extract_strided_slice %3 {offsets = [0, 0, 0], sizes = [8, 8, 128], strides = [1, 1, 1]} : vector<16x8x128xf32> to vector<8x8x128xf32>
    %13 = math.tanh %12 : vector<8x8x128xf32>
    %14 = arith.mulf %11, %13 : vector<8x8x128xf32>
    %15 = tpu.iota {dimensions = array<i32: 1>} : vector<1x8x128xi32>
    %cst_6 = arith.constant 0.000000e+00 : f32
    %16 = vector.broadcast %cst_6 : f32 to vector<8x8x128xf32>
    %17 = vector.extract_strided_slice %14 {offsets = [0, 0, 0], sizes = [8, 1, 128], strides = [1, 1, 1]} : vector<8x8x128xf32> to vector<8x1x128xf32>
    %18 = vector.shape_cast %17 : vector<8x1x128xf32> to vector<8x128xf32>
    %19 = vector.shape_cast %18 : vector<8x128xf32> to vector<8x1x128xf32>
    %c0_i32 = arith.constant 0 : i32
    %20 = vector.broadcast %c0_i32 : i32 to vector<1x8x128xi32>
    %21 = arith.cmpi eq, %15, %20 : vector<1x8x128xi32>
    %22 = vector.shape_cast %21 : vector<1x8x128xi1> to vector<1x8x128xi1>
    %23 = vector.broadcast %22 : vector<1x8x128xi1> to vector<8x8x128xi1>
    %24 = vector.shape_cast %19 : vector<8x1x128xf32> to vector<8x1x128xf32>
    %25 = vector.broadcast %24 : vector<8x1x128xf32> to vector<8x8x128xf32>
    %26 = arith.select %23, %25, %16 : vector<8x8x128xi1>, vector<8x8x128xf32>
    %27 = vector.shape_cast %18 : vector<8x128xf32> to vector<1x8x128xf32>
    %28 = vector.broadcast %19 : vector<8x1x128xf32> to vector<8x8x128xf32>
    %29 = vector.broadcast %27 : vector<1x8x128xf32> to vector<8x8x128xf32>
    %30 = arith.mulf %28, %29 : vector<8x8x128xf32>
    %31 = vector.extract_strided_slice %9 {offsets = [0, 1, 0], sizes = [8, 1, 128], strides = [1, 1, 1]} : vector<8x8x128xf32> to vector<8x1x128xf32>
    %32 = vector.shape_cast %31 : vector<8x1x128xf32> to vector<8x128xf32>
    %33 = arith.mulf %32, %18 : vector<8x128xf32>
    %34 = vector.extract_strided_slice %14 {offsets = [0, 1, 0], sizes = [8, 1, 128], strides = [1, 1, 1]} : vector<8x8x128xf32> to vector<8x1x128xf32>
    %35 = vector.shape_cast %34 : vector<8x1x128xf32> to vector<8x128xf32>
    %36 = arith.addf %33, %35 : vector<8x128xf32>
    %37 = vector.shape_cast %36 : vector<8x128xf32> to vector<8x1x128xf32>
    %c1_i32 = arith.constant 1 : i32
    %38 = vector.broadcast %c1_i32 : i32 to vector<1x8x128xi32>
    %39 = arith.cmpi eq, %15, %38 : vector<1x8x128xi32>
    %40 = vector.shape_cast %39 : vector<1x8x128xi1> to vector<1x8x128xi1>
    %41 = vector.broadcast %40 : vector<1x8x128xi1> to vector<8x8x128xi1>
    %42 = vector.shape_cast %37 : vector<8x1x128xf32> to vector<8x1x128xf32>
    %43 = vector.broadcast %42 : vector<8x1x128xf32> to vector<8x8x128xf32>
    %44 = arith.select %41, %43, %26 : vector<8x8x128xi1>, vector<8x8x128xf32>
    %45 = vector.shape_cast %36 : vector<8x128xf32> to vector<1x8x128xf32>
    %46 = vector.broadcast %37 : vector<8x1x128xf32> to vector<8x8x128xf32>
    %47 = vector.broadcast %45 : vector<1x8x128xf32> to vector<8x8x128xf32>
    %48 = arith.mulf %46, %47 : vector<8x8x128xf32>
    %49 = arith.addf %30, %48 : vector<8x8x128xf32>
    %50 = vector.extract_strided_slice %9 {offsets = [0, 2, 0], sizes = [8, 1, 128], strides = [1, 1, 1]} : vector<8x8x128xf32> to vector<8x1x128xf32>
    %51 = vector.shape_cast %50 : vector<8x1x128xf32> to vector<8x128xf32>
    %52 = arith.mulf %51, %36 : vector<8x128xf32>
    %53 = vector.extract_strided_slice %14 {offsets = [0, 2, 0], sizes = [8, 1, 128], strides = [1, 1, 1]} : vector<8x8x128xf32> to vector<8x1x128xf32>
    %54 = vector.shape_cast %53 : vector<8x1x128xf32> to vector<8x128xf32>
    %55 = arith.addf %52, %54 : vector<8x128xf32>
    %56 = vector.shape_cast %55 : vector<8x128xf32> to vector<8x1x128xf32>
    %c2_i32 = arith.constant 2 : i32
    %57 = vector.broadcast %c2_i32 : i32 to vector<1x8x128xi32>
    %58 = arith.cmpi eq, %15, %57 : vector<1x8x128xi32>
    %59 = vector.shape_cast %58 : vector<1x8x128xi1> to vector<1x8x128xi1>
    %60 = vector.broadcast %59 : vector<1x8x128xi1> to vector<8x8x128xi1>
    %61 = vector.shape_cast %56 : vector<8x1x128xf32> to vector<8x1x128xf32>
    %62 = vector.broadcast %61 : vector<8x1x128xf32> to vector<8x8x128xf32>
    %63 = arith.select %60, %62, %44 : vector<8x8x128xi1>, vector<8x8x128xf32>
    %64 = vector.shape_cast %55 : vector<8x128xf32> to vector<1x8x128xf32>
    %65 = vector.broadcast %56 : vector<8x1x128xf32> to vector<8x8x128xf32>
    %66 = vector.broadcast %64 : vector<1x8x128xf32> to vector<8x8x128xf32>
    %67 = arith.mulf %65, %66 : vector<8x8x128xf32>
    %68 = arith.addf %49, %67 : vector<8x8x128xf32>
    %69 = vector.extract_strided_slice %9 {offsets = [0, 3, 0], sizes = [8, 1, 128], strides = [1, 1, 1]} : vector<8x8x128xf32> to vector<8x1x128xf32>
    %70 = vector.shape_cast %69 : vector<8x1x128xf32> to vector<8x128xf32>
    %71 = arith.mulf %70, %55 : vector<8x128xf32>
    %72 = vector.extract_strided_slice %14 {offsets = [0, 3, 0], sizes = [8, 1, 128], strides = [1, 1, 1]} : vector<8x8x128xf32> to vector<8x1x128xf32>
    %73 = vector.shape_cast %72 : vector<8x1x128xf32> to vector<8x128xf32>
    %74 = arith.addf %71, %73 : vector<8x128xf32>
    %75 = vector.shape_cast %74 : vector<8x128xf32> to vector<8x1x128xf32>
    %c3_i32 = arith.constant 3 : i32
    %76 = vector.broadcast %c3_i32 : i32 to vector<1x8x128xi32>
    %77 = arith.cmpi eq, %15, %76 : vector<1x8x128xi32>
    %78 = vector.shape_cast %77 : vector<1x8x128xi1> to vector<1x8x128xi1>
    %79 = vector.broadcast %78 : vector<1x8x128xi1> to vector<8x8x128xi1>
    %80 = vector.shape_cast %75 : vector<8x1x128xf32> to vector<8x1x128xf32>
    %81 = vector.broadcast %80 : vector<8x1x128xf32> to vector<8x8x128xf32>
    %82 = arith.select %79, %81, %63 : vector<8x8x128xi1>, vector<8x8x128xf32>
    %83 = vector.shape_cast %74 : vector<8x128xf32> to vector<1x8x128xf32>
    %84 = vector.broadcast %75 : vector<8x1x128xf32> to vector<8x8x128xf32>
    %85 = vector.broadcast %83 : vector<1x8x128xf32> to vector<8x8x128xf32>
    %86 = arith.mulf %84, %85 : vector<8x8x128xf32>
    %87 = arith.addf %68, %86 : vector<8x8x128xf32>
    %88 = vector.extract_strided_slice %9 {offsets = [0, 4, 0], sizes = [8, 1, 128], strides = [1, 1, 1]} : vector<8x8x128xf32> to vector<8x1x128xf32>
    %89 = vector.shape_cast %88 : vector<8x1x128xf32> to vector<8x128xf32>
    %90 = arith.mulf %89, %74 : vector<8x128xf32>
    %91 = vector.extract_strided_slice %14 {offsets = [0, 4, 0], sizes = [8, 1, 128], strides = [1, 1, 1]} : vector<8x8x128xf32> to vector<8x1x128xf32>
    %92 = vector.shape_cast %91 : vector<8x1x128xf32> to vector<8x128xf32>
    %93 = arith.addf %90, %92 : vector<8x128xf32>
    %94 = vector.shape_cast %93 : vector<8x128xf32> to vector<8x1x128xf32>
    %c4_i32 = arith.constant 4 : i32
    %95 = vector.broadcast %c4_i32 : i32 to vector<1x8x128xi32>
    %96 = arith.cmpi eq, %15, %95 : vector<1x8x128xi32>
    %97 = vector.shape_cast %96 : vector<1x8x128xi1> to vector<1x8x128xi1>
    %98 = vector.broadcast %97 : vector<1x8x128xi1> to vector<8x8x128xi1>
    %99 = vector.shape_cast %94 : vector<8x1x128xf32> to vector<8x1x128xf32>
    %100 = vector.broadcast %99 : vector<8x1x128xf32> to vector<8x8x128xf32>
    %101 = arith.select %98, %100, %82 : vector<8x8x128xi1>, vector<8x8x128xf32>
    %102 = vector.shape_cast %93 : vector<8x128xf32> to vector<1x8x128xf32>
    %103 = vector.broadcast %94 : vector<8x1x128xf32> to vector<8x8x128xf32>
    %104 = vector.broadcast %102 : vector<1x8x128xf32> to vector<8x8x128xf32>
    %105 = arith.mulf %103, %104 : vector<8x8x128xf32>
    %106 = arith.addf %87, %105 : vector<8x8x128xf32>
    %107 = vector.extract_strided_slice %9 {offsets = [0, 5, 0], sizes = [8, 1, 128], strides = [1, 1, 1]} : vector<8x8x128xf32> to vector<8x1x128xf32>
    %108 = vector.shape_cast %107 : vector<8x1x128xf32> to vector<8x128xf32>
    %109 = arith.mulf %108, %93 : vector<8x128xf32>
    %110 = vector.extract_strided_slice %14 {offsets = [0, 5, 0], sizes = [8, 1, 128], strides = [1, 1, 1]} : vector<8x8x128xf32> to vector<8x1x128xf32>
    %111 = vector.shape_cast %110 : vector<8x1x128xf32> to vector<8x128xf32>
    %112 = arith.addf %109, %111 : vector<8x128xf32>
    %113 = vector.shape_cast %112 : vector<8x128xf32> to vector<8x1x128xf32>
    %c5_i32 = arith.constant 5 : i32
    %114 = vector.broadcast %c5_i32 : i32 to vector<1x8x128xi32>
    %115 = arith.cmpi eq, %15, %114 : vector<1x8x128xi32>
    %116 = vector.shape_cast %115 : vector<1x8x128xi1> to vector<1x8x128xi1>
    %117 = vector.broadcast %116 : vector<1x8x128xi1> to vector<8x8x128xi1>
    %118 = vector.shape_cast %113 : vector<8x1x128xf32> to vector<8x1x128xf32>
    %119 = vector.broadcast %118 : vector<8x1x128xf32> to vector<8x8x128xf32>
    %120 = arith.select %117, %119, %101 : vector<8x8x128xi1>, vector<8x8x128xf32>
    %121 = vector.shape_cast %112 : vector<8x128xf32> to vector<1x8x128xf32>
    %122 = vector.broadcast %113 : vector<8x1x128xf32> to vector<8x8x128xf32>
    %123 = vector.broadcast %121 : vector<1x8x128xf32> to vector<8x8x128xf32>
    %124 = arith.mulf %122, %123 : vector<8x8x128xf32>
    %125 = arith.addf %106, %124 : vector<8x8x128xf32>
    %126 = vector.extract_strided_slice %9 {offsets = [0, 6, 0], sizes = [8, 1, 128], strides = [1, 1, 1]} : vector<8x8x128xf32> to vector<8x1x128xf32>
    %127 = vector.shape_cast %126 : vector<8x1x128xf32> to vector<8x128xf32>
    %128 = arith.mulf %127, %112 : vector<8x128xf32>
    %129 = vector.extract_strided_slice %14 {offsets = [0, 6, 0], sizes = [8, 1, 128], strides = [1, 1, 1]} : vector<8x8x128xf32> to vector<8x1x128xf32>
    %130 = vector.shape_cast %129 : vector<8x1x128xf32> to vector<8x128xf32>
    %131 = arith.addf %128, %130 : vector<8x128xf32>
    %132 = vector.shape_cast %131 : vector<8x128xf32> to vector<8x1x128xf32>
    %c6_i32 = arith.constant 6 : i32
    %133 = vector.broadcast %c6_i32 : i32 to vector<1x8x128xi32>
    %134 = arith.cmpi eq, %15, %133 : vector<1x8x128xi32>
    %135 = vector.shape_cast %134 : vector<1x8x128xi1> to vector<1x8x128xi1>
    %136 = vector.broadcast %135 : vector<1x8x128xi1> to vector<8x8x128xi1>
    %137 = vector.shape_cast %132 : vector<8x1x128xf32> to vector<8x1x128xf32>
    %138 = vector.broadcast %137 : vector<8x1x128xf32> to vector<8x8x128xf32>
    %139 = arith.select %136, %138, %120 : vector<8x8x128xi1>, vector<8x8x128xf32>
    %140 = vector.shape_cast %131 : vector<8x128xf32> to vector<1x8x128xf32>
    %141 = vector.broadcast %132 : vector<8x1x128xf32> to vector<8x8x128xf32>
    %142 = vector.broadcast %140 : vector<1x8x128xf32> to vector<8x8x128xf32>
    %143 = arith.mulf %141, %142 : vector<8x8x128xf32>
    %144 = arith.addf %125, %143 : vector<8x8x128xf32>
    %145 = vector.extract_strided_slice %9 {offsets = [0, 7, 0], sizes = [8, 1, 128], strides = [1, 1, 1]} : vector<8x8x128xf32> to vector<8x1x128xf32>
    %146 = vector.shape_cast %145 : vector<8x1x128xf32> to vector<8x128xf32>
    %147 = arith.mulf %146, %131 : vector<8x128xf32>
    %148 = vector.extract_strided_slice %14 {offsets = [0, 7, 0], sizes = [8, 1, 128], strides = [1, 1, 1]} : vector<8x8x128xf32> to vector<8x1x128xf32>
    %149 = vector.shape_cast %148 : vector<8x1x128xf32> to vector<8x128xf32>
    %150 = arith.addf %147, %149 : vector<8x128xf32>
    %151 = vector.shape_cast %150 : vector<8x128xf32> to vector<8x1x128xf32>
    %c7_i32 = arith.constant 7 : i32
    %152 = vector.broadcast %c7_i32 : i32 to vector<1x8x128xi32>
    %153 = arith.cmpi eq, %15, %152 : vector<1x8x128xi32>
    %154 = vector.shape_cast %153 : vector<1x8x128xi1> to vector<1x8x128xi1>
    %155 = vector.broadcast %154 : vector<1x8x128xi1> to vector<8x8x128xi1>
    %156 = vector.shape_cast %151 : vector<8x1x128xf32> to vector<8x1x128xf32>
    %157 = vector.broadcast %156 : vector<8x1x128xf32> to vector<8x8x128xf32>
    %158 = arith.select %155, %157, %139 : vector<8x8x128xi1>, vector<8x8x128xf32>
    %159 = vector.shape_cast %150 : vector<8x128xf32> to vector<1x8x128xf32>
    %160 = vector.broadcast %151 : vector<8x1x128xf32> to vector<8x8x128xf32>
    %161 = vector.broadcast %159 : vector<1x8x128xf32> to vector<8x8x128xf32>
    %162 = arith.mulf %160, %161 : vector<8x8x128xf32>
    %163 = arith.addf %144, %162 : vector<8x8x128xf32>
    %164 = vector.extract_strided_slice %163 {offsets = [0, 0, 0], sizes = [1, 8, 128], strides = [1, 1, 1]} : vector<8x8x128xf32> to vector<1x8x128xf32>
    %165 = vector.shape_cast %164 : vector<1x8x128xf32> to vector<8x128xf32>
    %166 = vector.extract_strided_slice %163 {offsets = [1, 0, 0], sizes = [1, 8, 128], strides = [1, 1, 1]} : vector<8x8x128xf32> to vector<1x8x128xf32>
    %167 = vector.shape_cast %166 : vector<1x8x128xf32> to vector<8x128xf32>
    %168 = arith.maximumf %165, %167 : vector<8x128xf32>
    %169 = vector.extract_strided_slice %163 {offsets = [2, 0, 0], sizes = [1, 8, 128], strides = [1, 1, 1]} : vector<8x8x128xf32> to vector<1x8x128xf32>
    %170 = vector.shape_cast %169 : vector<1x8x128xf32> to vector<8x128xf32>
    %171 = arith.maximumf %168, %170 : vector<8x128xf32>
    %172 = vector.extract_strided_slice %163 {offsets = [3, 0, 0], sizes = [1, 8, 128], strides = [1, 1, 1]} : vector<8x8x128xf32> to vector<1x8x128xf32>
    %173 = vector.shape_cast %172 : vector<1x8x128xf32> to vector<8x128xf32>
    %174 = arith.maximumf %171, %173 : vector<8x128xf32>
    %175 = vector.extract_strided_slice %163 {offsets = [4, 0, 0], sizes = [1, 8, 128], strides = [1, 1, 1]} : vector<8x8x128xf32> to vector<1x8x128xf32>
    %176 = vector.shape_cast %175 : vector<1x8x128xf32> to vector<8x128xf32>
    %177 = arith.maximumf %174, %176 : vector<8x128xf32>
    %178 = vector.extract_strided_slice %163 {offsets = [5, 0, 0], sizes = [1, 8, 128], strides = [1, 1, 1]} : vector<8x8x128xf32> to vector<1x8x128xf32>
    %179 = vector.shape_cast %178 : vector<1x8x128xf32> to vector<8x128xf32>
    %180 = arith.maximumf %177, %179 : vector<8x128xf32>
    %181 = vector.extract_strided_slice %163 {offsets = [6, 0, 0], sizes = [1, 8, 128], strides = [1, 1, 1]} : vector<8x8x128xf32> to vector<1x8x128xf32>
    %182 = vector.shape_cast %181 : vector<1x8x128xf32> to vector<8x128xf32>
    %183 = arith.maximumf %180, %182 : vector<8x128xf32>
    %184 = vector.extract_strided_slice %163 {offsets = [7, 0, 0], sizes = [1, 8, 128], strides = [1, 1, 1]} : vector<8x8x128xf32> to vector<1x8x128xf32>
    %185 = vector.shape_cast %184 : vector<1x8x128xf32> to vector<8x128xf32>
    %186 = arith.maximumf %183, %185 : vector<8x128xf32>
    %187 = vector.shape_cast %186 : vector<8x128xf32> to vector<1x8x128xf32>
    %188 = vector.broadcast %187 : vector<1x8x128xf32> to vector<8x8x128xf32>
    %189 = arith.subf %163, %188 : vector<8x8x128xf32>
    %190 = math.exp %189 : vector<8x8x128xf32>
    %191 = vector.extract_strided_slice %190 {offsets = [0, 0, 0], sizes = [1, 8, 128], strides = [1, 1, 1]} : vector<8x8x128xf32> to vector<1x8x128xf32>
    %192 = vector.shape_cast %191 : vector<1x8x128xf32> to vector<8x128xf32>
    %193 = vector.extract_strided_slice %190 {offsets = [1, 0, 0], sizes = [1, 8, 128], strides = [1, 1, 1]} : vector<8x8x128xf32> to vector<1x8x128xf32>
    %194 = vector.shape_cast %193 : vector<1x8x128xf32> to vector<8x128xf32>
    %195 = arith.addf %192, %194 : vector<8x128xf32>
    %196 = vector.extract_strided_slice %190 {offsets = [2, 0, 0], sizes = [1, 8, 128], strides = [1, 1, 1]} : vector<8x8x128xf32> to vector<1x8x128xf32>
    %197 = vector.shape_cast %196 : vector<1x8x128xf32> to vector<8x128xf32>
    %198 = arith.addf %195, %197 : vector<8x128xf32>
    %199 = vector.extract_strided_slice %190 {offsets = [3, 0, 0], sizes = [1, 8, 128], strides = [1, 1, 1]} : vector<8x8x128xf32> to vector<1x8x128xf32>
    %200 = vector.shape_cast %199 : vector<1x8x128xf32> to vector<8x128xf32>
    %201 = arith.addf %198, %200 : vector<8x128xf32>
    %202 = vector.extract_strided_slice %190 {offsets = [4, 0, 0], sizes = [1, 8, 128], strides = [1, 1, 1]} : vector<8x8x128xf32> to vector<1x8x128xf32>
    %203 = vector.shape_cast %202 : vector<1x8x128xf32> to vector<8x128xf32>
    %204 = arith.addf %201, %203 : vector<8x128xf32>
    %205 = vector.extract_strided_slice %190 {offsets = [5, 0, 0], sizes = [1, 8, 128], strides = [1, 1, 1]} : vector<8x8x128xf32> to vector<1x8x128xf32>
    %206 = vector.shape_cast %205 : vector<1x8x128xf32> to vector<8x128xf32>
    %207 = arith.addf %204, %206 : vector<8x128xf32>
    %208 = vector.extract_strided_slice %190 {offsets = [6, 0, 0], sizes = [1, 8, 128], strides = [1, 1, 1]} : vector<8x8x128xf32> to vector<1x8x128xf32>
    %209 = vector.shape_cast %208 : vector<1x8x128xf32> to vector<8x128xf32>
    %210 = arith.addf %207, %209 : vector<8x128xf32>
    %211 = vector.extract_strided_slice %190 {offsets = [7, 0, 0], sizes = [1, 8, 128], strides = [1, 1, 1]} : vector<8x8x128xf32> to vector<1x8x128xf32>
    %212 = vector.shape_cast %211 : vector<1x8x128xf32> to vector<8x128xf32>
    %213 = arith.addf %210, %212 : vector<8x128xf32>
    %214 = tpu.reciprocal %213 {approx = true} : vector<8x128xf32> -> vector<8x128xf32>
    %cst_7 = arith.constant 0.353553385 : f32
    %215 = vector.broadcast %cst_7 : f32 to vector<8x128xf32>
    %216 = arith.mulf %214, %215 : vector<8x128xf32>
    %217 = vector.shape_cast %216 : vector<8x128xf32> to vector<1x8x128xf32>
    %218 = vector.broadcast %217 : vector<1x8x128xf32> to vector<8x8x128xf32>
    %219 = arith.mulf %190, %218 : vector<8x8x128xf32>
    %220 = vector.extract_strided_slice %219 {offsets = [0, 0, 0], sizes = [8, 1, 128], strides = [1, 1, 1]} : vector<8x8x128xf32> to vector<8x1x128xf32>
    %221 = vector.shape_cast %220 : vector<8x1x128xf32> to vector<8x128xf32>
    %222 = vector.shape_cast %221 : vector<8x128xf32> to vector<8x1x128xf32>
    %223 = vector.extract_strided_slice %158 {offsets = [0, 0, 0], sizes = [1, 8, 128], strides = [1, 1, 1]} : vector<8x8x128xf32> to vector<1x8x128xf32>
    %224 = vector.shape_cast %223 : vector<1x8x128xf32> to vector<8x128xf32>
    %225 = vector.shape_cast %224 : vector<8x128xf32> to vector<1x8x128xf32>
    %226 = vector.broadcast %222 : vector<8x1x128xf32> to vector<8x8x128xf32>
    %227 = vector.broadcast %225 : vector<1x8x128xf32> to vector<8x8x128xf32>
    %228 = arith.mulf %226, %227 : vector<8x8x128xf32>
    %229 = vector.extract_strided_slice %219 {offsets = [0, 1, 0], sizes = [8, 1, 128], strides = [1, 1, 1]} : vector<8x8x128xf32> to vector<8x1x128xf32>
    %230 = vector.shape_cast %229 : vector<8x1x128xf32> to vector<8x128xf32>
    %231 = vector.shape_cast %230 : vector<8x128xf32> to vector<8x1x128xf32>
    %232 = vector.extract_strided_slice %158 {offsets = [1, 0, 0], sizes = [1, 8, 128], strides = [1, 1, 1]} : vector<8x8x128xf32> to vector<1x8x128xf32>
    %233 = vector.shape_cast %232 : vector<1x8x128xf32> to vector<8x128xf32>
    %234 = vector.shape_cast %233 : vector<8x128xf32> to vector<1x8x128xf32>
    %235 = vector.broadcast %231 : vector<8x1x128xf32> to vector<8x8x128xf32>
    %236 = vector.broadcast %234 : vector<1x8x128xf32> to vector<8x8x128xf32>
    %237 = arith.mulf %235, %236 : vector<8x8x128xf32>
    %238 = arith.addf %228, %237 : vector<8x8x128xf32>
    %239 = vector.extract_strided_slice %219 {offsets = [0, 2, 0], sizes = [8, 1, 128], strides = [1, 1, 1]} : vector<8x8x128xf32> to vector<8x1x128xf32>
    %240 = vector.shape_cast %239 : vector<8x1x128xf32> to vector<8x128xf32>
    %241 = vector.shape_cast %240 : vector<8x128xf32> to vector<8x1x128xf32>
    %242 = vector.extract_strided_slice %158 {offsets = [2, 0, 0], sizes = [1, 8, 128], strides = [1, 1, 1]} : vector<8x8x128xf32> to vector<1x8x128xf32>
    %243 = vector.shape_cast %242 : vector<1x8x128xf32> to vector<8x128xf32>
    %244 = vector.shape_cast %243 : vector<8x128xf32> to vector<1x8x128xf32>
    %245 = vector.broadcast %241 : vector<8x1x128xf32> to vector<8x8x128xf32>
    %246 = vector.broadcast %244 : vector<1x8x128xf32> to vector<8x8x128xf32>
    %247 = arith.mulf %245, %246 : vector<8x8x128xf32>
    %248 = arith.addf %238, %247 : vector<8x8x128xf32>
    %249 = vector.extract_strided_slice %219 {offsets = [0, 3, 0], sizes = [8, 1, 128], strides = [1, 1, 1]} : vector<8x8x128xf32> to vector<8x1x128xf32>
    %250 = vector.shape_cast %249 : vector<8x1x128xf32> to vector<8x128xf32>
    %251 = vector.shape_cast %250 : vector<8x128xf32> to vector<8x1x128xf32>
    %252 = vector.extract_strided_slice %158 {offsets = [3, 0, 0], sizes = [1, 8, 128], strides = [1, 1, 1]} : vector<8x8x128xf32> to vector<1x8x128xf32>
    %253 = vector.shape_cast %252 : vector<1x8x128xf32> to vector<8x128xf32>
    %254 = vector.shape_cast %253 : vector<8x128xf32> to vector<1x8x128xf32>
    %255 = vector.broadcast %251 : vector<8x1x128xf32> to vector<8x8x128xf32>
    %256 = vector.broadcast %254 : vector<1x8x128xf32> to vector<8x8x128xf32>
    %257 = arith.mulf %255, %256 : vector<8x8x128xf32>
    %258 = arith.addf %248, %257 : vector<8x8x128xf32>
    %259 = vector.extract_strided_slice %219 {offsets = [0, 4, 0], sizes = [8, 1, 128], strides = [1, 1, 1]} : vector<8x8x128xf32> to vector<8x1x128xf32>
    %260 = vector.shape_cast %259 : vector<8x1x128xf32> to vector<8x128xf32>
    %261 = vector.shape_cast %260 : vector<8x128xf32> to vector<8x1x128xf32>
    %262 = vector.extract_strided_slice %158 {offsets = [4, 0, 0], sizes = [1, 8, 128], strides = [1, 1, 1]} : vector<8x8x128xf32> to vector<1x8x128xf32>
    %263 = vector.shape_cast %262 : vector<1x8x128xf32> to vector<8x128xf32>
    %264 = vector.shape_cast %263 : vector<8x128xf32> to vector<1x8x128xf32>
    %265 = vector.broadcast %261 : vector<8x1x128xf32> to vector<8x8x128xf32>
    %266 = vector.broadcast %264 : vector<1x8x128xf32> to vector<8x8x128xf32>
    %267 = arith.mulf %265, %266 : vector<8x8x128xf32>
    %268 = arith.addf %258, %267 : vector<8x8x128xf32>
    %269 = vector.extract_strided_slice %219 {offsets = [0, 5, 0], sizes = [8, 1, 128], strides = [1, 1, 1]} : vector<8x8x128xf32> to vector<8x1x128xf32>
    %270 = vector.shape_cast %269 : vector<8x1x128xf32> to vector<8x128xf32>
    %271 = vector.shape_cast %270 : vector<8x128xf32> to vector<8x1x128xf32>
    %272 = vector.extract_strided_slice %158 {offsets = [5, 0, 0], sizes = [1, 8, 128], strides = [1, 1, 1]} : vector<8x8x128xf32> to vector<1x8x128xf32>
    %273 = vector.shape_cast %272 : vector<1x8x128xf32> to vector<8x128xf32>
    %274 = vector.shape_cast %273 : vector<8x128xf32> to vector<1x8x128xf32>
    %275 = vector.broadcast %271 : vector<8x1x128xf32> to vector<8x8x128xf32>
    %276 = vector.broadcast %274 : vector<1x8x128xf32> to vector<8x8x128xf32>
    %277 = arith.mulf %275, %276 : vector<8x8x128xf32>
    %278 = arith.addf %268, %277 : vector<8x8x128xf32>
    %279 = vector.extract_strided_slice %219 {offsets = [0, 6, 0], sizes = [8, 1, 128], strides = [1, 1, 1]} : vector<8x8x128xf32> to vector<8x1x128xf32>
    %280 = vector.shape_cast %279 : vector<8x1x128xf32> to vector<8x128xf32>
    %281 = vector.shape_cast %280 : vector<8x128xf32> to vector<8x1x128xf32>
    %282 = vector.extract_strided_slice %158 {offsets = [6, 0, 0], sizes = [1, 8, 128], strides = [1, 1, 1]} : vector<8x8x128xf32> to vector<1x8x128xf32>
    %283 = vector.shape_cast %282 : vector<1x8x128xf32> to vector<8x128xf32>
    %284 = vector.shape_cast %283 : vector<8x128xf32> to vector<1x8x128xf32>
    %285 = vector.broadcast %281 : vector<8x1x128xf32> to vector<8x8x128xf32>
    %286 = vector.broadcast %284 : vector<1x8x128xf32> to vector<8x8x128xf32>
    %287 = arith.mulf %285, %286 : vector<8x8x128xf32>
    %288 = arith.addf %278, %287 : vector<8x8x128xf32>
    %289 = vector.extract_strided_slice %219 {offsets = [0, 7, 0], sizes = [8, 1, 128], strides = [1, 1, 1]} : vector<8x8x128xf32> to vector<8x1x128xf32>
    %290 = vector.shape_cast %289 : vector<8x1x128xf32> to vector<8x128xf32>
    %291 = vector.shape_cast %290 : vector<8x128xf32> to vector<8x1x128xf32>
    %292 = vector.extract_strided_slice %158 {offsets = [7, 0, 0], sizes = [1, 8, 128], strides = [1, 1, 1]} : vector<8x8x128xf32> to vector<1x8x128xf32>
    %293 = vector.shape_cast %292 : vector<1x8x128xf32> to vector<8x128xf32>
    %294 = vector.shape_cast %293 : vector<8x128xf32> to vector<1x8x128xf32>
    %295 = vector.broadcast %291 : vector<8x1x128xf32> to vector<8x8x128xf32>
    %296 = vector.broadcast %294 : vector<1x8x128xf32> to vector<8x8x128xf32>
    %297 = arith.mulf %295, %296 : vector<8x8x128xf32>
    %298 = arith.addf %288, %297 : vector<8x8x128xf32>
    %c0_8 = arith.constant 0 : index
    %299 = memref.load %arg1[%c0_8] : memref<1xf32, #tpu.memory_space<smem>>
    %300 = vector.broadcast %299 : f32 to vector<8x8x128xf32>
    %301 = arith.mulf %300, %298 : vector<8x8x128xf32>
    %302 = arith.addf %301, %158 : vector<8x8x128xf32>
    %c0_9 = arith.constant 0 : index
    %c0_10 = arith.constant 0 : index
    %c0_11 = arith.constant 0 : index
    %303 = vector.load %arg4[%c0_9, %c0_10, %c0_11] : memref<8x8x128xf32, #tpu.memory_space<vmem>>, vector<8x8x128xf32>
    tpu.vector_store %arg4[%c0_9, %c0_10, %c0_11], %302 {strides = array<i32>} : memref<8x8x128xf32, #tpu.memory_space<vmem>>, vector<8x8x128xf32>,
    return
  }
  func.func @transform_0(%arg0: i32) -> i32 {
    %c0_i32 = arith.constant 0 : i32
    %c0_i32_0 = arith.constant 0 : i32
    return %c0_i32 : i32
  }
  func.func @transform_1(%arg0: i32) -> (i32, i32, i32) {
    %c0_i32 = arith.constant 0 : i32
    %c0_i32_0 = arith.constant 0 : i32
    %c0_i32_1 = arith.constant 0 : i32
    %c0_i32_2 = arith.constant 0 : i32
    return %c0_i32, %c0_i32_0, %c0_i32_1 : i32, i32, i32
  }
  func.func @transform_2(%arg0: i32) -> (i32, i32, i32) {
    %c0_i32 = arith.constant 0 : i32
    %c0_i32_0 = arith.constant 0 : i32
    %c0_i32_1 = arith.constant 0 : i32
    return %c0_i32, %c0_i32_0, %arg0 : i32, i32, i32
  }
  func.func @transform_3(%arg0: i32) -> (i32, i32, i32) {
    %c0_i32 = arith.constant 0 : i32
    %c0_i32_0 = arith.constant 0 : i32
    %c0_i32_1 = arith.constant 0 : i32
    return %c0_i32, %c0_i32_0, %arg0 : i32, i32, i32
  }
}

</mosaic_0001>

<llo_original>
// kernel: run.3
$region0: #{run.3}
  #allocation0 [shape = 'u32[]', space=smem, size = 0x4, offset = 0x4, fixed_abs, tag = 'smem constant byte address 0x4 - core index']
  #allocation1 [shape = 'u32[144,128]{1,0:T(1,128)}', space=vmem, size = 0x12000, scoped, tag = 'internal scratch']
  #allocation2 [shape = 'f32[1]{0:T(128)S(6)}', space=smem, size = 0x200, scoped, tag = 'scoped memory for run.3']
  %s0 = inlined_call_operand.<no memory space> [shape: f32[1], index: 0, kind: input, shape index: {}]
  %s1 = inlined_call_operand.vmem [shape: f32[8,8,1], index: 1, kind: input, shape index: {}]
  %s2 = inlined_call_operand.vmem [shape: f32[8,8,128], index: 2, kind: input, shape index: {}]
  %s3 = inlined_call_operand.vmem [shape: f32[4,8,128], index: 3, kind: output, shape index: {}]
  %s4 = sld [smem:[#allocation0]]
  $region22: #{run.3} parent=0
    _
  %s6 = ssub.s32 1, %s4
  %s7 = scalar_select 0, %s6, %s4
  %8 = sst [smem:[#allocation2]] %s0
  // Predicated region
  $region2: #{run.3} parent=0 // pred_check
    _
  $region3: #{run.3} parent=0 // pred_check_branch
    %10 = sbr.rel (0) target = $region5
  $region4: #{run.3} parent=0 // pred_region
    _
  $region5: #{run.3} parent=0 // pred_fallthru
    _
  // Predicated region
  $region6: #{run.3} parent=0 // pred_check
    _
  $region7: #{run.3} parent=0 // pred_check_branch
    %12 = sbr.rel (0) target = $region9
  $region8: #{run.3} parent=0 // pred_region
    _
  $region9: #{run.3} parent=0 // pred_fallthru
    _
  // Predicated region
  $region10: #{run.3} parent=0 // pred_check
    _
  $region11: #{run.3} parent=0 // pred_check_branch
    %14 = sbr.rel (0) target = $region13
  $region12: #{run.3} parent=0 // pred_region
    _
  $region13: #{run.3} parent=0 // pred_fallthru
    _
  %v15 = vld [vmem:[%s2] sm:$0xff]
  %v16 = vld [vmem:[%s2 + $0x8] sm:$0xff]
  %v17 = vld [vmem:[%s2 + $0x10] sm:$0xff]
  %v18 = vld [vmem:[%s2 + $0x18] sm:$0xff]
  %v19 = vld [vmem:[%s2 + $0x20] sm:$0xff]
  %v20 = vld [vmem:[%s2 + $0x28] sm:$0xff]
  %v21 = vld [vmem:[%s2 + $0x30] sm:$0xff]
  %v22 = vld [vmem:[%s2 + $0x38] sm:$0xff]
  %v23 = vld [vmem:[%s1] sm:$0xff]
  %v24 = vld [vmem:[%s1 + $0x8] sm:$0xff]
  %v25 = vld [vmem:[%s1 + $0x10] sm:$0xff]
  %v26 = vld [vmem:[%s1 + $0x18] sm:$0xff]
  %v27 = vld [vmem:[%s1 + $0x20] sm:$0xff]
  %v28 = vld [vmem:[%s1 + $0x28] sm:$0xff]
  %v29 = vld [vmem:[%s1 + $0x30] sm:$0xff]
  %v30 = vld [vmem:[%s1 + $0x38] sm:$0xff]
  %32 = vset.pattern.permute.xlu0 0
  %33 = vperm.xlu0 %32, %v23
  %v34 = vpop.permute.xlu0 %33
  %37 = vset.pattern.permute.xlu0 0
  %38 = vperm.xlu0 %37, %v24
  %v39 = vpop.permute.xlu0 %38
  %42 = vset.pattern.permute.xlu0 0
  %43 = vperm.xlu0 %42, %v25
  %v44 = vpop.permute.xlu0 %43
  %47 = vset.pattern.permute.xlu0 0
  %48 = vperm.xlu0 %47, %v26
  %v49 = vpop.permute.xlu0 %48
  %52 = vset.pattern.permute.xlu0 0
  %53 = vperm.xlu0 %52, %v27
  %v54 = vpop.permute.xlu0 %53
  %57 = vset.pattern.permute.xlu0 0
  %58 = vperm.xlu0 %57, %v28
  %v59 = vpop.permute.xlu0 %58
  %62 = vset.pattern.permute.xlu0 0
  %63 = vperm.xlu0 %62, %v29
  %v64 = vpop.permute.xlu0 %63
  %67 = vset.pattern.permute.xlu0 0
  %68 = vperm.xlu0 %67, %v30
  %v69 = vpop.permute.xlu0 %68
  %v71 = vadd.f32 %v15, %v34
  %v72 = vadd.f32 %v16, %v39
  %v73 = vadd.f32 %v17, %v44
  %v74 = vadd.f32 %v18, %v49
  %v75 = vadd.f32 %v19, %v54
  %v76 = vadd.f32 %v20, %v59
  %v77 = vadd.f32 %v21, %v64
  %v78 = vadd.f32 %v22, %v69
  %v79 = vxor.u32 %v75, 2147483648
  %v80 = vxor.u32 %v76, 2147483648
  %v81 = vxor.u32 %v77, 2147483648
  %v82 = vxor.u32 %v78, 2147483648
  %v83 = vmul.f32 %v79, 1.442695
  %v84 = vpow.pop %v83
  %v85 = vmul.f32 %v80, 1.442695
  %v86 = vpow.pop %v85
  %v87 = vmul.f32 %v81, 1.442695
  %v88 = vpow.pop %v87
  %v89 = vmul.f32 %v82, 1.442695
  %v90 = vpow.pop %v89
  %v91 = vadd.f32 %v84, 1.0
  %v92 = vadd.f32 %v86, 1.0
  %v93 = vadd.f32 %v88, 1.0
  %v94 = vadd.f32 %v90, 1.0
  %v95 = vrcp.pop %v91
  %v96 = vmul.f32 1.0, %v95
  %v97 = vrcp.pop %v92
  %v98 = vmul.f32 1.0, %v97
  %v99 = vrcp.pop %v93
  %v100 = vmul.f32 1.0, %v99
  %v101 = vrcp.pop %v94
  %v102 = vmul.f32 1.0, %v101
  %v103 = vsub.f32 1.0, %v96
  %v104 = vsub.f32 1.0, %v98
  %v105 = vsub.f32 1.0, %v100
  %v106 = vsub.f32 1.0, %v102
  %v107 = vtanh.pop %v71
  %v108 = vtanh.pop %v72
  %v109 = vtanh.pop %v73
  %v110 = vtanh.pop %v74
  %v111 = vmul.f32 %v103, %v107
  %v112 = vmul.f32 %v104, %v108
  %v113 = vmul.f32 %v105, %v109
  %v114 = vmul.f32 %v106, %v110
  %v115 = vlaneseq
  %v116 = vshrl.u32 %v115, 7
  %vm117 = vcmp.eq.s32.totalorder %v116, 0
  %v118 = vsel %vm117, 1, 0
  %vm119 = vcmp.eq.s32.totalorder %v118, 1
  %v120 = vlaneseq
  %v121 = vshrl.u32 %v120, 7
  %v122 = vsub.s32 0, %v121
  %v123 = vrot.slane %v111, %v122
  %v124 = vlaneseq
  %v125 = vshrl.u32 %v124, 7
  %v126 = vsub.s32 0, %v125
  %v127 = vrot.slane %v112, %v126
  %v128 = vlaneseq
  %v129 = vshrl.u32 %v128, 7
  %v130 = vsub.s32 0, %v129
  %v131 = vrot.slane %v113, %v130
  %v132 = vlaneseq
  %v133 = vshrl.u32 %v132, 7
  %v134 = vsub.s32 0, %v133
  %v135 = vrot.slane %v114, %v134
  %v136 = vsel %vm119, %v123, 0.0
  %v137 = vsel %vm119, %v127, 0.0
  %v138 = vsel %vm119, %v131, 0.0
  %v139 = vsel %vm119, %v135, 0.0
  %v144 = vrot.slane %v112, 7
  %vm145 = vcmask 1041409
  %v146 = vsel %vm145, %v144, %v111
  %v147 = vrot.slane %v113, 6
  %vm148 = vcmask 1042434
  %v149 = vsel %vm148, %v147, %v146
  %v150 = vrot.slane %v114, 5
  %vm151 = vcmask 1043459
  %v152 = vsel %vm151, %v150, %v149
  %v154 = vmul.f32 %v123, %v152
  %v155 = vmul.f32 %v127, %v152
  %v156 = vmul.f32 %v131, %v152
  %v157 = vmul.f32 %v135, %v152
  %v158 = vrot.slane %v111, 7
  %v159 = vrot.slane %v113, 7
  %v160 = vrot.slane %v114, 7
  %v165 = vmul.f32 %v96, %v158
  %v166 = vmul.f32 %v98, %v144
  %v167 = vmul.f32 %v100, %v159
  %v168 = vmul.f32 %v102, %v160
  %v169 = vadd.f32 %v165, %v111
  %v170 = vadd.f32 %v166, %v112
  %v171 = vadd.f32 %v167, %v113
  %v172 = vadd.f32 %v168, %v114
  %vm173 = vcmp.eq.s32.totalorder %v116, 1
  %v174 = vsel %vm173, 1, 0
  %vm175 = vcmp.eq.s32.totalorder %v174, 1
  %v176 = vlaneseq
  %v177 = vshrl.u32 %v176, 7
  %v178 = vsub.s32 1, %v177
  %v179 = vrot.slane %v169, %v178
  %v180 = vlaneseq
  %v181 = vshrl.u32 %v180, 7
  %v182 = vsub.s32 1, %v181
  %v183 = vrot.slane %v170, %v182
  %v184 = vlaneseq
  %v185 = vshrl.u32 %v184, 7
  %v186 = vsub.s32 1, %v185
  %v187 = vrot.slane %v171, %v186
  %v188 = vlaneseq
  %v189 = vshrl.u32 %v188, 7
  %v190 = vsub.s32 1, %v189
  %v191 = vrot.slane %v172, %v190
  %v192 = vsel %vm175, %v179, %v136
  %v193 = vsel %vm175, %v183, %v137
  %v194 = vsel %vm175, %v187, %v138
  %v195 = vsel %vm175, %v191, %v139
  %v200 = vrot.slane %v169, 1
  %v201 = vsel %vm145, %v170, %v200
  %v202 = vrot.slane %v171, 7
  %v203 = vsel %vm148, %v202, %v201
  %v204 = vrot.slane %v172, 6
  %v205 = vsel %vm151, %v204, %v203
  %v207 = vmul.f32 %v179, %v205
  %v208 = vmul.f32 %v183, %v205
  %v209 = vmul.f32 %v187, %v205
  %v210 = vmul.f32 %v191, %v205
  %v211 = vadd.f32 %v154, %v207
  %v212 = vadd.f32 %v155, %v208
  %v213 = vadd.f32 %v156, %v209
  %v214 = vadd.f32 %v157, %v210
  %v215 = vrot.slane %v169, 7
  %v216 = vrot.slane %v170, 7
  %v217 = vrot.slane %v172, 7
  %v222 = vmul.f32 %v96, %v215
  %v223 = vmul.f32 %v98, %v216
  %v224 = vmul.f32 %v100, %v202
  %v225 = vmul.f32 %v102, %v217
  %v226 = vadd.f32 %v222, %v111
  %v227 = vadd.f32 %v223, %v112
  %v228 = vadd.f32 %v224, %v113
  %v229 = vadd.f32 %v225, %v114
  %vm230 = vcmp.eq.s32.totalorder %v116, 2
  %v231 = vsel %vm230, 1, 0
  %vm232 = vcmp.eq.s32.totalorder %v231, 1
  %v233 = vlaneseq
  %v234 = vshrl.u32 %v233, 7
  %v235 = vsub.s32 2, %v234
  %v236 = vrot.slane %v226, %v235
  %v237 = vlaneseq
  %v238 = vshrl.u32 %v237, 7
  %v239 = vsub.s32 2, %v238
  %v240 = vrot.slane %v227, %v239
  %v241 = vlaneseq
  %v242 = vshrl.u32 %v241, 7
  %v243 = vsub.s32 2, %v242
  %v244 = vrot.slane %v228, %v243
  %v245 = vlaneseq
  %v246 = vshrl.u32 %v245, 7
  %v247 = vsub.s32 2, %v246
  %v248 = vrot.slane %v229, %v247
  %v249 = vsel %vm232, %v236, %v192
  %v250 = vsel %vm232, %v240, %v193
  %v251 = vsel %vm232, %v244, %v194
  %v252 = vsel %vm232, %v248, %v195
  %v257 = vrot.slane %v226, 2
  %v258 = vrot.slane %v227, 1
  %v259 = vsel %vm145, %v258, %v257
  %v260 = vsel %vm148, %v228, %v259
  %v261 = vrot.slane %v229, 7
  %v262 = vsel %vm151, %v261, %v260
  %v264 = vmul.f32 %v236, %v262
  %v265 = vmul.f32 %v240, %v262
  %v266 = vmul.f32 %v244, %v262
  %v267 = vmul.f32 %v248, %v262
  %v268 = vadd.f32 %v211, %v264
  %v269 = vadd.f32 %v212, %v265
  %v270 = vadd.f32 %v213, %v266
  %v271 = vadd.f32 %v214, %v267
  %v272 = vrot.slane %v226, 7
  %v273 = vrot.slane %v227, 7
  %v274 = vrot.slane %v228, 7
  %v279 = vmul.f32 %v96, %v272
  %v280 = vmul.f32 %v98, %v273
  %v281 = vmul.f32 %v100, %v274
  %v282 = vmul.f32 %v102, %v261
  %v283 = vadd.f32 %v279, %v111
  %v284 = vadd.f32 %v280, %v112
  %v285 = vadd.f32 %v281, %v113
  %v286 = vadd.f32 %v282, %v114
  %vm287 = vcmp.eq.s32.totalorder %v116, 3
  %v288 = vsel %vm287, 1, 0
  %vm289 = vcmp.eq.s32.totalorder %v288, 1
  %v290 = vlaneseq
  %v291 = vshrl.u32 %v290, 7
  %v292 = vsub.s32 3, %v291
  %v293 = vrot.slane %v283, %v292
  %v294 = vlaneseq
  %v295 = vshrl.u32 %v294, 7
  %v296 = vsub.s32 3, %v295
  %v297 = vrot.slane %v284, %v296
  %v298 = vlaneseq
  %v299 = vshrl.u32 %v298, 7
  %v300 = vsub.s32 3, %v299
  %v301 = vrot.slane %v285, %v300
  %v302 = vlaneseq
  %v303 = vshrl.u32 %v302, 7
  %v304 = vsub.s32 3, %v303
  %v305 = vrot.slane %v286, %v304
  %v306 = vsel %vm289, %v293, %v249
  %v307 = vsel %vm289, %v297, %v250
  %v308 = vsel %vm289, %v301, %v251
  %v309 = vsel %vm289, %v305, %v252
  %v314 = vrot.slane %v283, 3
  %v315 = vrot.slane %v284, 2
  %v316 = vsel %vm145, %v315, %v314
  %v317 = vrot.slane %v285, 1
  %v318 = vsel %vm148, %v317, %v316
  %v319 = vsel %vm151, %v286, %v318
  %v321 = vmul.f32 %v293, %v319
  %v322 = vmul.f32 %v297, %v319
  %v323 = vmul.f32 %v301, %v319
  %v324 = vmul.f32 %v305, %v319
  %v325 = vadd.f32 %v268, %v321
  %v326 = vadd.f32 %v269, %v322
  %v327 = vadd.f32 %v270, %v323
  %v328 = vadd.f32 %v271, %v324
  %v329 = vrot.slane %v283, 7
  %v330 = vrot.slane %v284, 7
  %v331 = vrot.slane %v285, 7
  %v332 = vrot.slane %v286, 7
  %v337 = vmul.f32 %v96, %v329
  %v338 = vmul.f32 %v98, %v330
  %v339 = vmul.f32 %v100, %v331
  %v340 = vmul.f32 %v102, %v332
  %v341 = vadd.f32 %v337, %v111
  %v342 = vadd.f32 %v338, %v112
  %v343 = vadd.f32 %v339, %v113
  %v344 = vadd.f32 %v340, %v114
  %vm345 = vcmp.eq.s32.totalorder %v116, 4
  %v346 = vsel %vm345, 1, 0
  %vm347 = vcmp.eq.s32.totalorder %v346, 1
  %v348 = vlaneseq
  %v349 = vshrl.u32 %v348, 7
  %v350 = vsub.s32 4, %v349
  %v351 = vrot.slane %v341, %v350
  %v352 = vlaneseq
  %v353 = vshrl.u32 %v352, 7
  %v354 = vsub.s32 4, %v353
  %v355 = vrot.slane %v342, %v354
  %v356 = vlaneseq
  %v357 = vshrl.u32 %v356, 7
  %v358 = vsub.s32 4, %v357
  %v359 = vrot.slane %v343, %v358
  %v360 = vlaneseq
  %v361 = vshrl.u32 %v360, 7
  %v362 = vsub.s32 4, %v361
  %v363 = vrot.slane %v344, %v362
  %v364 = vsel %vm347, %v351, %v306
  %v365 = vsel %vm347, %v355, %v307
  %v366 = vsel %vm347, %v359, %v308
  %v367 = vsel %vm347, %v363, %v309
  %v372 = vrot.slane %v341, 4
  %v373 = vrot.slane %v342, 3
  %v374 = vsel %vm145, %v373, %v372
  %v375 = vrot.slane %v343, 2
  %v376 = vsel %vm148, %v375, %v374
  %v377 = vrot.slane %v344, 1
  %v378 = vsel %vm151, %v377, %v376
  %v380 = vmul.f32 %v351, %v378
  %v381 = vmul.f32 %v355, %v378
  %v382 = vmul.f32 %v359, %v378
  %v383 = vmul.f32 %v363, %v378
  %v384 = vadd.f32 %v325, %v380
  %v385 = vadd.f32 %v326, %v381
  %v386 = vadd.f32 %v327, %v382
  %v387 = vadd.f32 %v328, %v383
  %v388 = vrot.slane %v341, 7
  %v389 = vrot.slane %v342, 7
  %v390 = vrot.slane %v343, 7
  %v391 = vrot.slane %v344, 7
  %v396 = vmul.f32 %v96, %v388
  %v397 = vmul.f32 %v98, %v389
  %v398 = vmul.f32 %v100, %v390
  %v399 = vmul.f32 %v102, %v391
  %v400 = vadd.f32 %v396, %v111
  %v401 = vadd.f32 %v397, %v112
  %v402 = vadd.f32 %v398, %v113
  %v403 = vadd.f32 %v399, %v114
  %vm404 = vcmp.eq.s32.totalorder %v116, 5
  %v405 = vsel %vm404, 1, 0
  %vm406 = vcmp.eq.s32.totalorder %v405, 1
  %v407 = vlaneseq
  %v408 = vshrl.u32 %v407, 7
  %v409 = vsub.s32 5, %v408
  %v410 = vrot.slane %v400, %v409
  %v411 = vlaneseq
  %v412 = vshrl.u32 %v411, 7
  %v413 = vsub.s32 5, %v412
  %v414 = vrot.slane %v401, %v413
  %v415 = vlaneseq
  %v416 = vshrl.u32 %v415, 7
  %v417 = vsub.s32 5, %v416
  %v418 = vrot.slane %v402, %v417
  %v419 = vlaneseq
  %v420 = vshrl.u32 %v419, 7
  %v421 = vsub.s32 5, %v420
  %v422 = vrot.slane %v403, %v421
  %v423 = vsel %vm406, %v410, %v364
  %v424 = vsel %vm406, %v414, %v365
  %v425 = vsel %vm406, %v418, %v366
  %v426 = vsel %vm406, %v422, %v367
  %v431 = vrot.slane %v400, 5
  %v432 = vrot.slane %v401, 4
  %v433 = vsel %vm145, %v432, %v431
  %v434 = vrot.slane %v402, 3
  %v435 = vsel %vm148, %v434, %v433
  %v436 = vrot.slane %v403, 2
  %v437 = vsel %vm151, %v436, %v435
  %v439 = vmul.f32 %v410, %v437
  %v440 = vmul.f32 %v414, %v437
  %v441 = vmul.f32 %v418, %v437
  %v442 = vmul.f32 %v422, %v437
  %v443 = vadd.f32 %v384, %v439
  %v444 = vadd.f32 %v385, %v440
  %v445 = vadd.f32 %v386, %v441
  %v446 = vadd.f32 %v387, %v442
  %v447 = vrot.slane %v400, 7
  %v448 = vrot.slane %v401, 7
  %v449 = vrot.slane %v402, 7
  %v450 = vrot.slane %v403, 7
  %v455 = vmul.f32 %v96, %v447
  %v456 = vmul.f32 %v98, %v448
  %v457 = vmul.f32 %v100, %v449
  %v458 = vmul.f32 %v102, %v450
  %v459 = vadd.f32 %v455, %v111
  %v460 = vadd.f32 %v456, %v112
  %v461 = vadd.f32 %v457, %v113
  %v462 = vadd.f32 %v458, %v114
  %vm463 = vcmp.eq.s32.totalorder %v116, 6
  %v464 = vsel %vm463, 1, 0
  %vm465 = vcmp.eq.s32.totalorder %v464, 1
  %v466 = vlaneseq
  %v467 = vshrl.u32 %v466, 7
  %v468 = vsub.s32 6, %v467
  %v469 = vrot.slane %v459, %v468
  %v470 = vlaneseq
  %v471 = vshrl.u32 %v470, 7
  %v472 = vsub.s32 6, %v471
  %v473 = vrot.slane %v460, %v472
  %v474 = vlaneseq
  %v475 = vshrl.u32 %v474, 7
  %v476 = vsub.s32 6, %v475
  %v477 = vrot.slane %v461, %v476
  %v478 = vlaneseq
  %v479 = vshrl.u32 %v478, 7
  %v480 = vsub.s32 6, %v479
  %v481 = vrot.slane %v462, %v480
  %v482 = vsel %vm465, %v469, %v423
  %v483 = vsel %vm465, %v473, %v424
  %v484 = vsel %vm465, %v477, %v425
  %v485 = vsel %vm465, %v481, %v426
  %v490 = vrot.slane %v459, 6
  %v491 = vrot.slane %v460, 5
  %v492 = vsel %vm145, %v491, %v490
  %v493 = vrot.slane %v461, 4
  %v494 = vsel %vm148, %v493, %v492
  %v495 = vrot.slane %v462, 3
  %v496 = vsel %vm151, %v495, %v494
  %v498 = vmul.f32 %v469, %v496
  %v499 = vmul.f32 %v473, %v496
  %v500 = vmul.f32 %v477, %v496
  %v501 = vmul.f32 %v481, %v496
  %v502 = vadd.f32 %v443, %v498
  %v503 = vadd.f32 %v444, %v499
  %v504 = vadd.f32 %v445, %v500
  %v505 = vadd.f32 %v446, %v501
  %v506 = vrot.slane %v459, 7
  %v507 = vrot.slane %v460, 7
  %v508 = vrot.slane %v461, 7
  %v509 = vrot.slane %v462, 7
  %v514 = vmul.f32 %v96, %v506
  %v515 = vmul.f32 %v98, %v507
  %v516 = vmul.f32 %v100, %v508
  %v517 = vmul.f32 %v102, %v509
  %v518 = vadd.f32 %v514, %v111
  %v519 = vadd.f32 %v515, %v112
  %v520 = vadd.f32 %v516, %v113
  %v521 = vadd.f32 %v517, %v114
  %vm522 = vcmp.eq.s32.totalorder %v116, 7
  %v523 = vsel %vm522, 1, 0
  %vm524 = vcmp.eq.s32.totalorder %v523, 1
  %v525 = vlaneseq
  %v526 = vshrl.u32 %v525, 7
  %v527 = vsub.s32 7, %v526
  %v528 = vrot.slane %v518, %v527
  %v529 = vlaneseq
  %v530 = vshrl.u32 %v529, 7
  %v531 = vsub.s32 7, %v530
  %v532 = vrot.slane %v519, %v531
  %v533 = vlaneseq
  %v534 = vshrl.u32 %v533, 7
  %v535 = vsub.s32 7, %v534
  %v536 = vrot.slane %v520, %v535
  %v537 = vlaneseq
  %v538 = vshrl.u32 %v537, 7
  %v539 = vsub.s32 7, %v538
  %v540 = vrot.slane %v521, %v539
  %v541 = vsel %vm524, %v528, %v482
  %v542 = vsel %vm524, %v532, %v483
  %v543 = vsel %vm524, %v536, %v484
  %v544 = vsel %vm524, %v540, %v485
  %v549 = vrot.slane %v518, 7
  %v550 = vrot.slane %v519, 6
  %v551 = vsel %vm145, %v550, %v549
  %v552 = vrot.slane %v520, 5
  %v553 = vsel %vm148, %v552, %v551
  %v554 = vrot.slane %v521, 4
  %v555 = vsel %vm151, %v554, %v553
  %v557 = vmul.f32 %v528, %v555
  %v558 = vmul.f32 %v532, %v555
  %v559 = vmul.f32 %v536, %v555
  %v560 = vmul.f32 %v540, %v555
  %v561 = vadd.f32 %v502, %v557
  %v562 = vadd.f32 %v503, %v558
  %v563 = vadd.f32 %v504, %v559
  %v564 = vadd.f32 %v505, %v560
  %v565 = vmax.f32 %v561, %v562
  %v566 = vmax.f32 %v565, %v563
  %v567 = vmax.f32 %v566, %v564
  %v568 = vsub.f32 %v561, %v567
  %v569 = vsub.f32 %v562, %v567
  %v570 = vsub.f32 %v563, %v567
  %v571 = vsub.f32 %v564, %v567
  %v572 = vmul.f32 %v568, 1.442695
  %v573 = vpow.pop %v572
  %v574 = vmul.f32 %v569, 1.442695
  %v575 = vpow.pop %v574
  %v576 = vmul.f32 %v570, 1.442695
  %v577 = vpow.pop %v576
  %v578 = vmul.f32 %v571, 1.442695
  %v579 = vpow.pop %v578
  %v580 = vadd.f32 %v573, %v575
  %v581 = vadd.f32 %v580, %v577
  %v582 = vadd.f32 %v581, %v579
  %v583 = vrcp.pop %v582
  %v584 = vmul.f32 %v583, 0.5
  %v585 = vmul.f32 %v573, %v584
  %v586 = vmul.f32 %v575, %v584
  %v587 = vmul.f32 %v577, %v584
  %v588 = vmul.f32 %v579, %v584
  %v589 = vlaneseq
  %v590 = vshrl.u32 %v589, 7
  %v591 = vsub.s32 0, %v590
  %v592 = vrot.slane %v585, %v591
  %v593 = vlaneseq
  %v594 = vshrl.u32 %v593, 7
  %v595 = vsub.s32 0, %v594
  %v596 = vrot.slane %v586, %v595
  %v597 = vlaneseq
  %v598 = vshrl.u32 %v597, 7
  %v599 = vsub.s32 0, %v598
  %v600 = vrot.slane %v587, %v599
  %v601 = vlaneseq
  %v602 = vshrl.u32 %v601, 7
  %v603 = vsub.s32 0, %v602
  %v604 = vrot.slane %v588, %v603
  %v605 = vmul.f32 %v592, %v541
  %v606 = vmul.f32 %v596, %v541
  %v607 = vmul.f32 %v600, %v541
  %v608 = vmul.f32 %v604, %v541
  %v609 = vlaneseq
  %v610 = vshrl.u32 %v609, 7
  %v611 = vsub.s32 1, %v610
  %v612 = vrot.slane %v585, %v611
  %v613 = vlaneseq
  %v614 = vshrl.u32 %v613, 7
  %v615 = vsub.s32 1, %v614
  %v616 = vrot.slane %v586, %v615
  %v617 = vlaneseq
  %v618 = vshrl.u32 %v617, 7
  %v619 = vsub.s32 1, %v618
  %v620 = vrot.slane %v587, %v619
  %v621 = vlaneseq
  %v622 = vshrl.u32 %v621, 7
  %v623 = vsub.s32 1, %v622
  %v624 = vrot.slane %v588, %v623
  %v625 = vmul.f32 %v612, %v542
  %v626 = vmul.f32 %v616, %v542
  %v627 = vmul.f32 %v620, %v542
  %v628 = vmul.f32 %v624, %v542
  %v629 = vadd.f32 %v605, %v625
  %v630 = vadd.f32 %v606, %v626
  %v631 = vadd.f32 %v607, %v627
  %v632 = vadd.f32 %v608, %v628
  %v633 = vlaneseq
  %v634 = vshrl.u32 %v633, 7
  %v635 = vsub.s32 2, %v634
  %v636 = vrot.slane %v585, %v635
  %v637 = vlaneseq
  %v638 = vshrl.u32 %v637, 7
  %v639 = vsub.s32 2, %v638
  %v640 = vrot.slane %v586, %v639
  %v641 = vlaneseq
  %v642 = vshrl.u32 %v641, 7
  %v643 = vsub.s32 2, %v642
  %v644 = vrot.slane %v587, %v643
  %v645 = vlaneseq
  %v646 = vshrl.u32 %v645, 7
  %v647 = vsub.s32 2, %v646
  %v648 = vrot.slane %v588, %v647
  %v649 = vmul.f32 %v636, %v543
  %v650 = vmul.f32 %v640, %v543
  %v651 = vmul.f32 %v644, %v543
  %v652 = vmul.f32 %v648, %v543
  %v653 = vadd.f32 %v629, %v649
  %v654 = vadd.f32 %v630, %v650
  %v655 = vadd.f32 %v631, %v651
  %v656 = vadd.f32 %v632, %v652
  %v657 = vlaneseq
  %v658 = vshrl.u32 %v657, 7
  %v659 = vsub.s32 3, %v658
  %v660 = vrot.slane %v585, %v659
  %v661 = vlaneseq
  %v662 = vshrl.u32 %v661, 7
  %v663 = vsub.s32 3, %v662
  %v664 = vrot.slane %v586, %v663
  %v665 = vlaneseq
  %v666 = vshrl.u32 %v665, 7
  %v667 = vsub.s32 3, %v666
  %v668 = vrot.slane %v587, %v667
  %v669 = vlaneseq
  %v670 = vshrl.u32 %v669, 7
  %v671 = vsub.s32 3, %v670
  %v672 = vrot.slane %v588, %v671
  %v673 = vmul.f32 %v660, %v544
  %v674 = vmul.f32 %v664, %v544
  %v675 = vmul.f32 %v668, %v544
  %v676 = vmul.f32 %v672, %v544
  %v677 = vadd.f32 %v653, %v673
  %v678 = vadd.f32 %v654, %v674
  %v679 = vadd.f32 %v655, %v675
  %v680 = vadd.f32 %v656, %v676
  %s681 = sld [smem:[#allocation2]]
  %v682 = vstv %s681
  %v683 = vmul.f32 %v682, %v677
  %v684 = vmul.f32 %v682, %v678
  %v685 = vmul.f32 %v682, %v679
  %v686 = vmul.f32 %v682, %v680
  %v687 = vadd.f32 %v683, %v541
  %v688 = vadd.f32 %v684, %v542
  %v689 = vadd.f32 %v685, %v543
  %v690 = vadd.f32 %v686, %v544
  %691 = vst [vmem:[%s3] sm:$0xff] %v687
  %692 = vst [vmem:[%s3 + $0x8] sm:$0xff] %v688
  %693 = vst [vmem:[%s3 + $0x10] sm:$0xff] %v689
  %694 = vst [vmem:[%s3 + $0x18] sm:$0xff] %v690
  // Predicated region
  $region14: #{run.3} parent=0 // pred_check
    _
  $region15: #{run.3} parent=0 // pred_check_branch
    %696 = sbr.rel (0) target = $region17
  $region16: #{run.3} parent=0 // pred_region
    _
  $region17: #{run.3} parent=0 // pred_fallthru
    _
  // Predicated region
  $region18: #{run.3} parent=0 // pred_check
    _
  $region19: #{run.3} parent=0 // pred_check_branch
    %698 = sbr.rel (0) target = $region21
  $region20: #{run.3} parent=0 // pred_region
    _
  $region21: #{run.3} parent=0 // pred_fallthru
    _

// kernel: run.4
$region0: #{run.4}
  #allocation0 [shape = 'u32[]', space=smem, size = 0x4, offset = 0x4, fixed_abs, tag = 'smem constant byte address 0x4 - core index']
  #allocation1 [shape = 'u32[144,128]{1,0:T(1,128)}', space=vmem, size = 0x12000, scoped, tag = 'internal scratch']
  #allocation2 [shape = 'f32[1]{0:T(128)S(6)}', space=smem, size = 0x200, scoped, tag = 'scoped memory for run.4']
  %s0 = inlined_call_operand.<no memory space> [shape: f32[1], index: 0, kind: input, shape index: {}]
  %s1 = inlined_call_operand.vmem [shape: f32[16,8,1], index: 1, kind: input, shape index: {}]
  %s2 = inlined_call_operand.vmem [shape: f32[16,8,128], index: 2, kind: input, shape index: {}]
  %s3 = inlined_call_operand.vmem [shape: f32[8,8,128], index: 3, kind: output, shape index: {}]
  %s4 = sld [smem:[#allocation0]]
  $region22: #{run.4} parent=0
    _
  %s6 = ssub.s32 1, %s4
  %s7 = scalar_select 0, %s6, %s4
  %8 = sst [smem:[#allocation2]] %s0
  // Predicated region
  $region2: #{run.4} parent=0 // pred_check
    _
  $region3: #{run.4} parent=0 // pred_check_branch
    %10 = sbr.rel (0) target = $region5
  $region4: #{run.4} parent=0 // pred_region
    _
  $region5: #{run.4} parent=0 // pred_fallthru
    _
  // Predicated region
  $region6: #{run.4} parent=0 // pred_check
    _
  $region7: #{run.4} parent=0 // pred_check_branch
    %12 = sbr.rel (0) target = $region9
  $region8: #{run.4} parent=0 // pred_region
    _
  $region9: #{run.4} parent=0 // pred_fallthru
    _
  // Predicated region
  $region10: #{run.4} parent=0 // pred_check
    _
  $region11: #{run.4} parent=0 // pred_check_branch
    %14 = sbr.rel (0) target = $region13
  $region12: #{run.4} parent=0 // pred_region
    _
  $region13: #{run.4} parent=0 // pred_fallthru
    _
  %v15 = vld [vmem:[%s2] sm:$0xff]
  %v16 = vld [vmem:[%s2 + $0x8] sm:$0xff]
  %v17 = vld [vmem:[%s2 + $0x10] sm:$0xff]
  %v18 = vld [vmem:[%s2 + $0x18] sm:$0xff]
  %v19 = vld [vmem:[%s2 + $0x20] sm:$0xff]
  %v20 = vld [vmem:[%s2 + $0x28] sm:$0xff]
  %v21 = vld [vmem:[%s2 + $0x30] sm:$0xff]
  %v22 = vld [vmem:[%s2 + $0x38] sm:$0xff]
  %v23 = vld [vmem:[%s2 + $0x40] sm:$0xff]
  %v24 = vld [vmem:[%s2 + $0x48] sm:$0xff]
  %v25 = vld [vmem:[%s2 + $0x50] sm:$0xff]
  %v26 = vld [vmem:[%s2 + $0x58] sm:$0xff]
  %v27 = vld [vmem:[%s2 + $0x60] sm:$0xff]
  %v28 = vld [vmem:[%s2 + $0x68] sm:$0xff]
  %v29 = vld [vmem:[%s2 + $0x70] sm:$0xff]
  %v30 = vld [vmem:[%s2 + $0x78] sm:$0xff]
  %v31 = vld [vmem:[%s1] sm:$0xff]
  %v32 = vld [vmem:[%s1 + $0x8] sm:$0xff]
  %v33 = vld [vmem:[%s1 + $0x10] sm:$0xff]
  %v34 = vld [vmem:[%s1 + $0x18] sm:$0xff]
  %v35 = vld [vmem:[%s1 + $0x20] sm:$0xff]
  %v36 = vld [vmem:[%s1 + $0x28] sm:$0xff]
  %v37 = vld [vmem:[%s1 + $0x30] sm:$0xff]
  %v38 = vld [vmem:[%s1 + $0x38] sm:$0xff]
  %v39 = vld [vmem:[%s1 + $0x40] sm:$0xff]
  %v40 = vld [vmem:[%s1 + $0x48] sm:$0xff]
  %v41 = vld [vmem:[%s1 + $0x50] sm:$0xff]
  %v42 = vld [vmem:[%s1 + $0x58] sm:$0xff]
  %v43 = vld [vmem:[%s1 + $0x60] sm:$0xff]
  %v44 = vld [vmem:[%s1 + $0x68] sm:$0xff]
  %v45 = vld [vmem:[%s1 + $0x70] sm:$0xff]
  %v46 = vld [vmem:[%s1 + $0x78] sm:$0xff]
  %48 = vset.pattern.permute.xlu0 0
  %49 = vperm.xlu0 %48, %v31
  %v50 = vpop.permute.xlu0 %49
  %53 = vset.pattern.permute.xlu0 0
  %54 = vperm.xlu0 %53, %v32
  %v55 = vpop.permute.xlu0 %54
  %58 = vset.pattern.permute.xlu0 0
  %59 = vperm.xlu0 %58, %v33
  %v60 = vpop.permute.xlu0 %59
  %63 = vset.pattern.permute.xlu0 0
  %64 = vperm.xlu0 %63, %v34
  %v65 = vpop.permute.xlu0 %64
  %68 = vset.pattern.permute.xlu0 0
  %69 = vperm.xlu0 %68, %v35
  %v70 = vpop.permute.xlu0 %69
  %73 = vset.pattern.permute.xlu0 0
  %74 = vperm.xlu0 %73, %v36
  %v75 = vpop.permute.xlu0 %74
  %78 = vset.pattern.permute.xlu0 0
  %79 = vperm.xlu0 %78, %v37
  %v80 = vpop.permute.xlu0 %79
  %83 = vset.pattern.permute.xlu0 0
  %84 = vperm.xlu0 %83, %v38
  %v85 = vpop.permute.xlu0 %84
  %88 = vset.pattern.permute.xlu0 0
  %89 = vperm.xlu0 %88, %v39
  %v90 = vpop.permute.xlu0 %89
  %93 = vset.pattern.permute.xlu0 0
  %94 = vperm.xlu0 %93, %v40
  %v95 = vpop.permute.xlu0 %94
  %98 = vset.pattern.permute.xlu0 0
  %99 = vperm.xlu0 %98, %v41
  %v100 = vpop.permute.xlu0 %99
  %103 = vset.pattern.permute.xlu0 0
  %104 = vperm.xlu0 %103, %v42
  %v105 = vpop.permute.xlu0 %104
  %108 = vset.pattern.permute.xlu0 0
  %109 = vperm.xlu0 %108, %v43
  %v110 = vpop.permute.xlu0 %109
  %113 = vset.pattern.permute.xlu0 0
  %114 = vperm.xlu0 %113, %v44
  %v115 = vpop.permute.xlu0 %114
  %118 = vset.pattern.permute.xlu0 0
  %119 = vperm.xlu0 %118, %v45
  %v120 = vpop.permute.xlu0 %119
  %123 = vset.pattern.permute.xlu0 0
  %124 = vperm.xlu0 %123, %v46
  %v125 = vpop.permute.xlu0 %124
  %v127 = vadd.f32 %v15, %v50
  %v128 = vadd.f32 %v16, %v55
  %v129 = vadd.f32 %v17, %v60
  %v130 = vadd.f32 %v18, %v65
  %v131 = vadd.f32 %v19, %v70
  %v132 = vadd.f32 %v20, %v75
  %v133 = vadd.f32 %v21, %v80
  %v134 = vadd.f32 %v22, %v85
  %v135 = vadd.f32 %v23, %v90
  %v136 = vadd.f32 %v24, %v95
  %v137 = vadd.f32 %v25, %v100
  %v138 = vadd.f32 %v26, %v105
  %v139 = vadd.f32 %v27, %v110
  %v140 = vadd.f32 %v28, %v115
  %v141 = vadd.f32 %v29, %v120
  %v142 = vadd.f32 %v30, %v125
  %v143 = vxor.u32 %v135, 2147483648
  %v144 = vxor.u32 %v136, 2147483648
  %v145 = vxor.u32 %v137, 2147483648
  %v146 = vxor.u32 %v138, 2147483648
  %v147 = vxor.u32 %v139, 2147483648
  %v148 = vxor.u32 %v140, 2147483648
  %v149 = vxor.u32 %v141, 2147483648
  %v150 = vxor.u32 %v142, 2147483648
  %v151 = vmul.f32 %v143, 1.442695
  %v152 = vpow.pop %v151
  %v153 = vmul.f32 %v144, 1.442695
  %v154 = vpow.pop %v153
  %v155 = vmul.f32 %v145, 1.442695
  %v156 = vpow.pop %v155
  %v157 = vmul.f32 %v146, 1.442695
  %v158 = vpow.pop %v157
  %v159 = vmul.f32 %v147, 1.442695
  %v160 = vpow.pop %v159
  %v161 = vmul.f32 %v148, 1.442695
  %v162 = vpow.pop %v161
  %v163 = vmul.f32 %v149, 1.442695
  %v164 = vpow.pop %v163
  %v165 = vmul.f32 %v150, 1.442695
  %v166 = vpow.pop %v165
  %v167 = vadd.f32 %v152, 1.0
  %v168 = vadd.f32 %v154, 1.0
  %v169 = vadd.f32 %v156, 1.0
  %v170 = vadd.f32 %v158, 1.0
  %v171 = vadd.f32 %v160, 1.0
  %v172 = vadd.f32 %v162, 1.0
  %v173 = vadd.f32 %v164, 1.0
  %v174 = vadd.f32 %v166, 1.0
  %v175 = vrcp.pop %v167
  %v176 = vmul.f32 1.0, %v175
  %v177 = vrcp.pop %v168
  %v178 = vmul.f32 1.0, %v177
  %v179 = vrcp.pop %v169
  %v180 = vmul.f32 1.0, %v179
  %v181 = vrcp.pop %v170
  %v182 = vmul.f32 1.0, %v181
  %v183 = vrcp.pop %v171
  %v184 = vmul.f32 1.0, %v183
  %v185 = vrcp.pop %v172
  %v186 = vmul.f32 1.0, %v185
  %v187 = vrcp.pop %v173
  %v188 = vmul.f32 1.0, %v187
  %v189 = vrcp.pop %v174
  %v190 = vmul.f32 1.0, %v189
  %v191 = vsub.f32 1.0, %v176
  %v192 = vsub.f32 1.0, %v178
  %v193 = vsub.f32 1.0, %v180
  %v194 = vsub.f32 1.0, %v182
  %v195 = vsub.f32 1.0, %v184
  %v196 = vsub.f32 1.0, %v186
  %v197 = vsub.f32 1.0, %v188
  %v198 = vsub.f32 1.0, %v190
  %v199 = vtanh.pop %v127
  %v200 = vtanh.pop %v128
  %v201 = vtanh.pop %v129
  %v202 = vtanh.pop %v130
  %v203 = vtanh.pop %v131
  %v204 = vtanh.pop %v132
  %v205 = vtanh.pop %v133
  %v206 = vtanh.pop %v134
  %v207 = vmul.f32 %v191, %v199
  %v208 = vmul.f32 %v192, %v200
  %v209 = vmul.f32 %v193, %v201
  %v210 = vmul.f32 %v194, %v202
  %v211 = vmul.f32 %v195, %v203
  %v212 = vmul.f32 %v196, %v204
  %v213 = vmul.f32 %v197, %v205
  %v214 = vmul.f32 %v198, %v206
  %v215 = vlaneseq
  %v216 = vshrl.u32 %v215, 7
  %vm217 = vcmp.eq.s32.totalorder %v216, 7
  %v218 = vsel %vm217, 1, 0
  %vm219 = vcmp.eq.s32.totalorder %v218, 1
  %v220 = vlaneseq
  %v221 = vshrl.u32 %v220, 7
  %v222 = vsub.s32 7, %v221
  %v223 = vrot.slane %v207, %v222
  %v224 = vlaneseq
  %v225 = vshrl.u32 %v224, 7
  %v226 = vsub.s32 7, %v225
  %v227 = vrot.slane %v208, %v226
  %v228 = vlaneseq
  %v229 = vshrl.u32 %v228, 7
  %v230 = vsub.s32 7, %v229
  %v231 = vrot.slane %v209, %v230
  %v232 = vlaneseq
  %v233 = vshrl.u32 %v232, 7
  %v234 = vsub.s32 7, %v233
  %v235 = vrot.slane %v210, %v234
  %v236 = vlaneseq
  %v237 = vshrl.u32 %v236, 7
  %v238 = vsub.s32 7, %v237
  %v239 = vrot.slane %v211, %v238
  %v240 = vlaneseq
  %v241 = vshrl.u32 %v240, 7
  %v242 = vsub.s32 7, %v241
  %v243 = vrot.slane %v212, %v242
  %v244 = vlaneseq
  %v245 = vshrl.u32 %v244, 7
  %v246 = vsub.s32 7, %v245
  %v247 = vrot.slane %v213, %v246
  %v248 = vlaneseq
  %v249 = vshrl.u32 %v248, 7
  %v250 = vsub.s32 7, %v249
  %v251 = vrot.slane %v214, %v250
  %v252 = vsel %vm219, %v223, 0.0
  %v253 = vsel %vm219, %v227, 0.0
  %v254 = vsel %vm219, %v231, 0.0
  %v255 = vsel %vm219, %v235, 0.0
  %v256 = vsel %vm219, %v239, 0.0
  %v257 = vsel %vm219, %v243, 0.0
  %v258 = vsel %vm219, %v247, 0.0
  %v259 = vsel %vm219, %v251, 0.0
  %v268 = vrot.slane %v207, 7
  %v269 = vrot.slane %v208, 6
  %vm270 = vcmask 1041409
  %v271 = vsel %vm270, %v269, %v268
  %v272 = vrot.slane %v209, 5
  %vm273 = vcmask 1042434
  %v274 = vsel %vm273, %v272, %v271
  %v275 = vrot.slane %v210, 4
  %vm276 = vcmask 1043459
  %v277 = vsel %vm276, %v275, %v274
  %v278 = vrot.slane %v211, 3
  %vm279 = vcmask 1044484
  %v280 = vsel %vm279, %v278, %v277
  %v281 = vrot.slane %v212, 2
  %vm282 = vcmask 1045509
  %v283 = vsel %vm282, %v281, %v280
  %v284 = vrot.slane %v213, 1
  %vm285 = vcmask 1046534
  %v286 = vsel %vm285, %v284, %v283
  %vm287 = vcmask 1047559
  %v288 = vsel %vm287, %v214, %v286
  %v290 = vmul.f32 %v223, %v288
  %v291 = vmul.f32 %v227, %v288
  %v292 = vmul.f32 %v231, %v288
  %v293 = vmul.f32 %v235, %v288
  %v294 = vmul.f32 %v239, %v288
  %v295 = vmul.f32 %v243, %v288
  %v296 = vmul.f32 %v247, %v288
  %v297 = vmul.f32 %v251, %v288
  %v298 = vrot.slane %v207, 1
  %v299 = vrot.slane %v208, 1
  %v300 = vrot.slane %v209, 1
  %v301 = vrot.slane %v210, 1
  %v302 = vrot.slane %v211, 1
  %v303 = vrot.slane %v212, 1
  %v304 = vrot.slane %v214, 1
  %v313 = vmul.f32 %v176, %v298
  %v314 = vmul.f32 %v178, %v299
  %v315 = vmul.f32 %v180, %v300
  %v316 = vmul.f32 %v182, %v301
  %v317 = vmul.f32 %v184, %v302
  %v318 = vmul.f32 %v186, %v303
  %v319 = vmul.f32 %v188, %v284
  %v320 = vmul.f32 %v190, %v304
  %v321 = vadd.f32 %v313, %v207
  %v322 = vadd.f32 %v314, %v208
  %v323 = vadd.f32 %v315, %v209
  %v324 = vadd.f32 %v316, %v210
  %v325 = vadd.f32 %v317, %v211
  %v326 = vadd.f32 %v318, %v212
  %v327 = vadd.f32 %v319, %v213
  %v328 = vadd.f32 %v320, %v214
  %vm329 = vcmp.eq.s32.totalorder %v216, 6
  %v330 = vsel %vm329, 1, 0
  %vm331 = vcmp.eq.s32.totalorder %v330, 1
  %v332 = vlaneseq
  %v333 = vshrl.u32 %v332, 7
  %v334 = vsub.s32 6, %v333
  %v335 = vrot.slane %v321, %v334
  %v336 = vlaneseq
  %v337 = vshrl.u32 %v336, 7
  %v338 = vsub.s32 6, %v337
  %v339 = vrot.slane %v322, %v338
  %v340 = vlaneseq
  %v341 = vshrl.u32 %v340, 7
  %v342 = vsub.s32 6, %v341
  %v343 = vrot.slane %v323, %v342
  %v344 = vlaneseq
  %v345 = vshrl.u32 %v344, 7
  %v346 = vsub.s32 6, %v345
  %v347 = vrot.slane %v324, %v346
  %v348 = vlaneseq
  %v349 = vshrl.u32 %v348, 7
  %v350 = vsub.s32 6, %v349
  %v351 = vrot.slane %v325, %v350
  %v352 = vlaneseq
  %v353 = vshrl.u32 %v352, 7
  %v354 = vsub.s32 6, %v353
  %v355 = vrot.slane %v326, %v354
  %v356 = vlaneseq
  %v357 = vshrl.u32 %v356, 7
  %v358 = vsub.s32 6, %v357
  %v359 = vrot.slane %v327, %v358
  %v360 = vlaneseq
  %v361 = vshrl.u32 %v360, 7
  %v362 = vsub.s32 6, %v361
  %v363 = vrot.slane %v328, %v362
  %v364 = vsel %vm331, %v335, %v252
  %v365 = vsel %vm331, %v339, %v253
  %v366 = vsel %vm331, %v343, %v254
  %v367 = vsel %vm331, %v347, %v255
  %v368 = vsel %vm331, %v351, %v256
  %v369 = vsel %vm331, %v355, %v257
  %v370 = vsel %vm331, %v359, %v258
  %v371 = vsel %vm331, %v363, %v259
  %v380 = vrot.slane %v321, 6
  %v381 = vrot.slane %v322, 5
  %v382 = vsel %vm270, %v381, %v380
  %v383 = vrot.slane %v323, 4
  %v384 = vsel %vm273, %v383, %v382
  %v385 = vrot.slane %v324, 3
  %v386 = vsel %vm276, %v385, %v384
  %v387 = vrot.slane %v325, 2
  %v388 = vsel %vm279, %v387, %v386
  %v389 = vrot.slane %v326, 1
  %v390 = vsel %vm282, %v389, %v388
  %v391 = vsel %vm285, %v327, %v390
  %v392 = vrot.slane %v328, 7
  %v393 = vsel %vm287, %v392, %v391
  %v395 = vmul.f32 %v335, %v393
  %v396 = vmul.f32 %v339, %v393
  %v397 = vmul.f32 %v343, %v393
  %v398 = vmul.f32 %v347, %v393
  %v399 = vmul.f32 %v351, %v393
  %v400 = vmul.f32 %v355, %v393
  %v401 = vmul.f32 %v359, %v393
  %v402 = vmul.f32 %v363, %v393
  %v403 = vadd.f32 %v290, %v395
  %v404 = vadd.f32 %v291, %v396
  %v405 = vadd.f32 %v292, %v397
  %v406 = vadd.f32 %v293, %v398
  %v407 = vadd.f32 %v294, %v399
  %v408 = vadd.f32 %v295, %v400
  %v409 = vadd.f32 %v296, %v401
  %v410 = vadd.f32 %v297, %v402
  %v411 = vrot.slane %v321, 1
  %v412 = vrot.slane %v322, 1
  %v413 = vrot.slane %v323, 1
  %v414 = vrot.slane %v324, 1
  %v415 = vrot.slane %v325, 1
  %v416 = vrot.slane %v327, 1
  %v417 = vrot.slane %v328, 1
  %v426 = vmul.f32 %v176, %v411
  %v427 = vmul.f32 %v178, %v412
  %v428 = vmul.f32 %v180, %v413
  %v429 = vmul.f32 %v182, %v414
  %v430 = vmul.f32 %v184, %v415
  %v431 = vmul.f32 %v186, %v389
  %v432 = vmul.f32 %v188, %v416
  %v433 = vmul.f32 %v190, %v417
  %v434 = vadd.f32 %v426, %v207
  %v435 = vadd.f32 %v427, %v208
  %v436 = vadd.f32 %v428, %v209
  %v437 = vadd.f32 %v429, %v210
  %v438 = vadd.f32 %v430, %v211
  %v439 = vadd.f32 %v431, %v212
  %v440 = vadd.f32 %v432, %v213
  %v441 = vadd.f32 %v433, %v214
  %vm442 = vcmp.eq.s32.totalorder %v216, 5
  %v443 = vsel %vm442, 1, 0
  %vm444 = vcmp.eq.s32.totalorder %v443, 1
  %v445 = vlaneseq
  %v446 = vshrl.u32 %v445, 7
  %v447 = vsub.s32 5, %v446
  %v448 = vrot.slane %v434, %v447
  %v449 = vlaneseq
  %v450 = vshrl.u32 %v449, 7
  %v451 = vsub.s32 5, %v450
  %v452 = vrot.slane %v435, %v451
  %v453 = vlaneseq
  %v454 = vshrl.u32 %v453, 7
  %v455 = vsub.s32 5, %v454
  %v456 = vrot.slane %v436, %v455
  %v457 = vlaneseq
  %v458 = vshrl.u32 %v457, 7
  %v459 = vsub.s32 5, %v458
  %v460 = vrot.slane %v437, %v459
  %v461 = vlaneseq
  %v462 = vshrl.u32 %v461, 7
  %v463 = vsub.s32 5, %v462
  %v464 = vrot.slane %v438, %v463
  %v465 = vlaneseq
  %v466 = vshrl.u32 %v465, 7
  %v467 = vsub.s32 5, %v466
  %v468 = vrot.slane %v439, %v467
  %v469 = vlaneseq
  %v470 = vshrl.u32 %v469, 7
  %v471 = vsub.s32 5, %v470
  %v472 = vrot.slane %v440, %v471
  %v473 = vlaneseq
  %v474 = vshrl.u32 %v473, 7
  %v475 = vsub.s32 5, %v474
  %v476 = vrot.slane %v441, %v475
  %v477 = vsel %vm444, %v448, %v364
  %v478 = vsel %vm444, %v452, %v365
  %v479 = vsel %vm444, %v456, %v366
  %v480 = vsel %vm444, %v460, %v367
  %v481 = vsel %vm444, %v464, %v368
  %v482 = vsel %vm444, %v468, %v369
  %v483 = vsel %vm444, %v472, %v370
  %v484 = vsel %vm444, %v476, %v371
  %v493 = vrot.slane %v434, 5
  %v494 = vrot.slane %v435, 4
  %v495 = vsel %vm270, %v494, %v493
  %v496 = vrot.slane %v436, 3
  %v497 = vsel %vm273, %v496, %v495
  %v498 = vrot.slane %v437, 2
  %v499 = vsel %vm276, %v498, %v497
  %v500 = vrot.slane %v438, 1
  %v501 = vsel %vm279, %v500, %v499
  %v502 = vsel %vm282, %v439, %v501
  %v503 = vrot.slane %v440, 7
  %v504 = vsel %vm285, %v503, %v502
  %v505 = vrot.slane %v441, 6
  %v506 = vsel %vm287, %v505, %v504
  %v508 = vmul.f32 %v448, %v506
  %v509 = vmul.f32 %v452, %v506
  %v510 = vmul.f32 %v456, %v506
  %v511 = vmul.f32 %v460, %v506
  %v512 = vmul.f32 %v464, %v506
  %v513 = vmul.f32 %v468, %v506
  %v514 = vmul.f32 %v472, %v506
  %v515 = vmul.f32 %v476, %v506
  %v516 = vadd.f32 %v403, %v508
  %v517 = vadd.f32 %v404, %v509
  %v518 = vadd.f32 %v405, %v510
  %v519 = vadd.f32 %v406, %v511
  %v520 = vadd.f32 %v407, %v512
  %v521 = vadd.f32 %v408, %v513
  %v522 = vadd.f32 %v409, %v514
  %v523 = vadd.f32 %v410, %v515
  %v524 = vrot.slane %v434, 1
  %v525 = vrot.slane %v435, 1
  %v526 = vrot.slane %v436, 1
  %v527 = vrot.slane %v437, 1
  %v528 = vrot.slane %v439, 1
  %v529 = vrot.slane %v440, 1
  %v530 = vrot.slane %v441, 1
  %v539 = vmul.f32 %v176, %v524
  %v540 = vmul.f32 %v178, %v525
  %v541 = vmul.f32 %v180, %v526
  %v542 = vmul.f32 %v182, %v527
  %v543 = vmul.f32 %v184, %v500
  %v544 = vmul.f32 %v186, %v528
  %v545 = vmul.f32 %v188, %v529
  %v546 = vmul.f32 %v190, %v530
  %v547 = vadd.f32 %v539, %v207
  %v548 = vadd.f32 %v540, %v208
  %v549 = vadd.f32 %v541, %v209
  %v550 = vadd.f32 %v542, %v210
  %v551 = vadd.f32 %v543, %v211
  %v552 = vadd.f32 %v544, %v212
  %v553 = vadd.f32 %v545, %v213
  %v554 = vadd.f32 %v546, %v214
  %vm555 = vcmp.eq.s32.totalorder %v216, 4
  %v556 = vsel %vm555, 1, 0
  %vm557 = vcmp.eq.s32.totalorder %v556, 1
  %v558 = vlaneseq
  %v559 = vshrl.u32 %v558, 7
  %v560 = vsub.s32 4, %v559
  %v561 = vrot.slane %v547, %v560
  %v562 = vlaneseq
  %v563 = vshrl.u32 %v562, 7
  %v564 = vsub.s32 4, %v563
  %v565 = vrot.slane %v548, %v564
  %v566 = vlaneseq
  %v567 = vshrl.u32 %v566, 7
  %v568 = vsub.s32 4, %v567
  %v569 = vrot.slane %v549, %v568
  %v570 = vlaneseq
  %v571 = vshrl.u32 %v570, 7
  %v572 = vsub.s32 4, %v571
  %v573 = vrot.slane %v550, %v572
  %v574 = vlaneseq
  %v575 = vshrl.u32 %v574, 7
  %v576 = vsub.s32 4, %v575
  %v577 = vrot.slane %v551, %v576
  %v578 = vlaneseq
  %v579 = vshrl.u32 %v578, 7
  %v580 = vsub.s32 4, %v579
  %v581 = vrot.slane %v552, %v580
  %v582 = vlaneseq
  %v583 = vshrl.u32 %v582, 7
  %v584 = vsub.s32 4, %v583
  %v585 = vrot.slane %v553, %v584
  %v586 = vlaneseq
  %v587 = vshrl.u32 %v586, 7
  %v588 = vsub.s32 4, %v587
  %v589 = vrot.slane %v554, %v588
  %v590 = vsel %vm557, %v561, %v477
  %v591 = vsel %vm557, %v565, %v478
  %v592 = vsel %vm557, %v569, %v479
  %v593 = vsel %vm557, %v573, %v480
  %v594 = vsel %vm557, %v577, %v481
  %v595 = vsel %vm557, %v581, %v482
  %v596 = vsel %vm557, %v585, %v483
  %v597 = vsel %vm557, %v589, %v484
  %v606 = vrot.slane %v547, 4
  %v607 = vrot.slane %v548, 3
  %v608 = vsel %vm270, %v607, %v606
  %v609 = vrot.slane %v549, 2
  %v610 = vsel %vm273, %v609, %v608
  %v611 = vrot.slane %v550, 1
  %v612 = vsel %vm276, %v611, %v610
  %v613 = vsel %vm279, %v551, %v612
  %v614 = vrot.slane %v552, 7
  %v615 = vsel %vm282, %v614, %v613
  %v616 = vrot.slane %v553, 6
  %v617 = vsel %vm285, %v616, %v615
  %v618 = vrot.slane %v554, 5
  %v619 = vsel %vm287, %v618, %v617
  %v621 = vmul.f32 %v561, %v619
  %v622 = vmul.f32 %v565, %v619
  %v623 = vmul.f32 %v569, %v619
  %v624 = vmul.f32 %v573, %v619
  %v625 = vmul.f32 %v577, %v619
  %v626 = vmul.f32 %v581, %v619
  %v627 = vmul.f32 %v585, %v619
  %v628 = vmul.f32 %v589, %v619
  %v629 = vadd.f32 %v516, %v621
  %v630 = vadd.f32 %v517, %v622
  %v631 = vadd.f32 %v518, %v623
  %v632 = vadd.f32 %v519, %v624
  %v633 = vadd.f32 %v520, %v625
  %v634 = vadd.f32 %v521, %v626
  %v635 = vadd.f32 %v522, %v627
  %v636 = vadd.f32 %v523, %v628
  %v637 = vrot.slane %v547, 1
  %v638 = vrot.slane %v548, 1
  %v639 = vrot.slane %v549, 1
  %v640 = vrot.slane %v551, 1
  %v641 = vrot.slane %v552, 1
  %v642 = vrot.slane %v553, 1
  %v643 = vrot.slane %v554, 1
  %v652 = vmul.f32 %v176, %v637
  %v653 = vmul.f32 %v178, %v638
  %v654 = vmul.f32 %v180, %v639
  %v655 = vmul.f32 %v182, %v611
  %v656 = vmul.f32 %v184, %v640
  %v657 = vmul.f32 %v186, %v641
  %v658 = vmul.f32 %v188, %v642
  %v659 = vmul.f32 %v190, %v643
  %v660 = vadd.f32 %v652, %v207
  %v661 = vadd.f32 %v653, %v208
  %v662 = vadd.f32 %v654, %v209
  %v663 = vadd.f32 %v655, %v210
  %v664 = vadd.f32 %v656, %v211
  %v665 = vadd.f32 %v657, %v212
  %v666 = vadd.f32 %v658, %v213
  %v667 = vadd.f32 %v659, %v214
  %vm668 = vcmp.eq.s32.totalorder %v216, 3
  %v669 = vsel %vm668, 1, 0
  %vm670 = vcmp.eq.s32.totalorder %v669, 1
  %v671 = vlaneseq
  %v672 = vshrl.u32 %v671, 7
  %v673 = vsub.s32 3, %v672
  %v674 = vrot.slane %v660, %v673
  %v675 = vlaneseq
  %v676 = vshrl.u32 %v675, 7
  %v677 = vsub.s32 3, %v676
  %v678 = vrot.slane %v661, %v677
  %v679 = vlaneseq
  %v680 = vshrl.u32 %v679, 7
  %v681 = vsub.s32 3, %v680
  %v682 = vrot.slane %v662, %v681
  %v683 = vlaneseq
  %v684 = vshrl.u32 %v683, 7
  %v685 = vsub.s32 3, %v684
  %v686 = vrot.slane %v663, %v685
  %v687 = vlaneseq
  %v688 = vshrl.u32 %v687, 7
  %v689 = vsub.s32 3, %v688
  %v690 = vrot.slane %v664, %v689
  %v691 = vlaneseq
  %v692 = vshrl.u32 %v691, 7
  %v693 = vsub.s32 3, %v692
  %v694 = vrot.slane %v665, %v693
  %v695 = vlaneseq
  %v696 = vshrl.u32 %v695, 7
  %v697 = vsub.s32 3, %v696
  %v698 = vrot.slane %v666, %v697
  %v699 = vlaneseq
  %v700 = vshrl.u32 %v699, 7
  %v701 = vsub.s32 3, %v700
  %v702 = vrot.slane %v667, %v701
  %v703 = vsel %vm670, %v674, %v590
  %v704 = vsel %vm670, %v678, %v591
  %v705 = vsel %vm670, %v682, %v592
  %v706 = vsel %vm670, %v686, %v593
  %v707 = vsel %vm670, %v690, %v594
  %v708 = vsel %vm670, %v694, %v595
  %v709 = vsel %vm670, %v698, %v596
  %v710 = vsel %vm670, %v702, %v597
  %v719 = vrot.slane %v660, 3
  %v720 = vrot.slane %v661, 2
  %v721 = vsel %vm270, %v720, %v719
  %v722 = vrot.slane %v662, 1
  %v723 = vsel %vm273, %v722, %v721
  %v724 = vsel %vm276, %v663, %v723
  %v725 = vrot.slane %v664, 7
  %v726 = vsel %vm279, %v725, %v724
  %v727 = vrot.slane %v665, 6
  %v728 = vsel %vm282, %v727, %v726
  %v729 = vrot.slane %v666, 5
  %v730 = vsel %vm285, %v729, %v728
  %v731 = vrot.slane %v667, 4
  %v732 = vsel %vm287, %v731, %v730
  %v734 = vmul.f32 %v674, %v732
  %v735 = vmul.f32 %v678, %v732
  %v736 = vmul.f32 %v682, %v732
  %v737 = vmul.f32 %v686, %v732
  %v738 = vmul.f32 %v690, %v732
  %v739 = vmul.f32 %v694, %v732
  %v740 = vmul.f32 %v698, %v732
  %v741 = vmul.f32 %v702, %v732
  %v742 = vadd.f32 %v629, %v734
  %v743 = vadd.f32 %v630, %v735
  %v744 = vadd.f32 %v631, %v736
  %v745 = vadd.f32 %v632, %v737
  %v746 = vadd.f32 %v633, %v738
  %v747 = vadd.f32 %v634, %v739
  %v748 = vadd.f32 %v635, %v740
  %v749 = vadd.f32 %v636, %v741
  %v750 = vrot.slane %v660, 1
  %v751 = vrot.slane %v661, 1
  %v752 = vrot.slane %v663, 1
  %v753 = vrot.slane %v664, 1
  %v754 = vrot.slane %v665, 1
  %v755 = vrot.slane %v666, 1
  %v756 = vrot.slane %v667, 1
  %v765 = vmul.f32 %v176, %v750
  %v766 = vmul.f32 %v178, %v751
  %v767 = vmul.f32 %v180, %v722
  %v768 = vmul.f32 %v182, %v752
  %v769 = vmul.f32 %v184, %v753
  %v770 = vmul.f32 %v186, %v754
  %v771 = vmul.f32 %v188, %v755
  %v772 = vmul.f32 %v190, %v756
  %v773 = vadd.f32 %v765, %v207
  %v774 = vadd.f32 %v766, %v208
  %v775 = vadd.f32 %v767, %v209
  %v776 = vadd.f32 %v768, %v210
  %v777 = vadd.f32 %v769, %v211
  %v778 = vadd.f32 %v770, %v212
  %v779 = vadd.f32 %v771, %v213
  %v780 = vadd.f32 %v772, %v214
  %vm781 = vcmp.eq.s32.totalorder %v216, 2
  %v782 = vsel %vm781, 1, 0
  %vm783 = vcmp.eq.s32.totalorder %v782, 1
  %v784 = vlaneseq
  %v785 = vshrl.u32 %v784, 7
  %v786 = vsub.s32 2, %v785
  %v787 = vrot.slane %v773, %v786
  %v788 = vlaneseq
  %v789 = vshrl.u32 %v788, 7
  %v790 = vsub.s32 2, %v789
  %v791 = vrot.slane %v774, %v790
  %v792 = vlaneseq
  %v793 = vshrl.u32 %v792, 7
  %v794 = vsub.s32 2, %v793
  %v795 = vrot.slane %v775, %v794
  %v796 = vlaneseq
  %v797 = vshrl.u32 %v796, 7
  %v798 = vsub.s32 2, %v797
  %v799 = vrot.slane %v776, %v798
  %v800 = vlaneseq
  %v801 = vshrl.u32 %v800, 7
  %v802 = vsub.s32 2, %v801
  %v803 = vrot.slane %v777, %v802
  %v804 = vlaneseq
  %v805 = vshrl.u32 %v804, 7
  %v806 = vsub.s32 2, %v805
  %v807 = vrot.slane %v778, %v806
  %v808 = vlaneseq
  %v809 = vshrl.u32 %v808, 7
  %v810 = vsub.s32 2, %v809
  %v811 = vrot.slane %v779, %v810
  %v812 = vlaneseq
  %v813 = vshrl.u32 %v812, 7
  %v814 = vsub.s32 2, %v813
  %v815 = vrot.slane %v780, %v814
  %v816 = vsel %vm783, %v787, %v703
  %v817 = vsel %vm783, %v791, %v704
  %v818 = vsel %vm783, %v795, %v705
  %v819 = vsel %vm783, %v799, %v706
  %v820 = vsel %vm783, %v803, %v707
  %v821 = vsel %vm783, %v807, %v708
  %v822 = vsel %vm783, %v811, %v709
  %v823 = vsel %vm783, %v815, %v710
  %v832 = vrot.slane %v773, 2
  %v833 = vrot.slane %v774, 1
  %v834 = vsel %vm270, %v833, %v832
  %v835 = vsel %vm273, %v775, %v834
  %v836 = vrot.slane %v776, 7
  %v837 = vsel %vm276, %v836, %v835
  %v838 = vrot.slane %v777, 6
  %v839 = vsel %vm279, %v838, %v837
  %v840 = vrot.slane %v778, 5
  %v841 = vsel %vm282, %v840, %v839
  %v842 = vrot.slane %v779, 4
  %v843 = vsel %vm285, %v842, %v841
  %v844 = vrot.slane %v780, 3
  %v845 = vsel %vm287, %v844, %v843
  %v847 = vmul.f32 %v787, %v845
  %v848 = vmul.f32 %v791, %v845
  %v849 = vmul.f32 %v795, %v845
  %v850 = vmul.f32 %v799, %v845
  %v851 = vmul.f32 %v803, %v845
  %v852 = vmul.f32 %v807, %v845
  %v853 = vmul.f32 %v811, %v845
  %v854 = vmul.f32 %v815, %v845
  %v855 = vadd.f32 %v742, %v847
  %v856 = vadd.f32 %v743, %v848
  %v857 = vadd.f32 %v744, %v849
  %v858 = vadd.f32 %v745, %v850
  %v859 = vadd.f32 %v746, %v851
  %v860 = vadd.f32 %v747, %v852
  %v861 = vadd.f32 %v748, %v853
  %v862 = vadd.f32 %v749, %v854
  %v863 = vrot.slane %v773, 1
  %v864 = vrot.slane %v775, 1
  %v865 = vrot.slane %v776, 1
  %v866 = vrot.slane %v777, 1
  %v867 = vrot.slane %v778, 1
  %v868 = vrot.slane %v779, 1
  %v869 = vrot.slane %v780, 1
  %v878 = vmul.f32 %v176, %v863
  %v879 = vmul.f32 %v178, %v833
  %v880 = vmul.f32 %v180, %v864
  %v881 = vmul.f32 %v182, %v865
  %v882 = vmul.f32 %v184, %v866
  %v883 = vmul.f32 %v186, %v867
  %v884 = vmul.f32 %v188, %v868
  %v885 = vmul.f32 %v190, %v869
  %v886 = vadd.f32 %v878, %v207
  %v887 = vadd.f32 %v879, %v208
  %v888 = vadd.f32 %v880, %v209
  %v889 = vadd.f32 %v881, %v210
  %v890 = vadd.f32 %v882, %v211
  %v891 = vadd.f32 %v883, %v212
  %v892 = vadd.f32 %v884, %v213
  %v893 = vadd.f32 %v885, %v214
  %vm894 = vcmp.eq.s32.totalorder %v216, 1
  %v895 = vsel %vm894, 1, 0
  %vm896 = vcmp.eq.s32.totalorder %v895, 1
  %v897 = vlaneseq
  %v898 = vshrl.u32 %v897, 7
  %v899 = vsub.s32 1, %v898
  %v900 = vrot.slane %v886, %v899
  %v901 = vlaneseq
  %v902 = vshrl.u32 %v901, 7
  %v903 = vsub.s32 1, %v902
  %v904 = vrot.slane %v887, %v903
  %v905 = vlaneseq
  %v906 = vshrl.u32 %v905, 7
  %v907 = vsub.s32 1, %v906
  %v908 = vrot.slane %v888, %v907
  %v909 = vlaneseq
  %v910 = vshrl.u32 %v909, 7
  %v911 = vsub.s32 1, %v910
  %v912 = vrot.slane %v889, %v911
  %v913 = vlaneseq
  %v914 = vshrl.u32 %v913, 7
  %v915 = vsub.s32 1, %v914
  %v916 = vrot.slane %v890, %v915
  %v917 = vlaneseq
  %v918 = vshrl.u32 %v917, 7
  %v919 = vsub.s32 1, %v918
  %v920 = vrot.slane %v891, %v919
  %v921 = vlaneseq
  %v922 = vshrl.u32 %v921, 7
  %v923 = vsub.s32 1, %v922
  %v924 = vrot.slane %v892, %v923
  %v925 = vlaneseq
  %v926 = vshrl.u32 %v925, 7
  %v927 = vsub.s32 1, %v926
  %v928 = vrot.slane %v893, %v927
  %v929 = vsel %vm896, %v900, %v816
  %v930 = vsel %vm896, %v904, %v817
  %v931 = vsel %vm896, %v908, %v818
  %v932 = vsel %vm896, %v912, %v819
  %v933 = vsel %vm896, %v916, %v820
  %v934 = vsel %vm896, %v920, %v821
  %v935 = vsel %vm896, %v924, %v822
  %v936 = vsel %vm896, %v928, %v823
  %v945 = vrot.slane %v886, 1
  %v946 = vsel %vm270, %v887, %v945
  %v947 = vrot.slane %v888, 7
  %v948 = vsel %vm273, %v947, %v946
  %v949 = vrot.slane %v889, 6
  %v950 = vsel %vm276, %v949, %v948
  %v951 = vrot.slane %v890, 5
  %v952 = vsel %vm279, %v951, %v950
  %v953 = vrot.slane %v891, 4
  %v954 = vsel %vm282, %v953, %v952
  %v955 = vrot.slane %v892, 3
  %v956 = vsel %vm285, %v955, %v954
  %v957 = vrot.slane %v893, 2
  %v958 = vsel %vm287, %v957, %v956
  %v960 = vmul.f32 %v900, %v958
  %v961 = vmul.f32 %v904, %v958
  %v962 = vmul.f32 %v908, %v958
  %v963 = vmul.f32 %v912, %v958
  %v964 = vmul.f32 %v916, %v958
  %v965 = vmul.f32 %v920, %v958
  %v966 = vmul.f32 %v924, %v958
  %v967 = vmul.f32 %v928, %v958
  %v968 = vadd.f32 %v855, %v960
  %v969 = vadd.f32 %v856, %v961
  %v970 = vadd.f32 %v857, %v962
  %v971 = vadd.f32 %v858, %v963
  %v972 = vadd.f32 %v859, %v964
  %v973 = vadd.f32 %v860, %v965
  %v974 = vadd.f32 %v861, %v966
  %v975 = vadd.f32 %v862, %v967
  %v976 = vrot.slane %v887, 1
  %v977 = vrot.slane %v888, 1
  %v978 = vrot.slane %v889, 1
  %v979 = vrot.slane %v890, 1
  %v980 = vrot.slane %v891, 1
  %v981 = vrot.slane %v892, 1
  %v982 = vrot.slane %v893, 1
  %v991 = vmul.f32 %v176, %v945
  %v992 = vmul.f32 %v178, %v976
  %v993 = vmul.f32 %v180, %v977
  %v994 = vmul.f32 %v182, %v978
  %v995 = vmul.f32 %v184, %v979
  %v996 = vmul.f32 %v186, %v980
  %v997 = vmul.f32 %v188, %v981
  %v998 = vmul.f32 %v190, %v982
  %v999 = vadd.f32 %v991, %v207
  %v1000 = vadd.f32 %v992, %v208
  %v1001 = vadd.f32 %v993, %v209
  %v1002 = vadd.f32 %v994, %v210
  %v1003 = vadd.f32 %v995, %v211
  %v1004 = vadd.f32 %v996, %v212
  %v1005 = vadd.f32 %v997, %v213
  %v1006 = vadd.f32 %v998, %v214
  %vm1007 = vcmp.eq.s32.totalorder %v216, 0
  %v1008 = vsel %vm1007, 1, 0
  %vm1009 = vcmp.eq.s32.totalorder %v1008, 1
  %v1010 = vlaneseq
  %v1011 = vshrl.u32 %v1010, 7
  %v1012 = vsub.s32 0, %v1011
  %v1013 = vrot.slane %v999, %v1012
  %v1014 = vlaneseq
  %v1015 = vshrl.u32 %v1014, 7
  %v1016 = vsub.s32 0, %v1015
  %v1017 = vrot.slane %v1000, %v1016
  %v1018 = vlaneseq
  %v1019 = vshrl.u32 %v1018, 7
  %v1020 = vsub.s32 0, %v1019
  %v1021 = vrot.slane %v1001, %v1020
  %v1022 = vlaneseq
  %v1023 = vshrl.u32 %v1022, 7
  %v1024 = vsub.s32 0, %v1023
  %v1025 = vrot.slane %v1002, %v1024
  %v1026 = vlaneseq
  %v1027 = vshrl.u32 %v1026, 7
  %v1028 = vsub.s32 0, %v1027
  %v1029 = vrot.slane %v1003, %v1028
  %v1030 = vlaneseq
  %v1031 = vshrl.u32 %v1030, 7
  %v1032 = vsub.s32 0, %v1031
  %v1033 = vrot.slane %v1004, %v1032
  %v1034 = vlaneseq
  %v1035 = vshrl.u32 %v1034, 7
  %v1036 = vsub.s32 0, %v1035
  %v1037 = vrot.slane %v1005, %v1036
  %v1038 = vlaneseq
  %v1039 = vshrl.u32 %v1038, 7
  %v1040 = vsub.s32 0, %v1039
  %v1041 = vrot.slane %v1006, %v1040
  %v1042 = vsel %vm1009, %v1013, %v929
  %v1043 = vsel %vm1009, %v1017, %v930
  %v1044 = vsel %vm1009, %v1021, %v931
  %v1045 = vsel %vm1009, %v1025, %v932
  %v1046 = vsel %vm1009, %v1029, %v933
  %v1047 = vsel %vm1009, %v1033, %v934
  %v1048 = vsel %vm1009, %v1037, %v935
  %v1049 = vsel %vm1009, %v1041, %v936
  %v1058 = vrot.slane %v1000, 7
  %v1059 = vsel %vm270, %v1058, %v999
  %v1060 = vrot.slane %v1001, 6
  %v1061 = vsel %vm273, %v1060, %v1059
  %v1062 = vrot.slane %v1002, 5
  %v1063 = vsel %vm276, %v1062, %v1061
  %v1064 = vrot.slane %v1003, 4
  %v1065 = vsel %vm279, %v1064, %v1063
  %v1066 = vrot.slane %v1004, 3
  %v1067 = vsel %vm282, %v1066, %v1065
  %v1068 = vrot.slane %v1005, 2
  %v1069 = vsel %vm285, %v1068, %v1067
  %v1070 = vrot.slane %v1006, 1
  %v1071 = vsel %vm287, %v1070, %v1069
  %v1073 = vmul.f32 %v1013, %v1071
  %v1074 = vmul.f32 %v1017, %v1071
  %v1075 = vmul.f32 %v1021, %v1071
  %v1076 = vmul.f32 %v1025, %v1071
  %v1077 = vmul.f32 %v1029, %v1071
  %v1078 = vmul.f32 %v1033, %v1071
  %v1079 = vmul.f32 %v1037, %v1071
  %v1080 = vmul.f32 %v1041, %v1071
  %v1081 = vadd.f32 %v968, %v1073
  %v1082 = vadd.f32 %v969, %v1074
  %v1083 = vadd.f32 %v970, %v1075
  %v1084 = vadd.f32 %v971, %v1076
  %v1085 = vadd.f32 %v972, %v1077
  %v1086 = vadd.f32 %v973, %v1078
  %v1087 = vadd.f32 %v974, %v1079
  %v1088 = vadd.f32 %v975, %v1080
  %v1089 = vmax.f32 %v1081, %v1082
  %v1090 = vmax.f32 %v1089, %v1083
  %v1091 = vmax.f32 %v1090, %v1084
  %v1092 = vmax.f32 %v1091, %v1085
  %v1093 = vmax.f32 %v1092, %v1086
  %v1094 = vmax.f32 %v1093, %v1087
  %v1095 = vmax.f32 %v1094, %v1088
  %v1096 = vsub.f32 %v1081, %v1095
  %v1097 = vsub.f32 %v1082, %v1095
  %v1098 = vsub.f32 %v1083, %v1095
  %v1099 = vsub.f32 %v1084, %v1095
  %v1100 = vsub.f32 %v1085, %v1095
  %v1101 = vsub.f32 %v1086, %v1095
  %v1102 = vsub.f32 %v1087, %v1095
  %v1103 = vsub.f32 %v1088, %v1095
  %v1104 = vmul.f32 %v1096, 1.442695
  %v1105 = vpow.pop %v1104
  %v1106 = vmul.f32 %v1097, 1.442695
  %v1107 = vpow.pop %v1106
  %v1108 = vmul.f32 %v1098, 1.442695
  %v1109 = vpow.pop %v1108
  %v1110 = vmul.f32 %v1099, 1.442695
  %v1111 = vpow.pop %v1110
  %v1112 = vmul.f32 %v1100, 1.442695
  %v1113 = vpow.pop %v1112
  %v1114 = vmul.f32 %v1101, 1.442695
  %v1115 = vpow.pop %v1114
  %v1116 = vmul.f32 %v1102, 1.442695
  %v1117 = vpow.pop %v1116
  %v1118 = vmul.f32 %v1103, 1.442695
  %v1119 = vpow.pop %v1118
  %v1120 = vadd.f32 %v1105, %v1107
  %v1121 = vadd.f32 %v1120, %v1109
  %v1122 = vadd.f32 %v1121, %v1111
  %v1123 = vadd.f32 %v1122, %v1113
  %v1124 = vadd.f32 %v1123, %v1115
  %v1125 = vadd.f32 %v1124, %v1117
  %v1126 = vadd.f32 %v1125, %v1119
  %v1127 = vrcp.pop %v1126
  %v1128 = vmul.f32 %v1127, 0.35355338
  %v1129 = vmul.f32 %v1105, %v1128
  %v1130 = vmul.f32 %v1107, %v1128
  %v1131 = vmul.f32 %v1109, %v1128
  %v1132 = vmul.f32 %v1111, %v1128
  %v1133 = vmul.f32 %v1113, %v1128
  %v1134 = vmul.f32 %v1115, %v1128
  %v1135 = vmul.f32 %v1117, %v1128
  %v1136 = vmul.f32 %v1119, %v1128
  %v1137 = vlaneseq
  %v1138 = vshrl.u32 %v1137, 7
  %v1139 = vsub.s32 0, %v1138
  %v1140 = vrot.slane %v1129, %v1139
  %v1141 = vlaneseq
  %v1142 = vshrl.u32 %v1141, 7
  %v1143 = vsub.s32 0, %v1142
  %v1144 = vrot.slane %v1130, %v1143
  %v1145 = vlaneseq
  %v1146 = vshrl.u32 %v1145, 7
  %v1147 = vsub.s32 0, %v1146
  %v1148 = vrot.slane %v1131, %v1147
  %v1149 = vlaneseq
  %v1150 = vshrl.u32 %v1149, 7
  %v1151 = vsub.s32 0, %v1150
  %v1152 = vrot.slane %v1132, %v1151
  %v1153 = vlaneseq
  %v1154 = vshrl.u32 %v1153, 7
  %v1155 = vsub.s32 0, %v1154
  %v1156 = vrot.slane %v1133, %v1155
  %v1157 = vlaneseq
  %v1158 = vshrl.u32 %v1157, 7
  %v1159 = vsub.s32 0, %v1158
  %v1160 = vrot.slane %v1134, %v1159
  %v1161 = vlaneseq
  %v1162 = vshrl.u32 %v1161, 7
  %v1163 = vsub.s32 0, %v1162
  %v1164 = vrot.slane %v1135, %v1163
  %v1165 = vlaneseq
  %v1166 = vshrl.u32 %v1165, 7
  %v1167 = vsub.s32 0, %v1166
  %v1168 = vrot.slane %v1136, %v1167
  %v1169 = vmul.f32 %v1140, %v1042
  %v1170 = vmul.f32 %v1144, %v1042
  %v1171 = vmul.f32 %v1148, %v1042
  %v1172 = vmul.f32 %v1152, %v1042
  %v1173 = vmul.f32 %v1156, %v1042
  %v1174 = vmul.f32 %v1160, %v1042
  %v1175 = vmul.f32 %v1164, %v1042
  %v1176 = vmul.f32 %v1168, %v1042
  %v1177 = vlaneseq
  %v1178 = vshrl.u32 %v1177, 7
  %v1179 = vsub.s32 1, %v1178
  %v1180 = vrot.slane %v1129, %v1179
  %v1181 = vlaneseq
  %v1182 = vshrl.u32 %v1181, 7
  %v1183 = vsub.s32 1, %v1182
  %v1184 = vrot.slane %v1130, %v1183
  %v1185 = vlaneseq
  %v1186 = vshrl.u32 %v1185, 7
  %v1187 = vsub.s32 1, %v1186
  %v1188 = vrot.slane %v1131, %v1187
  %v1189 = vlaneseq
  %v1190 = vshrl.u32 %v1189, 7
  %v1191 = vsub.s32 1, %v1190
  %v1192 = vrot.slane %v1132, %v1191
  %v1193 = vlaneseq
  %v1194 = vshrl.u32 %v1193, 7
  %v1195 = vsub.s32 1, %v1194
  %v1196 = vrot.slane %v1133, %v1195
  %v1197 = vlaneseq
  %v1198 = vshrl.u32 %v1197, 7
  %v1199 = vsub.s32 1, %v1198
  %v1200 = vrot.slane %v1134, %v1199
  %v1201 = vlaneseq
  %v1202 = vshrl.u32 %v1201, 7
  %v1203 = vsub.s32 1, %v1202
  %v1204 = vrot.slane %v1135, %v1203
  %v1205 = vlaneseq
  %v1206 = vshrl.u32 %v1205, 7
  %v1207 = vsub.s32 1, %v1206
  %v1208 = vrot.slane %v1136, %v1207
  %v1209 = vmul.f32 %v1180, %v1043
  %v1210 = vmul.f32 %v1184, %v1043
  %v1211 = vmul.f32 %v1188, %v1043
  %v1212 = vmul.f32 %v1192, %v1043
  %v1213 = vmul.f32 %v1196, %v1043
  %v1214 = vmul.f32 %v1200, %v1043
  %v1215 = vmul.f32 %v1204, %v1043
  %v1216 = vmul.f32 %v1208, %v1043
  %v1217 = vadd.f32 %v1169, %v1209
  %v1218 = vadd.f32 %v1170, %v1210
  %v1219 = vadd.f32 %v1171, %v1211
  %v1220 = vadd.f32 %v1172, %v1212
  %v1221 = vadd.f32 %v1173, %v1213
  %v1222 = vadd.f32 %v1174, %v1214
  %v1223 = vadd.f32 %v1175, %v1215
  %v1224 = vadd.f32 %v1176, %v1216
  %v1225 = vlaneseq
  %v1226 = vshrl.u32 %v1225, 7
  %v1227 = vsub.s32 2, %v1226
  %v1228 = vrot.slane %v1129, %v1227
  %v1229 = vlaneseq
  %v1230 = vshrl.u32 %v1229, 7
  %v1231 = vsub.s32 2, %v1230
  %v1232 = vrot.slane %v1130, %v1231
  %v1233 = vlaneseq
  %v1234 = vshrl.u32 %v1233, 7
  %v1235 = vsub.s32 2, %v1234
  %v1236 = vrot.slane %v1131, %v1235
  %v1237 = vlaneseq
  %v1238 = vshrl.u32 %v1237, 7
  %v1239 = vsub.s32 2, %v1238
  %v1240 = vrot.slane %v1132, %v1239
  %v1241 = vlaneseq
  %v1242 = vshrl.u32 %v1241, 7
  %v1243 = vsub.s32 2, %v1242
  %v1244 = vrot.slane %v1133, %v1243
  %v1245 = vlaneseq
  %v1246 = vshrl.u32 %v1245, 7
  %v1247 = vsub.s32 2, %v1246
  %v1248 = vrot.slane %v1134, %v1247
  %v1249 = vlaneseq
  %v1250 = vshrl.u32 %v1249, 7
  %v1251 = vsub.s32 2, %v1250
  %v1252 = vrot.slane %v1135, %v1251
  %v1253 = vlaneseq
  %v1254 = vshrl.u32 %v1253, 7
  %v1255 = vsub.s32 2, %v1254
  %v1256 = vrot.slane %v1136, %v1255
  %v1257 = vmul.f32 %v1228, %v1044
  %v1258 = vmul.f32 %v1232, %v1044
  %v1259 = vmul.f32 %v1236, %v1044
  %v1260 = vmul.f32 %v1240, %v1044
  %v1261 = vmul.f32 %v1244, %v1044
  %v1262 = vmul.f32 %v1248, %v1044
  %v1263 = vmul.f32 %v1252, %v1044
  %v1264 = vmul.f32 %v1256, %v1044
  %v1265 = vadd.f32 %v1217, %v1257
  %v1266 = vadd.f32 %v1218, %v1258
  %v1267 = vadd.f32 %v1219, %v1259
  %v1268 = vadd.f32 %v1220, %v1260
  %v1269 = vadd.f32 %v1221, %v1261
  %v1270 = vadd.f32 %v1222, %v1262
  %v1271 = vadd.f32 %v1223, %v1263
  %v1272 = vadd.f32 %v1224, %v1264
  %v1273 = vlaneseq
  %v1274 = vshrl.u32 %v1273, 7
  %v1275 = vsub.s32 3, %v1274
  %v1276 = vrot.slane %v1129, %v1275
  %v1277 = vlaneseq
  %v1278 = vshrl.u32 %v1277, 7
  %v1279 = vsub.s32 3, %v1278
  %v1280 = vrot.slane %v1130, %v1279
  %v1281 = vlaneseq
  %v1282 = vshrl.u32 %v1281, 7
  %v1283 = vsub.s32 3, %v1282
  %v1284 = vrot.slane %v1131, %v1283
  %v1285 = vlaneseq
  %v1286 = vshrl.u32 %v1285, 7
  %v1287 = vsub.s32 3, %v1286
  %v1288 = vrot.slane %v1132, %v1287
  %v1289 = vlaneseq
  %v1290 = vshrl.u32 %v1289, 7
  %v1291 = vsub.s32 3, %v1290
  %v1292 = vrot.slane %v1133, %v1291
  %v1293 = vlaneseq
  %v1294 = vshrl.u32 %v1293, 7
  %v1295 = vsub.s32 3, %v1294
  %v1296 = vrot.slane %v1134, %v1295
  %v1297 = vlaneseq
  %v1298 = vshrl.u32 %v1297, 7
  %v1299 = vsub.s32 3, %v1298
  %v1300 = vrot.slane %v1135, %v1299
  %v1301 = vlaneseq
  %v1302 = vshrl.u32 %v1301, 7
  %v1303 = vsub.s32 3, %v1302
  %v1304 = vrot.slane %v1136, %v1303
  %v1305 = vmul.f32 %v1276, %v1045
  %v1306 = vmul.f32 %v1280, %v1045
  %v1307 = vmul.f32 %v1284, %v1045
  %v1308 = vmul.f32 %v1288, %v1045
  %v1309 = vmul.f32 %v1292, %v1045
  %v1310 = vmul.f32 %v1296, %v1045
  %v1311 = vmul.f32 %v1300, %v1045
  %v1312 = vmul.f32 %v1304, %v1045
  %v1313 = vadd.f32 %v1265, %v1305
  %v1314 = vadd.f32 %v1266, %v1306
  %v1315 = vadd.f32 %v1267, %v1307
  %v1316 = vadd.f32 %v1268, %v1308
  %v1317 = vadd.f32 %v1269, %v1309
  %v1318 = vadd.f32 %v1270, %v1310
  %v1319 = vadd.f32 %v1271, %v1311
  %v1320 = vadd.f32 %v1272, %v1312
  %v1321 = vlaneseq
  %v1322 = vshrl.u32 %v1321, 7
  %v1323 = vsub.s32 4, %v1322
  %v1324 = vrot.slane %v1129, %v1323
  %v1325 = vlaneseq
  %v1326 = vshrl.u32 %v1325, 7
  %v1327 = vsub.s32 4, %v1326
  %v1328 = vrot.slane %v1130, %v1327
  %v1329 = vlaneseq
  %v1330 = vshrl.u32 %v1329, 7
  %v1331 = vsub.s32 4, %v1330
  %v1332 = vrot.slane %v1131, %v1331
  %v1333 = vlaneseq
  %v1334 = vshrl.u32 %v1333, 7
  %v1335 = vsub.s32 4, %v1334
  %v1336 = vrot.slane %v1132, %v1335
  %v1337 = vlaneseq
  %v1338 = vshrl.u32 %v1337, 7
  %v1339 = vsub.s32 4, %v1338
  %v1340 = vrot.slane %v1133, %v1339
  %v1341 = vlaneseq
  %v1342 = vshrl.u32 %v1341, 7
  %v1343 = vsub.s32 4, %v1342
  %v1344 = vrot.slane %v1134, %v1343
  %v1345 = vlaneseq
  %v1346 = vshrl.u32 %v1345, 7
  %v1347 = vsub.s32 4, %v1346
  %v1348 = vrot.slane %v1135, %v1347
  %v1349 = vlaneseq
  %v1350 = vshrl.u32 %v1349, 7
  %v1351 = vsub.s32 4, %v1350
  %v1352 = vrot.slane %v1136, %v1351
  %v1353 = vmul.f32 %v1324, %v1046
  %v1354 = vmul.f32 %v1328, %v1046
  %v1355 = vmul.f32 %v1332, %v1046
  %v1356 = vmul.f32 %v1336, %v1046
  %v1357 = vmul.f32 %v1340, %v1046
  %v1358 = vmul.f32 %v1344, %v1046
  %v1359 = vmul.f32 %v1348, %v1046
  %v1360 = vmul.f32 %v1352, %v1046
  %v1361 = vadd.f32 %v1313, %v1353
  %v1362 = vadd.f32 %v1314, %v1354
  %v1363 = vadd.f32 %v1315, %v1355
  %v1364 = vadd.f32 %v1316, %v1356
  %v1365 = vadd.f32 %v1317, %v1357
  %v1366 = vadd.f32 %v1318, %v1358
  %v1367 = vadd.f32 %v1319, %v1359
  %v1368 = vadd.f32 %v1320, %v1360
  %v1369 = vlaneseq
  %v1370 = vshrl.u32 %v1369, 7
  %v1371 = vsub.s32 5, %v1370
  %v1372 = vrot.slane %v1129, %v1371
  %v1373 = vlaneseq
  %v1374 = vshrl.u32 %v1373, 7
  %v1375 = vsub.s32 5, %v1374
  %v1376 = vrot.slane %v1130, %v1375
  %v1377 = vlaneseq
  %v1378 = vshrl.u32 %v1377, 7
  %v1379 = vsub.s32 5, %v1378
  %v1380 = vrot.slane %v1131, %v1379
  %v1381 = vlaneseq
  %v1382 = vshrl.u32 %v1381, 7
  %v1383 = vsub.s32 5, %v1382
  %v1384 = vrot.slane %v1132, %v1383
  %v1385 = vlaneseq
  %v1386 = vshrl.u32 %v1385, 7
  %v1387 = vsub.s32 5, %v1386
  %v1388 = vrot.slane %v1133, %v1387
  %v1389 = vlaneseq
  %v1390 = vshrl.u32 %v1389, 7
  %v1391 = vsub.s32 5, %v1390
  %v1392 = vrot.slane %v1134, %v1391
  %v1393 = vlaneseq
  %v1394 = vshrl.u32 %v1393, 7
  %v1395 = vsub.s32 5, %v1394
  %v1396 = vrot.slane %v1135, %v1395
  %v1397 = vlaneseq
  %v1398 = vshrl.u32 %v1397, 7
  %v1399 = vsub.s32 5, %v1398
  %v1400 = vrot.slane %v1136, %v1399
  %v1401 = vmul.f32 %v1372, %v1047
  %v1402 = vmul.f32 %v1376, %v1047
  %v1403 = vmul.f32 %v1380, %v1047
  %v1404 = vmul.f32 %v1384, %v1047
  %v1405 = vmul.f32 %v1388, %v1047
  %v1406 = vmul.f32 %v1392, %v1047
  %v1407 = vmul.f32 %v1396, %v1047
  %v1408 = vmul.f32 %v1400, %v1047
  %v1409 = vadd.f32 %v1361, %v1401
  %v1410 = vadd.f32 %v1362, %v1402
  %v1411 = vadd.f32 %v1363, %v1403
  %v1412 = vadd.f32 %v1364, %v1404
  %v1413 = vadd.f32 %v1365, %v1405
  %v1414 = vadd.f32 %v1366, %v1406
  %v1415 = vadd.f32 %v1367, %v1407
  %v1416 = vadd.f32 %v1368, %v1408
  %v1417 = vlaneseq
  %v1418 = vshrl.u32 %v1417, 7
  %v1419 = vsub.s32 6, %v1418
  %v1420 = vrot.slane %v1129, %v1419
  %v1421 = vlaneseq
  %v1422 = vshrl.u32 %v1421, 7
  %v1423 = vsub.s32 6, %v1422
  %v1424 = vrot.slane %v1130, %v1423
  %v1425 = vlaneseq
  %v1426 = vshrl.u32 %v1425, 7
  %v1427 = vsub.s32 6, %v1426
  %v1428 = vrot.slane %v1131, %v1427
  %v1429 = vlaneseq
  %v1430 = vshrl.u32 %v1429, 7
  %v1431 = vsub.s32 6, %v1430
  %v1432 = vrot.slane %v1132, %v1431
  %v1433 = vlaneseq
  %v1434 = vshrl.u32 %v1433, 7
  %v1435 = vsub.s32 6, %v1434
  %v1436 = vrot.slane %v1133, %v1435
  %v1437 = vlaneseq
  %v1438 = vshrl.u32 %v1437, 7
  %v1439 = vsub.s32 6, %v1438
  %v1440 = vrot.slane %v1134, %v1439
  %v1441 = vlaneseq
  %v1442 = vshrl.u32 %v1441, 7
  %v1443 = vsub.s32 6, %v1442
  %v1444 = vrot.slane %v1135, %v1443
  %v1445 = vlaneseq
  %v1446 = vshrl.u32 %v1445, 7
  %v1447 = vsub.s32 6, %v1446
  %v1448 = vrot.slane %v1136, %v1447
  %v1449 = vmul.f32 %v1420, %v1048
  %v1450 = vmul.f32 %v1424, %v1048
  %v1451 = vmul.f32 %v1428, %v1048
  %v1452 = vmul.f32 %v1432, %v1048
  %v1453 = vmul.f32 %v1436, %v1048
  %v1454 = vmul.f32 %v1440, %v1048
  %v1455 = vmul.f32 %v1444, %v1048
  %v1456 = vmul.f32 %v1448, %v1048
  %v1457 = vadd.f32 %v1409, %v1449
  %v1458 = vadd.f32 %v1410, %v1450
  %v1459 = vadd.f32 %v1411, %v1451
  %v1460 = vadd.f32 %v1412, %v1452
  %v1461 = vadd.f32 %v1413, %v1453
  %v1462 = vadd.f32 %v1414, %v1454
  %v1463 = vadd.f32 %v1415, %v1455
  %v1464 = vadd.f32 %v1416, %v1456
  %v1465 = vlaneseq
  %v1466 = vshrl.u32 %v1465, 7
  %v1467 = vsub.s32 7, %v1466
  %v1468 = vrot.slane %v1129, %v1467
  %v1469 = vlaneseq
  %v1470 = vshrl.u32 %v1469, 7
  %v1471 = vsub.s32 7, %v1470
  %v1472 = vrot.slane %v1130, %v1471
  %v1473 = vlaneseq
  %v1474 = vshrl.u32 %v1473, 7
  %v1475 = vsub.s32 7, %v1474
  %v1476 = vrot.slane %v1131, %v1475
  %v1477 = vlaneseq
  %v1478 = vshrl.u32 %v1477, 7
  %v1479 = vsub.s32 7, %v1478
  %v1480 = vrot.slane %v1132, %v1479
  %v1481 = vlaneseq
  %v1482 = vshrl.u32 %v1481, 7
  %v1483 = vsub.s32 7, %v1482
  %v1484 = vrot.slane %v1133, %v1483
  %v1485 = vlaneseq
  %v1486 = vshrl.u32 %v1485, 7
  %v1487 = vsub.s32 7, %v1486
  %v1488 = vrot.slane %v1134, %v1487
  %v1489 = vlaneseq
  %v1490 = vshrl.u32 %v1489, 7
  %v1491 = vsub.s32 7, %v1490
  %v1492 = vrot.slane %v1135, %v1491
  %v1493 = vlaneseq
  %v1494 = vshrl.u32 %v1493, 7
  %v1495 = vsub.s32 7, %v1494
  %v1496 = vrot.slane %v1136, %v1495
  %v1497 = vmul.f32 %v1468, %v1049
  %v1498 = vmul.f32 %v1472, %v1049
  %v1499 = vmul.f32 %v1476, %v1049
  %v1500 = vmul.f32 %v1480, %v1049
  %v1501 = vmul.f32 %v1484, %v1049
  %v1502 = vmul.f32 %v1488, %v1049
  %v1503 = vmul.f32 %v1492, %v1049
  %v1504 = vmul.f32 %v1496, %v1049
  %v1505 = vadd.f32 %v1457, %v1497
  %v1506 = vadd.f32 %v1458, %v1498
  %v1507 = vadd.f32 %v1459, %v1499
  %v1508 = vadd.f32 %v1460, %v1500
  %v1509 = vadd.f32 %v1461, %v1501
  %v1510 = vadd.f32 %v1462, %v1502
  %v1511 = vadd.f32 %v1463, %v1503
  %v1512 = vadd.f32 %v1464, %v1504
  %s1513 = sld [smem:[#allocation2]]
  %v1514 = vstv %s1513
  %v1515 = vmul.f32 %v1514, %v1505
  %v1516 = vmul.f32 %v1514, %v1506
  %v1517 = vmul.f32 %v1514, %v1507
  %v1518 = vmul.f32 %v1514, %v1508
  %v1519 = vmul.f32 %v1514, %v1509
  %v1520 = vmul.f32 %v1514, %v1510
  %v1521 = vmul.f32 %v1514, %v1511
  %v1522 = vmul.f32 %v1514, %v1512
  %v1523 = vadd.f32 %v1515, %v1042
  %v1524 = vadd.f32 %v1516, %v1043
  %v1525 = vadd.f32 %v1517, %v1044
  %v1526 = vadd.f32 %v1518, %v1045
  %v1527 = vadd.f32 %v1519, %v1046
  %v1528 = vadd.f32 %v1520, %v1047
  %v1529 = vadd.f32 %v1521, %v1048
  %v1530 = vadd.f32 %v1522, %v1049
  %1531 = vst [vmem:[%s3] sm:$0xff] %v1523
  %1532 = vst [vmem:[%s3 + $0x8] sm:$0xff] %v1524
  %1533 = vst [vmem:[%s3 + $0x10] sm:$0xff] %v1525
  %1534 = vst [vmem:[%s3 + $0x18] sm:$0xff] %v1526
  %1535 = vst [vmem:[%s3 + $0x20] sm:$0xff] %v1527
  %1536 = vst [vmem:[%s3 + $0x28] sm:$0xff] %v1528
  %1537 = vst [vmem:[%s3 + $0x30] sm:$0xff] %v1529
  %1538 = vst [vmem:[%s3 + $0x38] sm:$0xff] %v1530
  // Predicated region
  $region14: #{run.4} parent=0 // pred_check
    _
  $region15: #{run.4} parent=0 // pred_check_branch
    %1540 = sbr.rel (0) target = $region17
  $region16: #{run.4} parent=0 // pred_region
    _
  $region17: #{run.4} parent=0 // pred_fallthru
    _
  // Predicated region
  $region18: #{run.4} parent=0 // pred_check
    _
  $region19: #{run.4} parent=0 // pred_check_branch
    %1542 = sbr.rel (0) target = $region21
  $region20: #{run.4} parent=0 // pred_region
    _
  $region21: #{run.4} parent=0 // pred_fallthru
    _

// kernel: run.5
$region0: #{run.5}
  #allocation0 [shape = 'u32[]', space=smem, size = 0x4, offset = 0x4, fixed_abs, tag = 'smem constant byte address 0x4 - core index']
  #allocation1 [shape = 'u32[144,128]{1,0:T(1,128)}', space=vmem, size = 0x12000, scoped, tag = 'internal scratch']
  #allocation2 [shape = 'f32[1]{0:T(128)S(6)}', space=smem, size = 0x200, scoped, tag = 'scoped memory for run.5']
  %s0 = inlined_call_operand.<no memory space> [shape: f32[1], index: 0, kind: input, shape index: {}]
  %s1 = inlined_call_operand.vmem [shape: f32[16,8,1], index: 1, kind: input, shape index: {}]
  %s2 = inlined_call_operand.vmem [shape: f32[16,8,128], index: 2, kind: input, shape index: {}]
  %s3 = inlined_call_operand.vmem [shape: f32[8,8,128], index: 3, kind: output, shape index: {}]
  %s4 = sld [smem:[#allocation0]]
  $region22: #{run.5} parent=0
    _
  %s6 = ssub.s32 1, %s4
  %s7 = scalar_select 0, %s6, %s4
  %8 = sst [smem:[#allocation2]] %s0
  // Predicated region
  $region2: #{run.5} parent=0 // pred_check
    _
  $region3: #{run.5} parent=0 // pred_check_branch
    %10 = sbr.rel (0) target = $region5
  $region4: #{run.5} parent=0 // pred_region
    _
  $region5: #{run.5} parent=0 // pred_fallthru
    _
  // Predicated region
  $region6: #{run.5} parent=0 // pred_check
    _
  $region7: #{run.5} parent=0 // pred_check_branch
    %12 = sbr.rel (0) target = $region9
  $region8: #{run.5} parent=0 // pred_region
    _
  $region9: #{run.5} parent=0 // pred_fallthru
    _
  // Predicated region
  $region10: #{run.5} parent=0 // pred_check
    _
  $region11: #{run.5} parent=0 // pred_check_branch
    %14 = sbr.rel (0) target = $region13
  $region12: #{run.5} parent=0 // pred_region
    _
  $region13: #{run.5} parent=0 // pred_fallthru
    _
  %v15 = vld [vmem:[%s2] sm:$0xff]
  %v16 = vld [vmem:[%s2 + $0x8] sm:$0xff]
  %v17 = vld [vmem:[%s2 + $0x10] sm:$0xff]
  %v18 = vld [vmem:[%s2 + $0x18] sm:$0xff]
  %v19 = vld [vmem:[%s2 + $0x20] sm:$0xff]
  %v20 = vld [vmem:[%s2 + $0x28] sm:$0xff]
  %v21 = vld [vmem:[%s2 + $0x30] sm:$0xff]
  %v22 = vld [vmem:[%s2 + $0x38] sm:$0xff]
  %v23 = vld [vmem:[%s2 + $0x40] sm:$0xff]
  %v24 = vld [vmem:[%s2 + $0x48] sm:$0xff]
  %v25 = vld [vmem:[%s2 + $0x50] sm:$0xff]
  %v26 = vld [vmem:[%s2 + $0x58] sm:$0xff]
  %v27 = vld [vmem:[%s2 + $0x60] sm:$0xff]
  %v28 = vld [vmem:[%s2 + $0x68] sm:$0xff]
  %v29 = vld [vmem:[%s2 + $0x70] sm:$0xff]
  %v30 = vld [vmem:[%s2 + $0x78] sm:$0xff]
  %v31 = vld [vmem:[%s1] sm:$0xff]
  %v32 = vld [vmem:[%s1 + $0x8] sm:$0xff]
  %v33 = vld [vmem:[%s1 + $0x10] sm:$0xff]
  %v34 = vld [vmem:[%s1 + $0x18] sm:$0xff]
  %v35 = vld [vmem:[%s1 + $0x20] sm:$0xff]
  %v36 = vld [vmem:[%s1 + $0x28] sm:$0xff]
  %v37 = vld [vmem:[%s1 + $0x30] sm:$0xff]
  %v38 = vld [vmem:[%s1 + $0x38] sm:$0xff]
  %v39 = vld [vmem:[%s1 + $0x40] sm:$0xff]
  %v40 = vld [vmem:[%s1 + $0x48] sm:$0xff]
  %v41 = vld [vmem:[%s1 + $0x50] sm:$0xff]
  %v42 = vld [vmem:[%s1 + $0x58] sm:$0xff]
  %v43 = vld [vmem:[%s1 + $0x60] sm:$0xff]
  %v44 = vld [vmem:[%s1 + $0x68] sm:$0xff]
  %v45 = vld [vmem:[%s1 + $0x70] sm:$0xff]
  %v46 = vld [vmem:[%s1 + $0x78] sm:$0xff]
  %48 = vset.pattern.permute.xlu0 0
  %49 = vperm.xlu0 %48, %v31
  %v50 = vpop.permute.xlu0 %49
  %53 = vset.pattern.permute.xlu0 0
  %54 = vperm.xlu0 %53, %v32
  %v55 = vpop.permute.xlu0 %54
  %58 = vset.pattern.permute.xlu0 0
  %59 = vperm.xlu0 %58, %v33
  %v60 = vpop.permute.xlu0 %59
  %63 = vset.pattern.permute.xlu0 0
  %64 = vperm.xlu0 %63, %v34
  %v65 = vpop.permute.xlu0 %64
  %68 = vset.pattern.permute.xlu0 0
  %69 = vperm.xlu0 %68, %v35
  %v70 = vpop.permute.xlu0 %69
  %73 = vset.pattern.permute.xlu0 0
  %74 = vperm.xlu0 %73, %v36
  %v75 = vpop.permute.xlu0 %74
  %78 = vset.pattern.permute.xlu0 0
  %79 = vperm.xlu0 %78, %v37
  %v80 = vpop.permute.xlu0 %79
  %83 = vset.pattern.permute.xlu0 0
  %84 = vperm.xlu0 %83, %v38
  %v85 = vpop.permute.xlu0 %84
  %88 = vset.pattern.permute.xlu0 0
  %89 = vperm.xlu0 %88, %v39
  %v90 = vpop.permute.xlu0 %89
  %93 = vset.pattern.permute.xlu0 0
  %94 = vperm.xlu0 %93, %v40
  %v95 = vpop.permute.xlu0 %94
  %98 = vset.pattern.permute.xlu0 0
  %99 = vperm.xlu0 %98, %v41
  %v100 = vpop.permute.xlu0 %99
  %103 = vset.pattern.permute.xlu0 0
  %104 = vperm.xlu0 %103, %v42
  %v105 = vpop.permute.xlu0 %104
  %108 = vset.pattern.permute.xlu0 0
  %109 = vperm.xlu0 %108, %v43
  %v110 = vpop.permute.xlu0 %109
  %113 = vset.pattern.permute.xlu0 0
  %114 = vperm.xlu0 %113, %v44
  %v115 = vpop.permute.xlu0 %114
  %118 = vset.pattern.permute.xlu0 0
  %119 = vperm.xlu0 %118, %v45
  %v120 = vpop.permute.xlu0 %119
  %123 = vset.pattern.permute.xlu0 0
  %124 = vperm.xlu0 %123, %v46
  %v125 = vpop.permute.xlu0 %124
  %v127 = vadd.f32 %v15, %v50
  %v128 = vadd.f32 %v16, %v55
  %v129 = vadd.f32 %v17, %v60
  %v130 = vadd.f32 %v18, %v65
  %v131 = vadd.f32 %v19, %v70
  %v132 = vadd.f32 %v20, %v75
  %v133 = vadd.f32 %v21, %v80
  %v134 = vadd.f32 %v22, %v85
  %v135 = vadd.f32 %v23, %v90
  %v136 = vadd.f32 %v24, %v95
  %v137 = vadd.f32 %v25, %v100
  %v138 = vadd.f32 %v26, %v105
  %v139 = vadd.f32 %v27, %v110
  %v140 = vadd.f32 %v28, %v115
  %v141 = vadd.f32 %v29, %v120
  %v142 = vadd.f32 %v30, %v125
  %v143 = vxor.u32 %v135, 2147483648
  %v144 = vxor.u32 %v136, 2147483648
  %v145 = vxor.u32 %v137, 2147483648
  %v146 = vxor.u32 %v138, 2147483648
  %v147 = vxor.u32 %v139, 2147483648
  %v148 = vxor.u32 %v140, 2147483648
  %v149 = vxor.u32 %v141, 2147483648
  %v150 = vxor.u32 %v142, 2147483648
  %v151 = vmul.f32 %v143, 1.442695
  %v152 = vpow.pop %v151
  %v153 = vmul.f32 %v144, 1.442695
  %v154 = vpow.pop %v153
  %v155 = vmul.f32 %v145, 1.442695
  %v156 = vpow.pop %v155
  %v157 = vmul.f32 %v146, 1.442695
  %v158 = vpow.pop %v157
  %v159 = vmul.f32 %v147, 1.442695
  %v160 = vpow.pop %v159
  %v161 = vmul.f32 %v148, 1.442695
  %v162 = vpow.pop %v161
  %v163 = vmul.f32 %v149, 1.442695
  %v164 = vpow.pop %v163
  %v165 = vmul.f32 %v150, 1.442695
  %v166 = vpow.pop %v165
  %v167 = vadd.f32 %v152, 1.0
  %v168 = vadd.f32 %v154, 1.0
  %v169 = vadd.f32 %v156, 1.0
  %v170 = vadd.f32 %v158, 1.0
  %v171 = vadd.f32 %v160, 1.0
  %v172 = vadd.f32 %v162, 1.0
  %v173 = vadd.f32 %v164, 1.0
  %v174 = vadd.f32 %v166, 1.0
  %v175 = vrcp.pop %v167
  %v176 = vmul.f32 1.0, %v175
  %v177 = vrcp.pop %v168
  %v178 = vmul.f32 1.0, %v177
  %v179 = vrcp.pop %v169
  %v180 = vmul.f32 1.0, %v179
  %v181 = vrcp.pop %v170
  %v182 = vmul.f32 1.0, %v181
  %v183 = vrcp.pop %v171
  %v184 = vmul.f32 1.0, %v183
  %v185 = vrcp.pop %v172
  %v186 = vmul.f32 1.0, %v185
  %v187 = vrcp.pop %v173
  %v188 = vmul.f32 1.0, %v187
  %v189 = vrcp.pop %v174
  %v190 = vmul.f32 1.0, %v189
  %v191 = vsub.f32 1.0, %v176
  %v192 = vsub.f32 1.0, %v178
  %v193 = vsub.f32 1.0, %v180
  %v194 = vsub.f32 1.0, %v182
  %v195 = vsub.f32 1.0, %v184
  %v196 = vsub.f32 1.0, %v186
  %v197 = vsub.f32 1.0, %v188
  %v198 = vsub.f32 1.0, %v190
  %v199 = vtanh.pop %v127
  %v200 = vtanh.pop %v128
  %v201 = vtanh.pop %v129
  %v202 = vtanh.pop %v130
  %v203 = vtanh.pop %v131
  %v204 = vtanh.pop %v132
  %v205 = vtanh.pop %v133
  %v206 = vtanh.pop %v134
  %v207 = vmul.f32 %v191, %v199
  %v208 = vmul.f32 %v192, %v200
  %v209 = vmul.f32 %v193, %v201
  %v210 = vmul.f32 %v194, %v202
  %v211 = vmul.f32 %v195, %v203
  %v212 = vmul.f32 %v196, %v204
  %v213 = vmul.f32 %v197, %v205
  %v214 = vmul.f32 %v198, %v206
  %v215 = vlaneseq
  %v216 = vshrl.u32 %v215, 7
  %vm217 = vcmp.eq.s32.totalorder %v216, 0
  %v218 = vsel %vm217, 1, 0
  %vm219 = vcmp.eq.s32.totalorder %v218, 1
  %v220 = vlaneseq
  %v221 = vshrl.u32 %v220, 7
  %v222 = vsub.s32 0, %v221
  %v223 = vrot.slane %v207, %v222
  %v224 = vlaneseq
  %v225 = vshrl.u32 %v224, 7
  %v226 = vsub.s32 0, %v225
  %v227 = vrot.slane %v208, %v226
  %v228 = vlaneseq
  %v229 = vshrl.u32 %v228, 7
  %v230 = vsub.s32 0, %v229
  %v231 = vrot.slane %v209, %v230
  %v232 = vlaneseq
  %v233 = vshrl.u32 %v232, 7
  %v234 = vsub.s32 0, %v233
  %v235 = vrot.slane %v210, %v234
  %v236 = vlaneseq
  %v237 = vshrl.u32 %v236, 7
  %v238 = vsub.s32 0, %v237
  %v239 = vrot.slane %v211, %v238
  %v240 = vlaneseq
  %v241 = vshrl.u32 %v240, 7
  %v242 = vsub.s32 0, %v241
  %v243 = vrot.slane %v212, %v242
  %v244 = vlaneseq
  %v245 = vshrl.u32 %v244, 7
  %v246 = vsub.s32 0, %v245
  %v247 = vrot.slane %v213, %v246
  %v248 = vlaneseq
  %v249 = vshrl.u32 %v248, 7
  %v250 = vsub.s32 0, %v249
  %v251 = vrot.slane %v214, %v250
  %v252 = vsel %vm219, %v223, 0.0
  %v253 = vsel %vm219, %v227, 0.0
  %v254 = vsel %vm219, %v231, 0.0
  %v255 = vsel %vm219, %v235, 0.0
  %v256 = vsel %vm219, %v239, 0.0
  %v257 = vsel %vm219, %v243, 0.0
  %v258 = vsel %vm219, %v247, 0.0
  %v259 = vsel %vm219, %v251, 0.0
  %v268 = vrot.slane %v208, 7
  %vm269 = vcmask 1041409
  %v270 = vsel %vm269, %v268, %v207
  %v271 = vrot.slane %v209, 6
  %vm272 = vcmask 1042434
  %v273 = vsel %vm272, %v271, %v270
  %v274 = vrot.slane %v210, 5
  %vm275 = vcmask 1043459
  %v276 = vsel %vm275, %v274, %v273
  %v277 = vrot.slane %v211, 4
  %vm278 = vcmask 1044484
  %v279 = vsel %vm278, %v277, %v276
  %v280 = vrot.slane %v212, 3
  %vm281 = vcmask 1045509
  %v282 = vsel %vm281, %v280, %v279
  %v283 = vrot.slane %v213, 2
  %vm284 = vcmask 1046534
  %v285 = vsel %vm284, %v283, %v282
  %v286 = vrot.slane %v214, 1
  %vm287 = vcmask 1047559
  %v288 = vsel %vm287, %v286, %v285
  %v290 = vmul.f32 %v223, %v288
  %v291 = vmul.f32 %v227, %v288
  %v292 = vmul.f32 %v231, %v288
  %v293 = vmul.f32 %v235, %v288
  %v294 = vmul.f32 %v239, %v288
  %v295 = vmul.f32 %v243, %v288
  %v296 = vmul.f32 %v247, %v288
  %v297 = vmul.f32 %v251, %v288
  %v298 = vrot.slane %v207, 7
  %v299 = vrot.slane %v209, 7
  %v300 = vrot.slane %v210, 7
  %v301 = vrot.slane %v211, 7
  %v302 = vrot.slane %v212, 7
  %v303 = vrot.slane %v213, 7
  %v304 = vrot.slane %v214, 7
  %v313 = vmul.f32 %v176, %v298
  %v314 = vmul.f32 %v178, %v268
  %v315 = vmul.f32 %v180, %v299
  %v316 = vmul.f32 %v182, %v300
  %v317 = vmul.f32 %v184, %v301
  %v318 = vmul.f32 %v186, %v302
  %v319 = vmul.f32 %v188, %v303
  %v320 = vmul.f32 %v190, %v304
  %v321 = vadd.f32 %v313, %v207
  %v322 = vadd.f32 %v314, %v208
  %v323 = vadd.f32 %v315, %v209
  %v324 = vadd.f32 %v316, %v210
  %v325 = vadd.f32 %v317, %v211
  %v326 = vadd.f32 %v318, %v212
  %v327 = vadd.f32 %v319, %v213
  %v328 = vadd.f32 %v320, %v214
  %vm329 = vcmp.eq.s32.totalorder %v216, 1
  %v330 = vsel %vm329, 1, 0
  %vm331 = vcmp.eq.s32.totalorder %v330, 1
  %v332 = vlaneseq
  %v333 = vshrl.u32 %v332, 7
  %v334 = vsub.s32 1, %v333
  %v335 = vrot.slane %v321, %v334
  %v336 = vlaneseq
  %v337 = vshrl.u32 %v336, 7
  %v338 = vsub.s32 1, %v337
  %v339 = vrot.slane %v322, %v338
  %v340 = vlaneseq
  %v341 = vshrl.u32 %v340, 7
  %v342 = vsub.s32 1, %v341
  %v343 = vrot.slane %v323, %v342
  %v344 = vlaneseq
  %v345 = vshrl.u32 %v344, 7
  %v346 = vsub.s32 1, %v345
  %v347 = vrot.slane %v324, %v346
  %v348 = vlaneseq
  %v349 = vshrl.u32 %v348, 7
  %v350 = vsub.s32 1, %v349
  %v351 = vrot.slane %v325, %v350
  %v352 = vlaneseq
  %v353 = vshrl.u32 %v352, 7
  %v354 = vsub.s32 1, %v353
  %v355 = vrot.slane %v326, %v354
  %v356 = vlaneseq
  %v357 = vshrl.u32 %v356, 7
  %v358 = vsub.s32 1, %v357
  %v359 = vrot.slane %v327, %v358
  %v360 = vlaneseq
  %v361 = vshrl.u32 %v360, 7
  %v362 = vsub.s32 1, %v361
  %v363 = vrot.slane %v328, %v362
  %v364 = vsel %vm331, %v335, %v252
  %v365 = vsel %vm331, %v339, %v253
  %v366 = vsel %vm331, %v343, %v254
  %v367 = vsel %vm331, %v347, %v255
  %v368 = vsel %vm331, %v351, %v256
  %v369 = vsel %vm331, %v355, %v257
  %v370 = vsel %vm331, %v359, %v258
  %v371 = vsel %vm331, %v363, %v259
  %v380 = vrot.slane %v321, 1
  %v381 = vsel %vm269, %v322, %v380
  %v382 = vrot.slane %v323, 7
  %v383 = vsel %vm272, %v382, %v381
  %v384 = vrot.slane %v324, 6
  %v385 = vsel %vm275, %v384, %v383
  %v386 = vrot.slane %v325, 5
  %v387 = vsel %vm278, %v386, %v385
  %v388 = vrot.slane %v326, 4
  %v389 = vsel %vm281, %v388, %v387
  %v390 = vrot.slane %v327, 3
  %v391 = vsel %vm284, %v390, %v389
  %v392 = vrot.slane %v328, 2
  %v393 = vsel %vm287, %v392, %v391
  %v395 = vmul.f32 %v335, %v393
  %v396 = vmul.f32 %v339, %v393
  %v397 = vmul.f32 %v343, %v393
  %v398 = vmul.f32 %v347, %v393
  %v399 = vmul.f32 %v351, %v393
  %v400 = vmul.f32 %v355, %v393
  %v401 = vmul.f32 %v359, %v393
  %v402 = vmul.f32 %v363, %v393
  %v403 = vadd.f32 %v290, %v395
  %v404 = vadd.f32 %v291, %v396
  %v405 = vadd.f32 %v292, %v397
  %v406 = vadd.f32 %v293, %v398
  %v407 = vadd.f32 %v294, %v399
  %v408 = vadd.f32 %v295, %v400
  %v409 = vadd.f32 %v296, %v401
  %v410 = vadd.f32 %v297, %v402
  %v411 = vrot.slane %v321, 7
  %v412 = vrot.slane %v322, 7
  %v413 = vrot.slane %v324, 7
  %v414 = vrot.slane %v325, 7
  %v415 = vrot.slane %v326, 7
  %v416 = vrot.slane %v327, 7
  %v417 = vrot.slane %v328, 7
  %v426 = vmul.f32 %v176, %v411
  %v427 = vmul.f32 %v178, %v412
  %v428 = vmul.f32 %v180, %v382
  %v429 = vmul.f32 %v182, %v413
  %v430 = vmul.f32 %v184, %v414
  %v431 = vmul.f32 %v186, %v415
  %v432 = vmul.f32 %v188, %v416
  %v433 = vmul.f32 %v190, %v417
  %v434 = vadd.f32 %v426, %v207
  %v435 = vadd.f32 %v427, %v208
  %v436 = vadd.f32 %v428, %v209
  %v437 = vadd.f32 %v429, %v210
  %v438 = vadd.f32 %v430, %v211
  %v439 = vadd.f32 %v431, %v212
  %v440 = vadd.f32 %v432, %v213
  %v441 = vadd.f32 %v433, %v214
  %vm442 = vcmp.eq.s32.totalorder %v216, 2
  %v443 = vsel %vm442, 1, 0
  %vm444 = vcmp.eq.s32.totalorder %v443, 1
  %v445 = vlaneseq
  %v446 = vshrl.u32 %v445, 7
  %v447 = vsub.s32 2, %v446
  %v448 = vrot.slane %v434, %v447
  %v449 = vlaneseq
  %v450 = vshrl.u32 %v449, 7
  %v451 = vsub.s32 2, %v450
  %v452 = vrot.slane %v435, %v451
  %v453 = vlaneseq
  %v454 = vshrl.u32 %v453, 7
  %v455 = vsub.s32 2, %v454
  %v456 = vrot.slane %v436, %v455
  %v457 = vlaneseq
  %v458 = vshrl.u32 %v457, 7
  %v459 = vsub.s32 2, %v458
  %v460 = vrot.slane %v437, %v459
  %v461 = vlaneseq
  %v462 = vshrl.u32 %v461, 7
  %v463 = vsub.s32 2, %v462
  %v464 = vrot.slane %v438, %v463
  %v465 = vlaneseq
  %v466 = vshrl.u32 %v465, 7
  %v467 = vsub.s32 2, %v466
  %v468 = vrot.slane %v439, %v467
  %v469 = vlaneseq
  %v470 = vshrl.u32 %v469, 7
  %v471 = vsub.s32 2, %v470
  %v472 = vrot.slane %v440, %v471
  %v473 = vlaneseq
  %v474 = vshrl.u32 %v473, 7
  %v475 = vsub.s32 2, %v474
  %v476 = vrot.slane %v441, %v475
  %v477 = vsel %vm444, %v448, %v364
  %v478 = vsel %vm444, %v452, %v365
  %v479 = vsel %vm444, %v456, %v366
  %v480 = vsel %vm444, %v460, %v367
  %v481 = vsel %vm444, %v464, %v368
  %v482 = vsel %vm444, %v468, %v369
  %v483 = vsel %vm444, %v472, %v370
  %v484 = vsel %vm444, %v476, %v371
  %v493 = vrot.slane %v434, 2
  %v494 = vrot.slane %v435, 1
  %v495 = vsel %vm269, %v494, %v493
  %v496 = vsel %vm272, %v436, %v495
  %v497 = vrot.slane %v437, 7
  %v498 = vsel %vm275, %v497, %v496
  %v499 = vrot.slane %v438, 6
  %v500 = vsel %vm278, %v499, %v498
  %v501 = vrot.slane %v439, 5
  %v502 = vsel %vm281, %v501, %v500
  %v503 = vrot.slane %v440, 4
  %v504 = vsel %vm284, %v503, %v502
  %v505 = vrot.slane %v441, 3
  %v506 = vsel %vm287, %v505, %v504
  %v508 = vmul.f32 %v448, %v506
  %v509 = vmul.f32 %v452, %v506
  %v510 = vmul.f32 %v456, %v506
  %v511 = vmul.f32 %v460, %v506
  %v512 = vmul.f32 %v464, %v506
  %v513 = vmul.f32 %v468, %v506
  %v514 = vmul.f32 %v472, %v506
  %v515 = vmul.f32 %v476, %v506
  %v516 = vadd.f32 %v403, %v508
  %v517 = vadd.f32 %v404, %v509
  %v518 = vadd.f32 %v405, %v510
  %v519 = vadd.f32 %v406, %v511
  %v520 = vadd.f32 %v407, %v512
  %v521 = vadd.f32 %v408, %v513
  %v522 = vadd.f32 %v409, %v514
  %v523 = vadd.f32 %v410, %v515
  %v524 = vrot.slane %v434, 7
  %v525 = vrot.slane %v435, 7
  %v526 = vrot.slane %v436, 7
  %v527 = vrot.slane %v438, 7
  %v528 = vrot.slane %v439, 7
  %v529 = vrot.slane %v440, 7
  %v530 = vrot.slane %v441, 7
  %v539 = vmul.f32 %v176, %v524
  %v540 = vmul.f32 %v178, %v525
  %v541 = vmul.f32 %v180, %v526
  %v542 = vmul.f32 %v182, %v497
  %v543 = vmul.f32 %v184, %v527
  %v544 = vmul.f32 %v186, %v528
  %v545 = vmul.f32 %v188, %v529
  %v546 = vmul.f32 %v190, %v530
  %v547 = vadd.f32 %v539, %v207
  %v548 = vadd.f32 %v540, %v208
  %v549 = vadd.f32 %v541, %v209
  %v550 = vadd.f32 %v542, %v210
  %v551 = vadd.f32 %v543, %v211
  %v552 = vadd.f32 %v544, %v212
  %v553 = vadd.f32 %v545, %v213
  %v554 = vadd.f32 %v546, %v214
  %vm555 = vcmp.eq.s32.totalorder %v216, 3
  %v556 = vsel %vm555, 1, 0
  %vm557 = vcmp.eq.s32.totalorder %v556, 1
  %v558 = vlaneseq
  %v559 = vshrl.u32 %v558, 7
  %v560 = vsub.s32 3, %v559
  %v561 = vrot.slane %v547, %v560
  %v562 = vlaneseq
  %v563 = vshrl.u32 %v562, 7
  %v564 = vsub.s32 3, %v563
  %v565 = vrot.slane %v548, %v564
  %v566 = vlaneseq
  %v567 = vshrl.u32 %v566, 7
  %v568 = vsub.s32 3, %v567
  %v569 = vrot.slane %v549, %v568
  %v570 = vlaneseq
  %v571 = vshrl.u32 %v570, 7
  %v572 = vsub.s32 3, %v571
  %v573 = vrot.slane %v550, %v572
  %v574 = vlaneseq
  %v575 = vshrl.u32 %v574, 7
  %v576 = vsub.s32 3, %v575
  %v577 = vrot.slane %v551, %v576
  %v578 = vlaneseq
  %v579 = vshrl.u32 %v578, 7
  %v580 = vsub.s32 3, %v579
  %v581 = vrot.slane %v552, %v580
  %v582 = vlaneseq
  %v583 = vshrl.u32 %v582, 7
  %v584 = vsub.s32 3, %v583
  %v585 = vrot.slane %v553, %v584
  %v586 = vlaneseq
  %v587 = vshrl.u32 %v586, 7
  %v588 = vsub.s32 3, %v587
  %v589 = vrot.slane %v554, %v588
  %v590 = vsel %vm557, %v561, %v477
  %v591 = vsel %vm557, %v565, %v478
  %v592 = vsel %vm557, %v569, %v479
  %v593 = vsel %vm557, %v573, %v480
  %v594 = vsel %vm557, %v577, %v481
  %v595 = vsel %vm557, %v581, %v482
  %v596 = vsel %vm557, %v585, %v483
  %v597 = vsel %vm557, %v589, %v484
  %v606 = vrot.slane %v547, 3
  %v607 = vrot.slane %v548, 2
  %v608 = vsel %vm269, %v607, %v606
  %v609 = vrot.slane %v549, 1
  %v610 = vsel %vm272, %v609, %v608
  %v611 = vsel %vm275, %v550, %v610
  %v612 = vrot.slane %v551, 7
  %v613 = vsel %vm278, %v612, %v611
  %v614 = vrot.slane %v552, 6
  %v615 = vsel %vm281, %v614, %v613
  %v616 = vrot.slane %v553, 5
  %v617 = vsel %vm284, %v616, %v615
  %v618 = vrot.slane %v554, 4
  %v619 = vsel %vm287, %v618, %v617
  %v621 = vmul.f32 %v561, %v619
  %v622 = vmul.f32 %v565, %v619
  %v623 = vmul.f32 %v569, %v619
  %v624 = vmul.f32 %v573, %v619
  %v625 = vmul.f32 %v577, %v619
  %v626 = vmul.f32 %v581, %v619
  %v627 = vmul.f32 %v585, %v619
  %v628 = vmul.f32 %v589, %v619
  %v629 = vadd.f32 %v516, %v621
  %v630 = vadd.f32 %v517, %v622
  %v631 = vadd.f32 %v518, %v623
  %v632 = vadd.f32 %v519, %v624
  %v633 = vadd.f32 %v520, %v625
  %v634 = vadd.f32 %v521, %v626
  %v635 = vadd.f32 %v522, %v627
  %v636 = vadd.f32 %v523, %v628
  %v637 = vrot.slane %v547, 7
  %v638 = vrot.slane %v548, 7
  %v639 = vrot.slane %v549, 7
  %v640 = vrot.slane %v550, 7
  %v641 = vrot.slane %v552, 7
  %v642 = vrot.slane %v553, 7
  %v643 = vrot.slane %v554, 7
  %v652 = vmul.f32 %v176, %v637
  %v653 = vmul.f32 %v178, %v638
  %v654 = vmul.f32 %v180, %v639
  %v655 = vmul.f32 %v182, %v640
  %v656 = vmul.f32 %v184, %v612
  %v657 = vmul.f32 %v186, %v641
  %v658 = vmul.f32 %v188, %v642
  %v659 = vmul.f32 %v190, %v643
  %v660 = vadd.f32 %v652, %v207
  %v661 = vadd.f32 %v653, %v208
  %v662 = vadd.f32 %v654, %v209
  %v663 = vadd.f32 %v655, %v210
  %v664 = vadd.f32 %v656, %v211
  %v665 = vadd.f32 %v657, %v212
  %v666 = vadd.f32 %v658, %v213
  %v667 = vadd.f32 %v659, %v214
  %vm668 = vcmp.eq.s32.totalorder %v216, 4
  %v669 = vsel %vm668, 1, 0
  %vm670 = vcmp.eq.s32.totalorder %v669, 1
  %v671 = vlaneseq
  %v672 = vshrl.u32 %v671, 7
  %v673 = vsub.s32 4, %v672
  %v674 = vrot.slane %v660, %v673
  %v675 = vlaneseq
  %v676 = vshrl.u32 %v675, 7
  %v677 = vsub.s32 4, %v676
  %v678 = vrot.slane %v661, %v677
  %v679 = vlaneseq
  %v680 = vshrl.u32 %v679, 7
  %v681 = vsub.s32 4, %v680
  %v682 = vrot.slane %v662, %v681
  %v683 = vlaneseq
  %v684 = vshrl.u32 %v683, 7
  %v685 = vsub.s32 4, %v684
  %v686 = vrot.slane %v663, %v685
  %v687 = vlaneseq
  %v688 = vshrl.u32 %v687, 7
  %v689 = vsub.s32 4, %v688
  %v690 = vrot.slane %v664, %v689
  %v691 = vlaneseq
  %v692 = vshrl.u32 %v691, 7
  %v693 = vsub.s32 4, %v692
  %v694 = vrot.slane %v665, %v693
  %v695 = vlaneseq
  %v696 = vshrl.u32 %v695, 7
  %v697 = vsub.s32 4, %v696
  %v698 = vrot.slane %v666, %v697
  %v699 = vlaneseq
  %v700 = vshrl.u32 %v699, 7
  %v701 = vsub.s32 4, %v700
  %v702 = vrot.slane %v667, %v701
  %v703 = vsel %vm670, %v674, %v590
  %v704 = vsel %vm670, %v678, %v591
  %v705 = vsel %vm670, %v682, %v592
  %v706 = vsel %vm670, %v686, %v593
  %v707 = vsel %vm670, %v690, %v594
  %v708 = vsel %vm670, %v694, %v595
  %v709 = vsel %vm670, %v698, %v596
  %v710 = vsel %vm670, %v702, %v597
  %v719 = vrot.slane %v660, 4
  %v720 = vrot.slane %v661, 3
  %v721 = vsel %vm269, %v720, %v719
  %v722 = vrot.slane %v662, 2
  %v723 = vsel %vm272, %v722, %v721
  %v724 = vrot.slane %v663, 1
  %v725 = vsel %vm275, %v724, %v723
  %v726 = vsel %vm278, %v664, %v725
  %v727 = vrot.slane %v665, 7
  %v728 = vsel %vm281, %v727, %v726
  %v729 = vrot.slane %v666, 6
  %v730 = vsel %vm284, %v729, %v728
  %v731 = vrot.slane %v667, 5
  %v732 = vsel %vm287, %v731, %v730
  %v734 = vmul.f32 %v674, %v732
  %v735 = vmul.f32 %v678, %v732
  %v736 = vmul.f32 %v682, %v732
  %v737 = vmul.f32 %v686, %v732
  %v738 = vmul.f32 %v690, %v732
  %v739 = vmul.f32 %v694, %v732
  %v740 = vmul.f32 %v698, %v732
  %v741 = vmul.f32 %v702, %v732
  %v742 = vadd.f32 %v629, %v734
  %v743 = vadd.f32 %v630, %v735
  %v744 = vadd.f32 %v631, %v736
  %v745 = vadd.f32 %v632, %v737
  %v746 = vadd.f32 %v633, %v738
  %v747 = vadd.f32 %v634, %v739
  %v748 = vadd.f32 %v635, %v740
  %v749 = vadd.f32 %v636, %v741
  %v750 = vrot.slane %v660, 7
  %v751 = vrot.slane %v661, 7
  %v752 = vrot.slane %v662, 7
  %v753 = vrot.slane %v663, 7
  %v754 = vrot.slane %v664, 7
  %v755 = vrot.slane %v666, 7
  %v756 = vrot.slane %v667, 7
  %v765 = vmul.f32 %v176, %v750
  %v766 = vmul.f32 %v178, %v751
  %v767 = vmul.f32 %v180, %v752
  %v768 = vmul.f32 %v182, %v753
  %v769 = vmul.f32 %v184, %v754
  %v770 = vmul.f32 %v186, %v727
  %v771 = vmul.f32 %v188, %v755
  %v772 = vmul.f32 %v190, %v756
  %v773 = vadd.f32 %v765, %v207
  %v774 = vadd.f32 %v766, %v208
  %v775 = vadd.f32 %v767, %v209
  %v776 = vadd.f32 %v768, %v210
  %v777 = vadd.f32 %v769, %v211
  %v778 = vadd.f32 %v770, %v212
  %v779 = vadd.f32 %v771, %v213
  %v780 = vadd.f32 %v772, %v214
  %vm781 = vcmp.eq.s32.totalorder %v216, 5
  %v782 = vsel %vm781, 1, 0
  %vm783 = vcmp.eq.s32.totalorder %v782, 1
  %v784 = vlaneseq
  %v785 = vshrl.u32 %v784, 7
  %v786 = vsub.s32 5, %v785
  %v787 = vrot.slane %v773, %v786
  %v788 = vlaneseq
  %v789 = vshrl.u32 %v788, 7
  %v790 = vsub.s32 5, %v789
  %v791 = vrot.slane %v774, %v790
  %v792 = vlaneseq
  %v793 = vshrl.u32 %v792, 7
  %v794 = vsub.s32 5, %v793
  %v795 = vrot.slane %v775, %v794
  %v796 = vlaneseq
  %v797 = vshrl.u32 %v796, 7
  %v798 = vsub.s32 5, %v797
  %v799 = vrot.slane %v776, %v798
  %v800 = vlaneseq
  %v801 = vshrl.u32 %v800, 7
  %v802 = vsub.s32 5, %v801
  %v803 = vrot.slane %v777, %v802
  %v804 = vlaneseq
  %v805 = vshrl.u32 %v804, 7
  %v806 = vsub.s32 5, %v805
  %v807 = vrot.slane %v778, %v806
  %v808 = vlaneseq
  %v809 = vshrl.u32 %v808, 7
  %v810 = vsub.s32 5, %v809
  %v811 = vrot.slane %v779, %v810
  %v812 = vlaneseq
  %v813 = vshrl.u32 %v812, 7
  %v814 = vsub.s32 5, %v813
  %v815 = vrot.slane %v780, %v814
  %v816 = vsel %vm783, %v787, %v703
  %v817 = vsel %vm783, %v791, %v704
  %v818 = vsel %vm783, %v795, %v705
  %v819 = vsel %vm783, %v799, %v706
  %v820 = vsel %vm783, %v803, %v707
  %v821 = vsel %vm783, %v807, %v708
  %v822 = vsel %vm783, %v811, %v709
  %v823 = vsel %vm783, %v815, %v710
  %v832 = vrot.slane %v773, 5
  %v833 = vrot.slane %v774, 4
  %v834 = vsel %vm269, %v833, %v832
  %v835 = vrot.slane %v775, 3
  %v836 = vsel %vm272, %v835, %v834
  %v837 = vrot.slane %v776, 2
  %v838 = vsel %vm275, %v837, %v836
  %v839 = vrot.slane %v777, 1
  %v840 = vsel %vm278, %v839, %v838
  %v841 = vsel %vm281, %v778, %v840
  %v842 = vrot.slane %v779, 7
  %v843 = vsel %vm284, %v842, %v841
  %v844 = vrot.slane %v780, 6
  %v845 = vsel %vm287, %v844, %v843
  %v847 = vmul.f32 %v787, %v845
  %v848 = vmul.f32 %v791, %v845
  %v849 = vmul.f32 %v795, %v845
  %v850 = vmul.f32 %v799, %v845
  %v851 = vmul.f32 %v803, %v845
  %v852 = vmul.f32 %v807, %v845
  %v853 = vmul.f32 %v811, %v845
  %v854 = vmul.f32 %v815, %v845
  %v855 = vadd.f32 %v742, %v847
  %v856 = vadd.f32 %v743, %v848
  %v857 = vadd.f32 %v744, %v849
  %v858 = vadd.f32 %v745, %v850
  %v859 = vadd.f32 %v746, %v851
  %v860 = vadd.f32 %v747, %v852
  %v861 = vadd.f32 %v748, %v853
  %v862 = vadd.f32 %v749, %v854
  %v863 = vrot.slane %v773, 7
  %v864 = vrot.slane %v774, 7
  %v865 = vrot.slane %v775, 7
  %v866 = vrot.slane %v776, 7
  %v867 = vrot.slane %v777, 7
  %v868 = vrot.slane %v778, 7
  %v869 = vrot.slane %v780, 7
  %v878 = vmul.f32 %v176, %v863
  %v879 = vmul.f32 %v178, %v864
  %v880 = vmul.f32 %v180, %v865
  %v881 = vmul.f32 %v182, %v866
  %v882 = vmul.f32 %v184, %v867
  %v883 = vmul.f32 %v186, %v868
  %v884 = vmul.f32 %v188, %v842
  %v885 = vmul.f32 %v190, %v869
  %v886 = vadd.f32 %v878, %v207
  %v887 = vadd.f32 %v879, %v208
  %v888 = vadd.f32 %v880, %v209
  %v889 = vadd.f32 %v881, %v210
  %v890 = vadd.f32 %v882, %v211
  %v891 = vadd.f32 %v883, %v212
  %v892 = vadd.f32 %v884, %v213
  %v893 = vadd.f32 %v885, %v214
  %vm894 = vcmp.eq.s32.totalorder %v216, 6
  %v895 = vsel %vm894, 1, 0
  %vm896 = vcmp.eq.s32.totalorder %v895, 1
  %v897 = vlaneseq
  %v898 = vshrl.u32 %v897, 7
  %v899 = vsub.s32 6, %v898
  %v900 = vrot.slane %v886, %v899
  %v901 = vlaneseq
  %v902 = vshrl.u32 %v901, 7
  %v903 = vsub.s32 6, %v902
  %v904 = vrot.slane %v887, %v903
  %v905 = vlaneseq
  %v906 = vshrl.u32 %v905, 7
  %v907 = vsub.s32 6, %v906
  %v908 = vrot.slane %v888, %v907
  %v909 = vlaneseq
  %v910 = vshrl.u32 %v909, 7
  %v911 = vsub.s32 6, %v910
  %v912 = vrot.slane %v889, %v911
  %v913 = vlaneseq
  %v914 = vshrl.u32 %v913, 7
  %v915 = vsub.s32 6, %v914
  %v916 = vrot.slane %v890, %v915
  %v917 = vlaneseq
  %v918 = vshrl.u32 %v917, 7
  %v919 = vsub.s32 6, %v918
  %v920 = vrot.slane %v891, %v919
  %v921 = vlaneseq
  %v922 = vshrl.u32 %v921, 7
  %v923 = vsub.s32 6, %v922
  %v924 = vrot.slane %v892, %v923
  %v925 = vlaneseq
  %v926 = vshrl.u32 %v925, 7
  %v927 = vsub.s32 6, %v926
  %v928 = vrot.slane %v893, %v927
  %v929 = vsel %vm896, %v900, %v816
  %v930 = vsel %vm896, %v904, %v817
  %v931 = vsel %vm896, %v908, %v818
  %v932 = vsel %vm896, %v912, %v819
  %v933 = vsel %vm896, %v916, %v820
  %v934 = vsel %vm896, %v920, %v821
  %v935 = vsel %vm896, %v924, %v822
  %v936 = vsel %vm896, %v928, %v823
  %v945 = vrot.slane %v886, 6
  %v946 = vrot.slane %v887, 5
  %v947 = vsel %vm269, %v946, %v945
  %v948 = vrot.slane %v888, 4
  %v949 = vsel %vm272, %v948, %v947
  %v950 = vrot.slane %v889, 3
  %v951 = vsel %vm275, %v950, %v949
  %v952 = vrot.slane %v890, 2
  %v953 = vsel %vm278, %v952, %v951
  %v954 = vrot.slane %v891, 1
  %v955 = vsel %vm281, %v954, %v953
  %v956 = vsel %vm284, %v892, %v955
  %v957 = vrot.slane %v893, 7
  %v958 = vsel %vm287, %v957, %v956
  %v960 = vmul.f32 %v900, %v958
  %v961 = vmul.f32 %v904, %v958
  %v962 = vmul.f32 %v908, %v958
  %v963 = vmul.f32 %v912, %v958
  %v964 = vmul.f32 %v916, %v958
  %v965 = vmul.f32 %v920, %v958
  %v966 = vmul.f32 %v924, %v958
  %v967 = vmul.f32 %v928, %v958
  %v968 = vadd.f32 %v855, %v960
  %v969 = vadd.f32 %v856, %v961
  %v970 = vadd.f32 %v857, %v962
  %v971 = vadd.f32 %v858, %v963
  %v972 = vadd.f32 %v859, %v964
  %v973 = vadd.f32 %v860, %v965
  %v974 = vadd.f32 %v861, %v966
  %v975 = vadd.f32 %v862, %v967
  %v976 = vrot.slane %v886, 7
  %v977 = vrot.slane %v887, 7
  %v978 = vrot.slane %v888, 7
  %v979 = vrot.slane %v889, 7
  %v980 = vrot.slane %v890, 7
  %v981 = vrot.slane %v891, 7
  %v982 = vrot.slane %v892, 7
  %v991 = vmul.f32 %v176, %v976
  %v992 = vmul.f32 %v178, %v977
  %v993 = vmul.f32 %v180, %v978
  %v994 = vmul.f32 %v182, %v979
  %v995 = vmul.f32 %v184, %v980
  %v996 = vmul.f32 %v186, %v981
  %v997 = vmul.f32 %v188, %v982
  %v998 = vmul.f32 %v190, %v957
  %v999 = vadd.f32 %v991, %v207
  %v1000 = vadd.f32 %v992, %v208
  %v1001 = vadd.f32 %v993, %v209
  %v1002 = vadd.f32 %v994, %v210
  %v1003 = vadd.f32 %v995, %v211
  %v1004 = vadd.f32 %v996, %v212
  %v1005 = vadd.f32 %v997, %v213
  %v1006 = vadd.f32 %v998, %v214
  %vm1007 = vcmp.eq.s32.totalorder %v216, 7
  %v1008 = vsel %vm1007, 1, 0
  %vm1009 = vcmp.eq.s32.totalorder %v1008, 1
  %v1010 = vlaneseq
  %v1011 = vshrl.u32 %v1010, 7
  %v1012 = vsub.s32 7, %v1011
  %v1013 = vrot.slane %v999, %v1012
  %v1014 = vlaneseq
  %v1015 = vshrl.u32 %v1014, 7
  %v1016 = vsub.s32 7, %v1015
  %v1017 = vrot.slane %v1000, %v1016
  %v1018 = vlaneseq
  %v1019 = vshrl.u32 %v1018, 7
  %v1020 = vsub.s32 7, %v1019
  %v1021 = vrot.slane %v1001, %v1020
  %v1022 = vlaneseq
  %v1023 = vshrl.u32 %v1022, 7
  %v1024 = vsub.s32 7, %v1023
  %v1025 = vrot.slane %v1002, %v1024
  %v1026 = vlaneseq
  %v1027 = vshrl.u32 %v1026, 7
  %v1028 = vsub.s32 7, %v1027
  %v1029 = vrot.slane %v1003, %v1028
  %v1030 = vlaneseq
  %v1031 = vshrl.u32 %v1030, 7
  %v1032 = vsub.s32 7, %v1031
  %v1033 = vrot.slane %v1004, %v1032
  %v1034 = vlaneseq
  %v1035 = vshrl.u32 %v1034, 7
  %v1036 = vsub.s32 7, %v1035
  %v1037 = vrot.slane %v1005, %v1036
  %v1038 = vlaneseq
  %v1039 = vshrl.u32 %v1038, 7
  %v1040 = vsub.s32 7, %v1039
  %v1041 = vrot.slane %v1006, %v1040
  %v1042 = vsel %vm1009, %v1013, %v929
  %v1043 = vsel %vm1009, %v1017, %v930
  %v1044 = vsel %vm1009, %v1021, %v931
  %v1045 = vsel %vm1009, %v1025, %v932
  %v1046 = vsel %vm1009, %v1029, %v933
  %v1047 = vsel %vm1009, %v1033, %v934
  %v1048 = vsel %vm1009, %v1037, %v935
  %v1049 = vsel %vm1009, %v1041, %v936
  %v1058 = vrot.slane %v999, 7
  %v1059 = vrot.slane %v1000, 6
  %v1060 = vsel %vm269, %v1059, %v1058
  %v1061 = vrot.slane %v1001, 5
  %v1062 = vsel %vm272, %v1061, %v1060
  %v1063 = vrot.slane %v1002, 4
  %v1064 = vsel %vm275, %v1063, %v1062
  %v1065 = vrot.slane %v1003, 3
  %v1066 = vsel %vm278, %v1065, %v1064
  %v1067 = vrot.slane %v1004, 2
  %v1068 = vsel %vm281, %v1067, %v1066
  %v1069 = vrot.slane %v1005, 1
  %v1070 = vsel %vm284, %v1069, %v1068
  %v1071 = vsel %vm287, %v1006, %v1070
  %v1073 = vmul.f32 %v1013, %v1071
  %v1074 = vmul.f32 %v1017, %v1071
  %v1075 = vmul.f32 %v1021, %v1071
  %v1076 = vmul.f32 %v1025, %v1071
  %v1077 = vmul.f32 %v1029, %v1071
  %v1078 = vmul.f32 %v1033, %v1071
  %v1079 = vmul.f32 %v1037, %v1071
  %v1080 = vmul.f32 %v1041, %v1071
  %v1081 = vadd.f32 %v968, %v1073
  %v1082 = vadd.f32 %v969, %v1074
  %v1083 = vadd.f32 %v970, %v1075
  %v1084 = vadd.f32 %v971, %v1076
  %v1085 = vadd.f32 %v972, %v1077
  %v1086 = vadd.f32 %v973, %v1078
  %v1087 = vadd.f32 %v974, %v1079
  %v1088 = vadd.f32 %v975, %v1080
  %v1089 = vmax.f32 %v1081, %v1082
  %v1090 = vmax.f32 %v1089, %v1083
  %v1091 = vmax.f32 %v1090, %v1084
  %v1092 = vmax.f32 %v1091, %v1085
  %v1093 = vmax.f32 %v1092, %v1086
  %v1094 = vmax.f32 %v1093, %v1087
  %v1095 = vmax.f32 %v1094, %v1088
  %v1096 = vsub.f32 %v1081, %v1095
  %v1097 = vsub.f32 %v1082, %v1095
  %v1098 = vsub.f32 %v1083, %v1095
  %v1099 = vsub.f32 %v1084, %v1095
  %v1100 = vsub.f32 %v1085, %v1095
  %v1101 = vsub.f32 %v1086, %v1095
  %v1102 = vsub.f32 %v1087, %v1095
  %v1103 = vsub.f32 %v1088, %v1095
  %v1104 = vmul.f32 %v1096, 1.442695
  %v1105 = vpow.pop %v1104
  %v1106 = vmul.f32 %v1097, 1.442695
  %v1107 = vpow.pop %v1106
  %v1108 = vmul.f32 %v1098, 1.442695
  %v1109 = vpow.pop %v1108
  %v1110 = vmul.f32 %v1099, 1.442695
  %v1111 = vpow.pop %v1110
  %v1112 = vmul.f32 %v1100, 1.442695
  %v1113 = vpow.pop %v1112
  %v1114 = vmul.f32 %v1101, 1.442695
  %v1115 = vpow.pop %v1114
  %v1116 = vmul.f32 %v1102, 1.442695
  %v1117 = vpow.pop %v1116
  %v1118 = vmul.f32 %v1103, 1.442695
  %v1119 = vpow.pop %v1118
  %v1120 = vadd.f32 %v1105, %v1107
  %v1121 = vadd.f32 %v1120, %v1109
  %v1122 = vadd.f32 %v1121, %v1111
  %v1123 = vadd.f32 %v1122, %v1113
  %v1124 = vadd.f32 %v1123, %v1115
  %v1125 = vadd.f32 %v1124, %v1117
  %v1126 = vadd.f32 %v1125, %v1119
  %v1127 = vrcp.pop %v1126
  %v1128 = vmul.f32 %v1127, 0.35355338
  %v1129 = vmul.f32 %v1105, %v1128
  %v1130 = vmul.f32 %v1107, %v1128
  %v1131 = vmul.f32 %v1109, %v1128
  %v1132 = vmul.f32 %v1111, %v1128
  %v1133 = vmul.f32 %v1113, %v1128
  %v1134 = vmul.f32 %v1115, %v1128
  %v1135 = vmul.f32 %v1117, %v1128
  %v1136 = vmul.f32 %v1119, %v1128
  %v1137 = vlaneseq
  %v1138 = vshrl.u32 %v1137, 7
  %v1139 = vsub.s32 0, %v1138
  %v1140 = vrot.slane %v1129, %v1139
  %v1141 = vlaneseq
  %v1142 = vshrl.u32 %v1141, 7
  %v1143 = vsub.s32 0, %v1142
  %v1144 = vrot.slane %v1130, %v1143
  %v1145 = vlaneseq
  %v1146 = vshrl.u32 %v1145, 7
  %v1147 = vsub.s32 0, %v1146
  %v1148 = vrot.slane %v1131, %v1147
  %v1149 = vlaneseq
  %v1150 = vshrl.u32 %v1149, 7
  %v1151 = vsub.s32 0, %v1150
  %v1152 = vrot.slane %v1132, %v1151
  %v1153 = vlaneseq
  %v1154 = vshrl.u32 %v1153, 7
  %v1155 = vsub.s32 0, %v1154
  %v1156 = vrot.slane %v1133, %v1155
  %v1157 = vlaneseq
  %v1158 = vshrl.u32 %v1157, 7
  %v1159 = vsub.s32 0, %v1158
  %v1160 = vrot.slane %v1134, %v1159
  %v1161 = vlaneseq
  %v1162 = vshrl.u32 %v1161, 7
  %v1163 = vsub.s32 0, %v1162
  %v1164 = vrot.slane %v1135, %v1163
  %v1165 = vlaneseq
  %v1166 = vshrl.u32 %v1165, 7
  %v1167 = vsub.s32 0, %v1166
  %v1168 = vrot.slane %v1136, %v1167
  %v1169 = vmul.f32 %v1140, %v1042
  %v1170 = vmul.f32 %v1144, %v1042
  %v1171 = vmul.f32 %v1148, %v1042
  %v1172 = vmul.f32 %v1152, %v1042
  %v1173 = vmul.f32 %v1156, %v1042
  %v1174 = vmul.f32 %v1160, %v1042
  %v1175 = vmul.f32 %v1164, %v1042
  %v1176 = vmul.f32 %v1168, %v1042
  %v1177 = vlaneseq
  %v1178 = vshrl.u32 %v1177, 7
  %v1179 = vsub.s32 1, %v1178
  %v1180 = vrot.slane %v1129, %v1179
  %v1181 = vlaneseq
  %v1182 = vshrl.u32 %v1181, 7
  %v1183 = vsub.s32 1, %v1182
  %v1184 = vrot.slane %v1130, %v1183
  %v1185 = vlaneseq
  %v1186 = vshrl.u32 %v1185, 7
  %v1187 = vsub.s32 1, %v1186
  %v1188 = vrot.slane %v1131, %v1187
  %v1189 = vlaneseq
  %v1190 = vshrl.u32 %v1189, 7
  %v1191 = vsub.s32 1, %v1190
  %v1192 = vrot.slane %v1132, %v1191
  %v1193 = vlaneseq
  %v1194 = vshrl.u32 %v1193, 7
  %v1195 = vsub.s32 1, %v1194
  %v1196 = vrot.slane %v1133, %v1195
  %v1197 = vlaneseq
  %v1198 = vshrl.u32 %v1197, 7
  %v1199 = vsub.s32 1, %v1198
  %v1200 = vrot.slane %v1134, %v1199
  %v1201 = vlaneseq
  %v1202 = vshrl.u32 %v1201, 7
  %v1203 = vsub.s32 1, %v1202
  %v1204 = vrot.slane %v1135, %v1203
  %v1205 = vlaneseq
  %v1206 = vshrl.u32 %v1205, 7
  %v1207 = vsub.s32 1, %v1206
  %v1208 = vrot.slane %v1136, %v1207
  %v1209 = vmul.f32 %v1180, %v1043
  %v1210 = vmul.f32 %v1184, %v1043
  %v1211 = vmul.f32 %v1188, %v1043
  %v1212 = vmul.f32 %v1192, %v1043
  %v1213 = vmul.f32 %v1196, %v1043
  %v1214 = vmul.f32 %v1200, %v1043
  %v1215 = vmul.f32 %v1204, %v1043
  %v1216 = vmul.f32 %v1208, %v1043
  %v1217 = vadd.f32 %v1169, %v1209
  %v1218 = vadd.f32 %v1170, %v1210
  %v1219 = vadd.f32 %v1171, %v1211
  %v1220 = vadd.f32 %v1172, %v1212
  %v1221 = vadd.f32 %v1173, %v1213
  %v1222 = vadd.f32 %v1174, %v1214
  %v1223 = vadd.f32 %v1175, %v1215
  %v1224 = vadd.f32 %v1176, %v1216
  %v1225 = vlaneseq
  %v1226 = vshrl.u32 %v1225, 7
  %v1227 = vsub.s32 2, %v1226
  %v1228 = vrot.slane %v1129, %v1227
  %v1229 = vlaneseq
  %v1230 = vshrl.u32 %v1229, 7
  %v1231 = vsub.s32 2, %v1230
  %v1232 = vrot.slane %v1130, %v1231
  %v1233 = vlaneseq
  %v1234 = vshrl.u32 %v1233, 7
  %v1235 = vsub.s32 2, %v1234
  %v1236 = vrot.slane %v1131, %v1235
  %v1237 = vlaneseq
  %v1238 = vshrl.u32 %v1237, 7
  %v1239 = vsub.s32 2, %v1238
  %v1240 = vrot.slane %v1132, %v1239
  %v1241 = vlaneseq
  %v1242 = vshrl.u32 %v1241, 7
  %v1243 = vsub.s32 2, %v1242
  %v1244 = vrot.slane %v1133, %v1243
  %v1245 = vlaneseq
  %v1246 = vshrl.u32 %v1245, 7
  %v1247 = vsub.s32 2, %v1246
  %v1248 = vrot.slane %v1134, %v1247
  %v1249 = vlaneseq
  %v1250 = vshrl.u32 %v1249, 7
  %v1251 = vsub.s32 2, %v1250
  %v1252 = vrot.slane %v1135, %v1251
  %v1253 = vlaneseq
  %v1254 = vshrl.u32 %v1253, 7
  %v1255 = vsub.s32 2, %v1254
  %v1256 = vrot.slane %v1136, %v1255
  %v1257 = vmul.f32 %v1228, %v1044
  %v1258 = vmul.f32 %v1232, %v1044
  %v1259 = vmul.f32 %v1236, %v1044
  %v1260 = vmul.f32 %v1240, %v1044
  %v1261 = vmul.f32 %v1244, %v1044
  %v1262 = vmul.f32 %v1248, %v1044
  %v1263 = vmul.f32 %v1252, %v1044
  %v1264 = vmul.f32 %v1256, %v1044
  %v1265 = vadd.f32 %v1217, %v1257
  %v1266 = vadd.f32 %v1218, %v1258
  %v1267 = vadd.f32 %v1219, %v1259
  %v1268 = vadd.f32 %v1220, %v1260
  %v1269 = vadd.f32 %v1221, %v1261
  %v1270 = vadd.f32 %v1222, %v1262
  %v1271 = vadd.f32 %v1223, %v1263
  %v1272 = vadd.f32 %v1224, %v1264
  %v1273 = vlaneseq
  %v1274 = vshrl.u32 %v1273, 7
  %v1275 = vsub.s32 3, %v1274
  %v1276 = vrot.slane %v1129, %v1275
  %v1277 = vlaneseq
  %v1278 = vshrl.u32 %v1277, 7
  %v1279 = vsub.s32 3, %v1278
  %v1280 = vrot.slane %v1130, %v1279
  %v1281 = vlaneseq
  %v1282 = vshrl.u32 %v1281, 7
  %v1283 = vsub.s32 3, %v1282
  %v1284 = vrot.slane %v1131, %v1283
  %v1285 = vlaneseq
  %v1286 = vshrl.u32 %v1285, 7
  %v1287 = vsub.s32 3, %v1286
  %v1288 = vrot.slane %v1132, %v1287
  %v1289 = vlaneseq
  %v1290 = vshrl.u32 %v1289, 7
  %v1291 = vsub.s32 3, %v1290
  %v1292 = vrot.slane %v1133, %v1291
  %v1293 = vlaneseq
  %v1294 = vshrl.u32 %v1293, 7
  %v1295 = vsub.s32 3, %v1294
  %v1296 = vrot.slane %v1134, %v1295
  %v1297 = vlaneseq
  %v1298 = vshrl.u32 %v1297, 7
  %v1299 = vsub.s32 3, %v1298
  %v1300 = vrot.slane %v1135, %v1299
  %v1301 = vlaneseq
  %v1302 = vshrl.u32 %v1301, 7
  %v1303 = vsub.s32 3, %v1302
  %v1304 = vrot.slane %v1136, %v1303
  %v1305 = vmul.f32 %v1276, %v1045
  %v1306 = vmul.f32 %v1280, %v1045
  %v1307 = vmul.f32 %v1284, %v1045
  %v1308 = vmul.f32 %v1288, %v1045
  %v1309 = vmul.f32 %v1292, %v1045
  %v1310 = vmul.f32 %v1296, %v1045
  %v1311 = vmul.f32 %v1300, %v1045
  %v1312 = vmul.f32 %v1304, %v1045
  %v1313 = vadd.f32 %v1265, %v1305
  %v1314 = vadd.f32 %v1266, %v1306
  %v1315 = vadd.f32 %v1267, %v1307
  %v1316 = vadd.f32 %v1268, %v1308
  %v1317 = vadd.f32 %v1269, %v1309
  %v1318 = vadd.f32 %v1270, %v1310
  %v1319 = vadd.f32 %v1271, %v1311
  %v1320 = vadd.f32 %v1272, %v1312
  %v1321 = vlaneseq
  %v1322 = vshrl.u32 %v1321, 7
  %v1323 = vsub.s32 4, %v1322
  %v1324 = vrot.slane %v1129, %v1323
  %v1325 = vlaneseq
  %v1326 = vshrl.u32 %v1325, 7
  %v1327 = vsub.s32 4, %v1326
  %v1328 = vrot.slane %v1130, %v1327
  %v1329 = vlaneseq
  %v1330 = vshrl.u32 %v1329, 7
  %v1331 = vsub.s32 4, %v1330
  %v1332 = vrot.slane %v1131, %v1331
  %v1333 = vlaneseq
  %v1334 = vshrl.u32 %v1333, 7
  %v1335 = vsub.s32 4, %v1334
  %v1336 = vrot.slane %v1132, %v1335
  %v1337 = vlaneseq
  %v1338 = vshrl.u32 %v1337, 7
  %v1339 = vsub.s32 4, %v1338
  %v1340 = vrot.slane %v1133, %v1339
  %v1341 = vlaneseq
  %v1342 = vshrl.u32 %v1341, 7
  %v1343 = vsub.s32 4, %v1342
  %v1344 = vrot.slane %v1134, %v1343
  %v1345 = vlaneseq
  %v1346 = vshrl.u32 %v1345, 7
  %v1347 = vsub.s32 4, %v1346
  %v1348 = vrot.slane %v1135, %v1347
  %v1349 = vlaneseq
  %v1350 = vshrl.u32 %v1349, 7
  %v1351 = vsub.s32 4, %v1350
  %v1352 = vrot.slane %v1136, %v1351
  %v1353 = vmul.f32 %v1324, %v1046
  %v1354 = vmul.f32 %v1328, %v1046
  %v1355 = vmul.f32 %v1332, %v1046
  %v1356 = vmul.f32 %v1336, %v1046
  %v1357 = vmul.f32 %v1340, %v1046
  %v1358 = vmul.f32 %v1344, %v1046
  %v1359 = vmul.f32 %v1348, %v1046
  %v1360 = vmul.f32 %v1352, %v1046
  %v1361 = vadd.f32 %v1313, %v1353
  %v1362 = vadd.f32 %v1314, %v1354
  %v1363 = vadd.f32 %v1315, %v1355
  %v1364 = vadd.f32 %v1316, %v1356
  %v1365 = vadd.f32 %v1317, %v1357
  %v1366 = vadd.f32 %v1318, %v1358
  %v1367 = vadd.f32 %v1319, %v1359
  %v1368 = vadd.f32 %v1320, %v1360
  %v1369 = vlaneseq
  %v1370 = vshrl.u32 %v1369, 7
  %v1371 = vsub.s32 5, %v1370
  %v1372 = vrot.slane %v1129, %v1371
  %v1373 = vlaneseq
  %v1374 = vshrl.u32 %v1373, 7
  %v1375 = vsub.s32 5, %v1374
  %v1376 = vrot.slane %v1130, %v1375
  %v1377 = vlaneseq
  %v1378 = vshrl.u32 %v1377, 7
  %v1379 = vsub.s32 5, %v1378
  %v1380 = vrot.slane %v1131, %v1379
  %v1381 = vlaneseq
  %v1382 = vshrl.u32 %v1381, 7
  %v1383 = vsub.s32 5, %v1382
  %v1384 = vrot.slane %v1132, %v1383
  %v1385 = vlaneseq
  %v1386 = vshrl.u32 %v1385, 7
  %v1387 = vsub.s32 5, %v1386
  %v1388 = vrot.slane %v1133, %v1387
  %v1389 = vlaneseq
  %v1390 = vshrl.u32 %v1389, 7
  %v1391 = vsub.s32 5, %v1390
  %v1392 = vrot.slane %v1134, %v1391
  %v1393 = vlaneseq
  %v1394 = vshrl.u32 %v1393, 7
  %v1395 = vsub.s32 5, %v1394
  %v1396 = vrot.slane %v1135, %v1395
  %v1397 = vlaneseq
  %v1398 = vshrl.u32 %v1397, 7
  %v1399 = vsub.s32 5, %v1398
  %v1400 = vrot.slane %v1136, %v1399
  %v1401 = vmul.f32 %v1372, %v1047
  %v1402 = vmul.f32 %v1376, %v1047
  %v1403 = vmul.f32 %v1380, %v1047
  %v1404 = vmul.f32 %v1384, %v1047
  %v1405 = vmul.f32 %v1388, %v1047
  %v1406 = vmul.f32 %v1392, %v1047
  %v1407 = vmul.f32 %v1396, %v1047
  %v1408 = vmul.f32 %v1400, %v1047
  %v1409 = vadd.f32 %v1361, %v1401
  %v1410 = vadd.f32 %v1362, %v1402
  %v1411 = vadd.f32 %v1363, %v1403
  %v1412 = vadd.f32 %v1364, %v1404
  %v1413 = vadd.f32 %v1365, %v1405
  %v1414 = vadd.f32 %v1366, %v1406
  %v1415 = vadd.f32 %v1367, %v1407
  %v1416 = vadd.f32 %v1368, %v1408
  %v1417 = vlaneseq
  %v1418 = vshrl.u32 %v1417, 7
  %v1419 = vsub.s32 6, %v1418
  %v1420 = vrot.slane %v1129, %v1419
  %v1421 = vlaneseq
  %v1422 = vshrl.u32 %v1421, 7
  %v1423 = vsub.s32 6, %v1422
  %v1424 = vrot.slane %v1130, %v1423
  %v1425 = vlaneseq
  %v1426 = vshrl.u32 %v1425, 7
  %v1427 = vsub.s32 6, %v1426
  %v1428 = vrot.slane %v1131, %v1427
  %v1429 = vlaneseq
  %v1430 = vshrl.u32 %v1429, 7
  %v1431 = vsub.s32 6, %v1430
  %v1432 = vrot.slane %v1132, %v1431
  %v1433 = vlaneseq
  %v1434 = vshrl.u32 %v1433, 7
  %v1435 = vsub.s32 6, %v1434
  %v1436 = vrot.slane %v1133, %v1435
  %v1437 = vlaneseq
  %v1438 = vshrl.u32 %v1437, 7
  %v1439 = vsub.s32 6, %v1438
  %v1440 = vrot.slane %v1134, %v1439
  %v1441 = vlaneseq
  %v1442 = vshrl.u32 %v1441, 7
  %v1443 = vsub.s32 6, %v1442
  %v1444 = vrot.slane %v1135, %v1443
  %v1445 = vlaneseq
  %v1446 = vshrl.u32 %v1445, 7
  %v1447 = vsub.s32 6, %v1446
  %v1448 = vrot.slane %v1136, %v1447
  %v1449 = vmul.f32 %v1420, %v1048
  %v1450 = vmul.f32 %v1424, %v1048
  %v1451 = vmul.f32 %v1428, %v1048
  %v1452 = vmul.f32 %v1432, %v1048
  %v1453 = vmul.f32 %v1436, %v1048
  %v1454 = vmul.f32 %v1440, %v1048
  %v1455 = vmul.f32 %v1444, %v1048
  %v1456 = vmul.f32 %v1448, %v1048
  %v1457 = vadd.f32 %v1409, %v1449
  %v1458 = vadd.f32 %v1410, %v1450
  %v1459 = vadd.f32 %v1411, %v1451
  %v1460 = vadd.f32 %v1412, %v1452
  %v1461 = vadd.f32 %v1413, %v1453
  %v1462 = vadd.f32 %v1414, %v1454
  %v1463 = vadd.f32 %v1415, %v1455
  %v1464 = vadd.f32 %v1416, %v1456
  %v1465 = vlaneseq
  %v1466 = vshrl.u32 %v1465, 7
  %v1467 = vsub.s32 7, %v1466
  %v1468 = vrot.slane %v1129, %v1467
  %v1469 = vlaneseq
  %v1470 = vshrl.u32 %v1469, 7
  %v1471 = vsub.s32 7, %v1470
  %v1472 = vrot.slane %v1130, %v1471
  %v1473 = vlaneseq
  %v1474 = vshrl.u32 %v1473, 7
  %v1475 = vsub.s32 7, %v1474
  %v1476 = vrot.slane %v1131, %v1475
  %v1477 = vlaneseq
  %v1478 = vshrl.u32 %v1477, 7
  %v1479 = vsub.s32 7, %v1478
  %v1480 = vrot.slane %v1132, %v1479
  %v1481 = vlaneseq
  %v1482 = vshrl.u32 %v1481, 7
  %v1483 = vsub.s32 7, %v1482
  %v1484 = vrot.slane %v1133, %v1483
  %v1485 = vlaneseq
  %v1486 = vshrl.u32 %v1485, 7
  %v1487 = vsub.s32 7, %v1486
  %v1488 = vrot.slane %v1134, %v1487
  %v1489 = vlaneseq
  %v1490 = vshrl.u32 %v1489, 7
  %v1491 = vsub.s32 7, %v1490
  %v1492 = vrot.slane %v1135, %v1491
  %v1493 = vlaneseq
  %v1494 = vshrl.u32 %v1493, 7
  %v1495 = vsub.s32 7, %v1494
  %v1496 = vrot.slane %v1136, %v1495
  %v1497 = vmul.f32 %v1468, %v1049
  %v1498 = vmul.f32 %v1472, %v1049
  %v1499 = vmul.f32 %v1476, %v1049
  %v1500 = vmul.f32 %v1480, %v1049
  %v1501 = vmul.f32 %v1484, %v1049
  %v1502 = vmul.f32 %v1488, %v1049
  %v1503 = vmul.f32 %v1492, %v1049
  %v1504 = vmul.f32 %v1496, %v1049
  %v1505 = vadd.f32 %v1457, %v1497
  %v1506 = vadd.f32 %v1458, %v1498
  %v1507 = vadd.f32 %v1459, %v1499
  %v1508 = vadd.f32 %v1460, %v1500
  %v1509 = vadd.f32 %v1461, %v1501
  %v1510 = vadd.f32 %v1462, %v1502
  %v1511 = vadd.f32 %v1463, %v1503
  %v1512 = vadd.f32 %v1464, %v1504
  %s1513 = sld [smem:[#allocation2]]
  %v1514 = vstv %s1513
  %v1515 = vmul.f32 %v1514, %v1505
  %v1516 = vmul.f32 %v1514, %v1506
  %v1517 = vmul.f32 %v1514, %v1507
  %v1518 = vmul.f32 %v1514, %v1508
  %v1519 = vmul.f32 %v1514, %v1509
  %v1520 = vmul.f32 %v1514, %v1510
  %v1521 = vmul.f32 %v1514, %v1511
  %v1522 = vmul.f32 %v1514, %v1512
  %v1523 = vadd.f32 %v1515, %v1042
  %v1524 = vadd.f32 %v1516, %v1043
  %v1525 = vadd.f32 %v1517, %v1044
  %v1526 = vadd.f32 %v1518, %v1045
  %v1527 = vadd.f32 %v1519, %v1046
  %v1528 = vadd.f32 %v1520, %v1047
  %v1529 = vadd.f32 %v1521, %v1048
  %v1530 = vadd.f32 %v1522, %v1049
  %1531 = vst [vmem:[%s3] sm:$0xff] %v1523
  %1532 = vst [vmem:[%s3 + $0x8] sm:$0xff] %v1524
  %1533 = vst [vmem:[%s3 + $0x10] sm:$0xff] %v1525
  %1534 = vst [vmem:[%s3 + $0x18] sm:$0xff] %v1526
  %1535 = vst [vmem:[%s3 + $0x20] sm:$0xff] %v1527
  %1536 = vst [vmem:[%s3 + $0x28] sm:$0xff] %v1528
  %1537 = vst [vmem:[%s3 + $0x30] sm:$0xff] %v1529
  %1538 = vst [vmem:[%s3 + $0x38] sm:$0xff] %v1530
  // Predicated region
  $region14: #{run.5} parent=0 // pred_check
    _
  $region15: #{run.5} parent=0 // pred_check_branch
    %1540 = sbr.rel (0) target = $region17
  $region16: #{run.5} parent=0 // pred_region
    _
  $region17: #{run.5} parent=0 // pred_fallthru
    _
  // Predicated region
  $region18: #{run.5} parent=0 // pred_check
    _
  $region19: #{run.5} parent=0 // pred_check_branch
    %1542 = sbr.rel (0) target = $region21
  $region20: #{run.5} parent=0 // pred_region
    _
  $region21: #{run.5} parent=0 // pred_fallthru
    _

</llo_original>
